<compile_context>
chip_gen: v7x
topology: tpu7x:2x2x1
jax: 0.10.0
libtpu: 0.0.40
codegen_flags: <defaults>
</compile_context>

<pallas_src>
import jax
import jax.numpy as jnp
from jax import lax
from jax.experimental import pallas as pl
from jax.experimental.pallas import tpu as pltpu


def _round_up(n, m):
    return ((n + m - 1) // m) * m


def make_kernel(num_layers, T, Bp, Ep, Hp, Op):
    """Kernel doing the full LSTM stack + final Linear in one pallas_call.

    All dims are padded: Bp multiple of 8, Ep/Hp/Op multiples of 128.  Gate g of
    layer l lives in lanes [g*Hp, g*Hp+Hp) of the 4*Hp gate axis, so gate slices
    are 128-lane aligned.
    """

    def kernel(*refs):
        # refs = [x, (w_ih, w_hh, b)*num_layers, w_fc, b_fc, out, gbuf, hbuf]
        x_ref = refs[0]
        layer_refs = refs[1:1 + 3 * num_layers]
        w_fc_ref = refs[1 + 3 * num_layers]
        b_fc_ref = refs[2 + 3 * num_layers]
        out_ref = refs[3 + 3 * num_layers]          # (T*Bp, Op)
        gbuf = refs[4 + 3 * num_layers]             # (T, Bp, 4*Hp) gate pre-activations
        hbuf = refs[5 + 3 * num_layers]             # (T, Bp, Hp)   hidden sequence

        for l in range(num_layers):
            w_ih = layer_refs[3 * l][...]           # (in_p, 4*Hp)
            w_hh = layer_refs[3 * l + 1][...]       # (Hp, 4*Hp)
            b = layer_refs[3 * l + 2][...]          # (1, 4*Hp)  (= b_ih + b_hh, padded)

            if l == 0:
                x_all = x_ref[...].reshape(T * Bp, Ep)      # embedded tokens
            else:
                x_all = hbuf[...].reshape(T * Bp, Hp)       # previous layer's hiddens

            # Hoisted input projection (+ bias) for the whole sequence: one GEMM.
            gates_in = jnp.dot(x_all, w_ih, preferred_element_type=jnp.float32) + b
            gbuf[...] = gates_in.reshape(T, Bp, 4 * Hp)

            # Recurrence: only h @ W_hh + elementwise gate math per step.
            # T is small & static -> fully unrolled for scheduler visibility.
            h = jnp.zeros((Bp, Hp), jnp.float32)
            c = jnp.zeros((Bp, Hp), jnp.float32)
            for t in range(T):
                gates = gbuf[t] + jnp.dot(h, w_hh, preferred_element_type=jnp.float32)
                # PyTorch LSTM gate order: i, f, g, o (128-lane-aligned blocks).
                i_g = jax.nn.sigmoid(gates[:, 0 * Hp:1 * Hp])
                f_g = jax.nn.sigmoid(gates[:, 1 * Hp:2 * Hp])
                g_g = jnp.tanh(gates[:, 2 * Hp:3 * Hp])
                o_g = jax.nn.sigmoid(gates[:, 3 * Hp:4 * Hp])
                c = f_g * c + i_g * g_g
                h = o_g * jnp.tanh(c)
                hbuf[t] = h

        # TODO(synk): nn.Dropout(0.3) is treated as inference-mode identity here;
        # training-mode stochastic dropout not emitted.
        # Hoisted final Linear over the whole sequence: one GEMM, one lane-dense store.
        h_all = hbuf[...].reshape(T * Bp, Hp)
        out_ref[...] = (jnp.dot(h_all, w_fc_ref[...], preferred_element_type=jnp.float32)
                        + b_fc_ref[...])

    return kernel


def pack_params(params):
    """One-time weight transpose / pad / gate-relayout (done once, not per forward)."""
    emb = params["embedding"].astype(jnp.float32)
    V, E = emb.shape
    H = params["lstm"][0][1].shape[1]
    O = params["fc_w"].shape[0]
    Ep, Hp, Op = _round_up(E, 128), _round_up(H, 128), _round_up(O, 128)

    emb_p = jnp.zeros((V, Ep), jnp.float32).at[:, :E].set(emb)

    layers = []
    for li, (w_ih, w_hh, b_ih, b_hh) in enumerate(params["lstm"]):
        in_dim = w_ih.shape[1]
        in_p = Ep if li == 0 else Hp
        w_ih_t = jnp.transpose(w_ih).astype(jnp.float32)      # (in_dim, 4H)
        w_hh_t = jnp.transpose(w_hh).astype(jnp.float32)      # (H, 4H)
        bias = (b_ih + b_hh).astype(jnp.float32)              # (4H,)
        w_ih_p = jnp.zeros((in_p, 4 * Hp), jnp.float32)
        w_hh_p = jnp.zeros((Hp, 4 * Hp), jnp.float32)
        b_p = jnp.zeros((1, 4 * Hp), jnp.float32)
        for g in range(4):
            w_ih_p = w_ih_p.at[:in_dim, g * Hp:g * Hp + H].set(w_ih_t[:, g * H:(g + 1) * H])
            w_hh_p = w_hh_p.at[:H, g * Hp:g * Hp + H].set(w_hh_t[:, g * H:(g + 1) * H])
            b_p = b_p.at[0, g * Hp:g * Hp + H].set(bias[g * H:(g + 1) * H])
        layers.append((w_ih_p, w_hh_p, b_p))

    w_fc_p = jnp.zeros((Hp, Op), jnp.float32).at[:H, :O].set(
        jnp.transpose(params["fc_w"]).astype(jnp.float32))
    b_fc_p = jnp.zeros((1, Op), jnp.float32).at[0, :O].set(params["fc_b"].astype(jnp.float32))

    return {"emb": emb_p, "layers": layers, "fc_w": w_fc_p, "fc_b": b_fc_p,
            "dims": dict(E=E, Ep=Ep, H=H, Hp=Hp, O=O, Op=Op)}


def wordle_forward(packed, tokens):
    """Pallas forward pass.  tokens: (B, T) int32.  Returns (B, T, O) float32."""
    B, T = tokens.shape
    d = packed["dims"]
    Ep, Hp, Op, O = d["Ep"], d["Hp"], d["Op"], d["O"]
    num_layers = len(packed["layers"])
    Bp = _round_up(max(B, 1), 8)          # sublane-pad the batch

    # Embedding gather is glue (plain JAX); the LSTM / Linear hot path is in Pallas.
    x = packed["emb"][tokens]                         # (B, T, Ep) f32
    x = jnp.transpose(x, (1, 0, 2))                   # (T, B, Ep) time-major
    if Bp != B:
        x = jnp.pad(x, ((0, 0), (0, Bp - B), (0, 0)))

    kernel_inputs = [x]
    for (w_ih, w_hh, b) in packed["layers"]:
        kernel_inputs += [w_ih, w_hh, b]
    kernel_inputs += [packed["fc_w"], packed["fc_b"]]

    kernel = make_kernel(num_layers, T, Bp, Ep, Hp, Op)
    vmem = pl.BlockSpec(memory_space=pltpu.MemorySpace.VMEM)

    out = pl.pallas_call(
        kernel,
        out_shape=jax.ShapeDtypeStruct((T * Bp, Op), jnp.float32),
        in_specs=[vmem] * len(kernel_inputs),
        out_specs=vmem,
        scratch_shapes=[
            pltpu.VMEM((T, Bp, 4 * Hp), jnp.float32),   # hoisted gate pre-activations
            pltpu.VMEM((T, Bp, Hp), jnp.float32),       # per-layer hidden sequence
        ],
        compiler_params=pltpu.CompilerParams(vmem_limit_bytes=32 * 1024 * 1024),
    )(*kernel_inputs)

    out = out.reshape(T, Bp, Op)
    out = jnp.transpose(out, (1, 0, 2))[:B, :, :O]      # (B, T, O), drop padding
    return out


def init_params(key, vocab_size, embedding_dim, hidden_size, output_size, num_layers):
    """Deterministic init matching the PyTorch module's parameter shapes."""
    keys = iter(jax.random.split(key, 1 + 4 * num_layers + 2))
    emb = jax.random.normal(next(keys), (vocab_size, embedding_dim), jnp.float32)
    k = 1.0 / float(hidden_size) ** 0.5
    lstm = []
    for l in range(num_layers):
        in_dim = embedding_dim if l == 0 else hidden_size
        w_ih = jax.random.uniform(next(keys), (4 * hidden_size, in_dim), jnp.float32, -k, k)
        w_hh = jax.random.uniform(next(keys), (4 * hidden_size, hidden_size), jnp.float32, -k, k)
        b_ih = jax.random.uniform(next(keys), (4 * hidden_size,), jnp.float32, -k, k)
        b_hh = jax.random.uniform(next(keys), (4 * hidden_size,), jnp.float32, -k, k)
        lstm.append((w_ih, w_hh, b_ih, b_hh))
    fc_w = jax.random.uniform(next(keys), (output_size, hidden_size), jnp.float32, -k, k)
    fc_b = jax.random.uniform(next(keys), (output_size,), jnp.float32, -k, k)
    return {"embedding": emb, "lstm": lstm, "fc_w": fc_w, "fc_b": fc_b}


def reference_forward(params, tokens):
    """Pure-JAX reference mirroring the PyTorch forward (eval-mode dropout)."""
    x = params["embedding"][tokens].astype(jnp.float32)   # (B, T, E)
    B = x.shape[0]
    for (w_ih, w_hh, b_ih, b_hh) in params["lstm"]:
        H = w_hh.shape[1]

        def step(carry, x_t):
            h, c = carry
            gates = x_t @ w_ih.T + b_ih + h @ w_hh.T + b_hh
            i, f, g, o = jnp.split(gates, 4, axis=-1)
            i, f, o = jax.nn.sigmoid(i), jax.nn.sigmoid(f), jax.nn.sigmoid(o)
            g = jnp.tanh(g)
            c = f * c + i * g
            h = o * jnp.tanh(c)
            return (h, c), h

        h0 = jnp.zeros((B, H), jnp.float32)
        c0 = jnp.zeros((B, H), jnp.float32)
        _, ys = lax.scan(step, (h0, c0), jnp.swapaxes(x, 0, 1))
        x = jnp.swapaxes(ys, 0, 1)
    return x @ params["fc_w"].T + params["fc_b"]


if __name__ == "__main__":
    VOCAB, EMBED, HIDDEN, OUTPUT, LAYERS = 32, 16, 32, 32, 2
    BATCH, SEQ = 2, 8

    key = jax.random.PRNGKey(0)
    params = init_params(key, VOCAB, EMBED, HIDDEN, OUTPUT, LAYERS)
    packed = pack_params(params)
    tokens = jax.random.randint(jax.random.fold_in(key, 123),
                                (BATCH, SEQ), 0, VOCAB, dtype=jnp.int32)

    out = wordle_forward(packed, tokens)
    out = jax.block_until_ready(out)
    assert out.shape == (BATCH, SEQ, OUTPUT), out.shape

    ref = reference_forward(params, tokens)
    assert jnp.allclose(out, ref, rtol=1e-4, atol=1e-4), "mismatch vs pure-JAX reference"

    print("KERNEL_OK")
</pallas_src>

<mosaic_0001>
module attributes {stable_mosaic.version = 11 : i64} {
  func.func @kernel(%arg0: memref<8x8x128xf32, #tpu.memory_space<vmem>>, %arg1: memref<128x512xf32, #tpu.memory_space<vmem>>, %arg2: memref<128x512xf32, #tpu.memory_space<vmem>>, %arg3: memref<1x512xf32, #tpu.memory_space<vmem>>, %arg4: memref<128x512xf32, #tpu.memory_space<vmem>>, %arg5: memref<128x512xf32, #tpu.memory_space<vmem>>, %arg6: memref<1x512xf32, #tpu.memory_space<vmem>>, %arg7: memref<128x128xf32, #tpu.memory_space<vmem>>, %arg8: memref<1x128xf32, #tpu.memory_space<vmem>>, %arg9: memref<64x128xf32, #tpu.memory_space<vmem>>, %arg10: memref<8x8x512xf32, #tpu.memory_space<vmem>>, %arg11: memref<8x8x128xf32, #tpu.memory_space<vmem>>) attributes {dimension_semantics = [], scalar_prefetch = 0 : i64, scratch_operands = 2 : i64, tpu.core_type = #tpu.core_type<tc>} {
    %c0 = arith.constant 0 : index
    %c0_0 = arith.constant 0 : index
    %0 = vector.load %arg1[%c0, %c0_0] : memref<128x512xf32, #tpu.memory_space<vmem>>, vector<128x512xf32>
    %c0_1 = arith.constant 0 : index
    %c0_2 = arith.constant 0 : index
    %1 = vector.load %arg2[%c0_1, %c0_2] : memref<128x512xf32, #tpu.memory_space<vmem>>, vector<128x512xf32>
    %c0_3 = arith.constant 0 : index
    %c0_4 = arith.constant 0 : index
    %2 = vector.load %arg3[%c0_3, %c0_4] : memref<1x512xf32, #tpu.memory_space<vmem>>, vector<1x512xf32>
    %c0_5 = arith.constant 0 : index
    %c0_6 = arith.constant 0 : index
    %c0_7 = arith.constant 0 : index
    %3 = vector.load %arg0[%c0_5, %c0_6, %c0_7] : memref<8x8x128xf32, #tpu.memory_space<vmem>>, vector<8x8x128xf32>
    %4 = vector.shape_cast %3 : vector<8x8x128xf32> to vector<64x128xf32>
    %cst = arith.constant dense<0.000000e+00> : vector<64x512xf32>
    %5 = tpu.matmul %4, %0, %cst {dimension_numbers = #tpu.dot_dimension_numbers<[1], [0], [0], [1], [0, 0, 1, 1], [], []>} : vector<64x128xf32>, vector<128x512xf32>, vector<64x512xf32> -> vector<64x512xf32>
    %6 = vector.broadcast %2 : vector<1x512xf32> to vector<64x512xf32>
    %7 = arith.addf %5, %6 : vector<64x512xf32>
    %8 = vector.shape_cast %7 : vector<64x512xf32> to vector<8x8x512xf32>
    %c0_8 = arith.constant 0 : index
    %c0_9 = arith.constant 0 : index
    %c0_10 = arith.constant 0 : index
    %9 = vector.load %arg10[%c0_8, %c0_9, %c0_10] : memref<8x8x512xf32, #tpu.memory_space<vmem>>, vector<8x8x512xf32>
    tpu.vector_store %arg10[%c0_8, %c0_9, %c0_10], %8 {strides = array<i32>} : memref<8x8x512xf32, #tpu.memory_space<vmem>>, vector<8x8x512xf32>,
    %cst_11 = arith.constant 0.000000e+00 : f32
    %10 = vector.broadcast %cst_11 : f32 to vector<8x128xf32>
    %cst_12 = arith.constant 0.000000e+00 : f32
    %11 = vector.broadcast %cst_12 : f32 to vector<8x128xf32>
    %c0_13 = arith.constant 0 : index
    %c0_14 = arith.constant 0 : index
    %c0_15 = arith.constant 0 : index
    %12 = vector.load %arg10[%c0_13, %c0_14, %c0_15] : memref<8x8x512xf32, #tpu.memory_space<vmem>>, vector<1x8x512xf32>
    %13 = vector.shape_cast %12 : vector<1x8x512xf32> to vector<8x512xf32>
    %cst_16 = arith.constant dense<0.000000e+00> : vector<8x512xf32>
    %14 = tpu.matmul %10, %1, %cst_16 {dimension_numbers = #tpu.dot_dimension_numbers<[1], [0], [0], [1], [0, 0, 1, 1], [], []>} : vector<8x128xf32>, vector<128x512xf32>, vector<8x512xf32> -> vector<8x512xf32>
    %15 = arith.addf %13, %14 : vector<8x512xf32>
    %16 = vector.extract_strided_slice %15 {offsets = [0, 0], sizes = [8, 128], strides = [1, 1]} : vector<8x512xf32> to vector<8x128xf32>
    %17 = arith.negf %16 : vector<8x128xf32>
    %18 = math.exp %17 : vector<8x128xf32>
    %cst_17 = arith.constant 1.000000e+00 : f32
    %19 = vector.broadcast %cst_17 : f32 to vector<8x128xf32>
    %20 = arith.addf %19, %18 : vector<8x128xf32>
    %21 = arith.divf %19, %20 : vector<8x128xf32>
    %22 = vector.extract_strided_slice %15 {offsets = [0, 128], sizes = [8, 128], strides = [1, 1]} : vector<8x512xf32> to vector<8x128xf32>
    %23 = arith.negf %22 : vector<8x128xf32>
    %24 = math.exp %23 : vector<8x128xf32>
    %cst_18 = arith.constant 1.000000e+00 : f32
    %25 = vector.broadcast %cst_18 : f32 to vector<8x128xf32>
    %26 = arith.addf %25, %24 : vector<8x128xf32>
    %27 = arith.divf %25, %26 : vector<8x128xf32>
    %28 = vector.extract_strided_slice %15 {offsets = [0, 256], sizes = [8, 128], strides = [1, 1]} : vector<8x512xf32> to vector<8x128xf32>
    %29 = math.tanh %28 : vector<8x128xf32>
    %30 = vector.extract_strided_slice %15 {offsets = [0, 384], sizes = [8, 128], strides = [1, 1]} : vector<8x512xf32> to vector<8x128xf32>
    %31 = arith.negf %30 : vector<8x128xf32>
    %32 = math.exp %31 : vector<8x128xf32>
    %cst_19 = arith.constant 1.000000e+00 : f32
    %33 = vector.broadcast %cst_19 : f32 to vector<8x128xf32>
    %34 = arith.addf %33, %32 : vector<8x128xf32>
    %35 = arith.divf %33, %34 : vector<8x128xf32>
    %36 = arith.mulf %27, %11 : vector<8x128xf32>
    %37 = arith.mulf %21, %29 : vector<8x128xf32>
    %38 = arith.addf %36, %37 : vector<8x128xf32>
    %39 = math.tanh %38 : vector<8x128xf32>
    %40 = arith.mulf %35, %39 : vector<8x128xf32>
    %c0_20 = arith.constant 0 : index
    %c0_21 = arith.constant 0 : index
    %c0_22 = arith.constant 0 : index
    %41 = vector.load %arg11[%c0_20, %c0_21, %c0_22] : memref<8x8x128xf32, #tpu.memory_space<vmem>>, vector<1x8x128xf32>
    %42 = vector.shape_cast %41 : vector<1x8x128xf32> to vector<8x128xf32>
    %43 = vector.shape_cast %40 : vector<8x128xf32> to vector<1x8x128xf32>
    tpu.vector_store %arg11[%c0_20, %c0_21, %c0_22], %43 {strides = array<i32>} : memref<8x8x128xf32, #tpu.memory_space<vmem>>, vector<1x8x128xf32>,
    %c1 = arith.constant 1 : index
    %c0_23 = arith.constant 0 : index
    %c0_24 = arith.constant 0 : index
    %44 = vector.load %arg10[%c1, %c0_23, %c0_24] : memref<8x8x512xf32, #tpu.memory_space<vmem>>, vector<1x8x512xf32>
    %45 = vector.shape_cast %44 : vector<1x8x512xf32> to vector<8x512xf32>
    %cst_25 = arith.constant dense<0.000000e+00> : vector<8x512xf32>
    %46 = tpu.matmul %40, %1, %cst_25 {dimension_numbers = #tpu.dot_dimension_numbers<[1], [0], [0], [1], [0, 0, 1, 1], [], []>} : vector<8x128xf32>, vector<128x512xf32>, vector<8x512xf32> -> vector<8x512xf32>
    %47 = arith.addf %45, %46 : vector<8x512xf32>
    %48 = vector.extract_strided_slice %47 {offsets = [0, 0], sizes = [8, 128], strides = [1, 1]} : vector<8x512xf32> to vector<8x128xf32>
    %49 = arith.negf %48 : vector<8x128xf32>
    %50 = math.exp %49 : vector<8x128xf32>
    %cst_26 = arith.constant 1.000000e+00 : f32
    %51 = vector.broadcast %cst_26 : f32 to vector<8x128xf32>
    %52 = arith.addf %51, %50 : vector<8x128xf32>
    %53 = arith.divf %51, %52 : vector<8x128xf32>
    %54 = vector.extract_strided_slice %47 {offsets = [0, 128], sizes = [8, 128], strides = [1, 1]} : vector<8x512xf32> to vector<8x128xf32>
    %55 = arith.negf %54 : vector<8x128xf32>
    %56 = math.exp %55 : vector<8x128xf32>
    %cst_27 = arith.constant 1.000000e+00 : f32
    %57 = vector.broadcast %cst_27 : f32 to vector<8x128xf32>
    %58 = arith.addf %57, %56 : vector<8x128xf32>
    %59 = arith.divf %57, %58 : vector<8x128xf32>
    %60 = vector.extract_strided_slice %47 {offsets = [0, 256], sizes = [8, 128], strides = [1, 1]} : vector<8x512xf32> to vector<8x128xf32>
    %61 = math.tanh %60 : vector<8x128xf32>
    %62 = vector.extract_strided_slice %47 {offsets = [0, 384], sizes = [8, 128], strides = [1, 1]} : vector<8x512xf32> to vector<8x128xf32>
    %63 = arith.negf %62 : vector<8x128xf32>
    %64 = math.exp %63 : vector<8x128xf32>
    %cst_28 = arith.constant 1.000000e+00 : f32
    %65 = vector.broadcast %cst_28 : f32 to vector<8x128xf32>
    %66 = arith.addf %65, %64 : vector<8x128xf32>
    %67 = arith.divf %65, %66 : vector<8x128xf32>
    %68 = arith.mulf %59, %38 : vector<8x128xf32>
    %69 = arith.mulf %53, %61 : vector<8x128xf32>
    %70 = arith.addf %68, %69 : vector<8x128xf32>
    %71 = math.tanh %70 : vector<8x128xf32>
    %72 = arith.mulf %67, %71 : vector<8x128xf32>
    %c1_29 = arith.constant 1 : index
    %c0_30 = arith.constant 0 : index
    %c0_31 = arith.constant 0 : index
    %73 = vector.load %arg11[%c1_29, %c0_30, %c0_31] : memref<8x8x128xf32, #tpu.memory_space<vmem>>, vector<1x8x128xf32>
    %74 = vector.shape_cast %73 : vector<1x8x128xf32> to vector<8x128xf32>
    %75 = vector.shape_cast %72 : vector<8x128xf32> to vector<1x8x128xf32>
    tpu.vector_store %arg11[%c1_29, %c0_30, %c0_31], %75 {strides = array<i32>} : memref<8x8x128xf32, #tpu.memory_space<vmem>>, vector<1x8x128xf32>,
    %c2 = arith.constant 2 : index
    %c0_32 = arith.constant 0 : index
    %c0_33 = arith.constant 0 : index
    %76 = vector.load %arg10[%c2, %c0_32, %c0_33] : memref<8x8x512xf32, #tpu.memory_space<vmem>>, vector<1x8x512xf32>
    %77 = vector.shape_cast %76 : vector<1x8x512xf32> to vector<8x512xf32>
    %cst_34 = arith.constant dense<0.000000e+00> : vector<8x512xf32>
    %78 = tpu.matmul %72, %1, %cst_34 {dimension_numbers = #tpu.dot_dimension_numbers<[1], [0], [0], [1], [0, 0, 1, 1], [], []>} : vector<8x128xf32>, vector<128x512xf32>, vector<8x512xf32> -> vector<8x512xf32>
    %79 = arith.addf %77, %78 : vector<8x512xf32>
    %80 = vector.extract_strided_slice %79 {offsets = [0, 0], sizes = [8, 128], strides = [1, 1]} : vector<8x512xf32> to vector<8x128xf32>
    %81 = arith.negf %80 : vector<8x128xf32>
    %82 = math.exp %81 : vector<8x128xf32>
    %cst_35 = arith.constant 1.000000e+00 : f32
    %83 = vector.broadcast %cst_35 : f32 to vector<8x128xf32>
    %84 = arith.addf %83, %82 : vector<8x128xf32>
    %85 = arith.divf %83, %84 : vector<8x128xf32>
    %86 = vector.extract_strided_slice %79 {offsets = [0, 128], sizes = [8, 128], strides = [1, 1]} : vector<8x512xf32> to vector<8x128xf32>
    %87 = arith.negf %86 : vector<8x128xf32>
    %88 = math.exp %87 : vector<8x128xf32>
    %cst_36 = arith.constant 1.000000e+00 : f32
    %89 = vector.broadcast %cst_36 : f32 to vector<8x128xf32>
    %90 = arith.addf %89, %88 : vector<8x128xf32>
    %91 = arith.divf %89, %90 : vector<8x128xf32>
    %92 = vector.extract_strided_slice %79 {offsets = [0, 256], sizes = [8, 128], strides = [1, 1]} : vector<8x512xf32> to vector<8x128xf32>
    %93 = math.tanh %92 : vector<8x128xf32>
    %94 = vector.extract_strided_slice %79 {offsets = [0, 384], sizes = [8, 128], strides = [1, 1]} : vector<8x512xf32> to vector<8x128xf32>
    %95 = arith.negf %94 : vector<8x128xf32>
    %96 = math.exp %95 : vector<8x128xf32>
    %cst_37 = arith.constant 1.000000e+00 : f32
    %97 = vector.broadcast %cst_37 : f32 to vector<8x128xf32>
    %98 = arith.addf %97, %96 : vector<8x128xf32>
    %99 = arith.divf %97, %98 : vector<8x128xf32>
    %100 = arith.mulf %91, %70 : vector<8x128xf32>
    %101 = arith.mulf %85, %93 : vector<8x128xf32>
    %102 = arith.addf %100, %101 : vector<8x128xf32>
    %103 = math.tanh %102 : vector<8x128xf32>
    %104 = arith.mulf %99, %103 : vector<8x128xf32>
    %c2_38 = arith.constant 2 : index
    %c0_39 = arith.constant 0 : index
    %c0_40 = arith.constant 0 : index
    %105 = vector.load %arg11[%c2_38, %c0_39, %c0_40] : memref<8x8x128xf32, #tpu.memory_space<vmem>>, vector<1x8x128xf32>
    %106 = vector.shape_cast %105 : vector<1x8x128xf32> to vector<8x128xf32>
    %107 = vector.shape_cast %104 : vector<8x128xf32> to vector<1x8x128xf32>
    tpu.vector_store %arg11[%c2_38, %c0_39, %c0_40], %107 {strides = array<i32>} : memref<8x8x128xf32, #tpu.memory_space<vmem>>, vector<1x8x128xf32>,
    %c3 = arith.constant 3 : index
    %c0_41 = arith.constant 0 : index
    %c0_42 = arith.constant 0 : index
    %108 = vector.load %arg10[%c3, %c0_41, %c0_42] : memref<8x8x512xf32, #tpu.memory_space<vmem>>, vector<1x8x512xf32>
    %109 = vector.shape_cast %108 : vector<1x8x512xf32> to vector<8x512xf32>
    %cst_43 = arith.constant dense<0.000000e+00> : vector<8x512xf32>
    %110 = tpu.matmul %104, %1, %cst_43 {dimension_numbers = #tpu.dot_dimension_numbers<[1], [0], [0], [1], [0, 0, 1, 1], [], []>} : vector<8x128xf32>, vector<128x512xf32>, vector<8x512xf32> -> vector<8x512xf32>
    %111 = arith.addf %109, %110 : vector<8x512xf32>
    %112 = vector.extract_strided_slice %111 {offsets = [0, 0], sizes = [8, 128], strides = [1, 1]} : vector<8x512xf32> to vector<8x128xf32>
    %113 = arith.negf %112 : vector<8x128xf32>
    %114 = math.exp %113 : vector<8x128xf32>
    %cst_44 = arith.constant 1.000000e+00 : f32
    %115 = vector.broadcast %cst_44 : f32 to vector<8x128xf32>
    %116 = arith.addf %115, %114 : vector<8x128xf32>
    %117 = arith.divf %115, %116 : vector<8x128xf32>
    %118 = vector.extract_strided_slice %111 {offsets = [0, 128], sizes = [8, 128], strides = [1, 1]} : vector<8x512xf32> to vector<8x128xf32>
    %119 = arith.negf %118 : vector<8x128xf32>
    %120 = math.exp %119 : vector<8x128xf32>
    %cst_45 = arith.constant 1.000000e+00 : f32
    %121 = vector.broadcast %cst_45 : f32 to vector<8x128xf32>
    %122 = arith.addf %121, %120 : vector<8x128xf32>
    %123 = arith.divf %121, %122 : vector<8x128xf32>
    %124 = vector.extract_strided_slice %111 {offsets = [0, 256], sizes = [8, 128], strides = [1, 1]} : vector<8x512xf32> to vector<8x128xf32>
    %125 = math.tanh %124 : vector<8x128xf32>
    %126 = vector.extract_strided_slice %111 {offsets = [0, 384], sizes = [8, 128], strides = [1, 1]} : vector<8x512xf32> to vector<8x128xf32>
    %127 = arith.negf %126 : vector<8x128xf32>
    %128 = math.exp %127 : vector<8x128xf32>
    %cst_46 = arith.constant 1.000000e+00 : f32
    %129 = vector.broadcast %cst_46 : f32 to vector<8x128xf32>
    %130 = arith.addf %129, %128 : vector<8x128xf32>
    %131 = arith.divf %129, %130 : vector<8x128xf32>
    %132 = arith.mulf %123, %102 : vector<8x128xf32>
    %133 = arith.mulf %117, %125 : vector<8x128xf32>
    %134 = arith.addf %132, %133 : vector<8x128xf32>
    %135 = math.tanh %134 : vector<8x128xf32>
    %136 = arith.mulf %131, %135 : vector<8x128xf32>
    %c3_47 = arith.constant 3 : index
    %c0_48 = arith.constant 0 : index
    %c0_49 = arith.constant 0 : index
    %137 = vector.load %arg11[%c3_47, %c0_48, %c0_49] : memref<8x8x128xf32, #tpu.memory_space<vmem>>, vector<1x8x128xf32>
    %138 = vector.shape_cast %137 : vector<1x8x128xf32> to vector<8x128xf32>
    %139 = vector.shape_cast %136 : vector<8x128xf32> to vector<1x8x128xf32>
    tpu.vector_store %arg11[%c3_47, %c0_48, %c0_49], %139 {strides = array<i32>} : memref<8x8x128xf32, #tpu.memory_space<vmem>>, vector<1x8x128xf32>,
    %c4 = arith.constant 4 : index
    %c0_50 = arith.constant 0 : index
    %c0_51 = arith.constant 0 : index
    %140 = vector.load %arg10[%c4, %c0_50, %c0_51] : memref<8x8x512xf32, #tpu.memory_space<vmem>>, vector<1x8x512xf32>
    %141 = vector.shape_cast %140 : vector<1x8x512xf32> to vector<8x512xf32>
    %cst_52 = arith.constant dense<0.000000e+00> : vector<8x512xf32>
    %142 = tpu.matmul %136, %1, %cst_52 {dimension_numbers = #tpu.dot_dimension_numbers<[1], [0], [0], [1], [0, 0, 1, 1], [], []>} : vector<8x128xf32>, vector<128x512xf32>, vector<8x512xf32> -> vector<8x512xf32>
    %143 = arith.addf %141, %142 : vector<8x512xf32>
    %144 = vector.extract_strided_slice %143 {offsets = [0, 0], sizes = [8, 128], strides = [1, 1]} : vector<8x512xf32> to vector<8x128xf32>
    %145 = arith.negf %144 : vector<8x128xf32>
    %146 = math.exp %145 : vector<8x128xf32>
    %cst_53 = arith.constant 1.000000e+00 : f32
    %147 = vector.broadcast %cst_53 : f32 to vector<8x128xf32>
    %148 = arith.addf %147, %146 : vector<8x128xf32>
    %149 = arith.divf %147, %148 : vector<8x128xf32>
    %150 = vector.extract_strided_slice %143 {offsets = [0, 128], sizes = [8, 128], strides = [1, 1]} : vector<8x512xf32> to vector<8x128xf32>
    %151 = arith.negf %150 : vector<8x128xf32>
    %152 = math.exp %151 : vector<8x128xf32>
    %cst_54 = arith.constant 1.000000e+00 : f32
    %153 = vector.broadcast %cst_54 : f32 to vector<8x128xf32>
    %154 = arith.addf %153, %152 : vector<8x128xf32>
    %155 = arith.divf %153, %154 : vector<8x128xf32>
    %156 = vector.extract_strided_slice %143 {offsets = [0, 256], sizes = [8, 128], strides = [1, 1]} : vector<8x512xf32> to vector<8x128xf32>
    %157 = math.tanh %156 : vector<8x128xf32>
    %158 = vector.extract_strided_slice %143 {offsets = [0, 384], sizes = [8, 128], strides = [1, 1]} : vector<8x512xf32> to vector<8x128xf32>
    %159 = arith.negf %158 : vector<8x128xf32>
    %160 = math.exp %159 : vector<8x128xf32>
    %cst_55 = arith.constant 1.000000e+00 : f32
    %161 = vector.broadcast %cst_55 : f32 to vector<8x128xf32>
    %162 = arith.addf %161, %160 : vector<8x128xf32>
    %163 = arith.divf %161, %162 : vector<8x128xf32>
    %164 = arith.mulf %155, %134 : vector<8x128xf32>
    %165 = arith.mulf %149, %157 : vector<8x128xf32>
    %166 = arith.addf %164, %165 : vector<8x128xf32>
    %167 = math.tanh %166 : vector<8x128xf32>
    %168 = arith.mulf %163, %167 : vector<8x128xf32>
    %c4_56 = arith.constant 4 : index
    %c0_57 = arith.constant 0 : index
    %c0_58 = arith.constant 0 : index
    %169 = vector.load %arg11[%c4_56, %c0_57, %c0_58] : memref<8x8x128xf32, #tpu.memory_space<vmem>>, vector<1x8x128xf32>
    %170 = vector.shape_cast %169 : vector<1x8x128xf32> to vector<8x128xf32>
    %171 = vector.shape_cast %168 : vector<8x128xf32> to vector<1x8x128xf32>
    tpu.vector_store %arg11[%c4_56, %c0_57, %c0_58], %171 {strides = array<i32>} : memref<8x8x128xf32, #tpu.memory_space<vmem>>, vector<1x8x128xf32>,
    %c5 = arith.constant 5 : index
    %c0_59 = arith.constant 0 : index
    %c0_60 = arith.constant 0 : index
    %172 = vector.load %arg10[%c5, %c0_59, %c0_60] : memref<8x8x512xf32, #tpu.memory_space<vmem>>, vector<1x8x512xf32>
    %173 = vector.shape_cast %172 : vector<1x8x512xf32> to vector<8x512xf32>
    %cst_61 = arith.constant dense<0.000000e+00> : vector<8x512xf32>
    %174 = tpu.matmul %168, %1, %cst_61 {dimension_numbers = #tpu.dot_dimension_numbers<[1], [0], [0], [1], [0, 0, 1, 1], [], []>} : vector<8x128xf32>, vector<128x512xf32>, vector<8x512xf32> -> vector<8x512xf32>
    %175 = arith.addf %173, %174 : vector<8x512xf32>
    %176 = vector.extract_strided_slice %175 {offsets = [0, 0], sizes = [8, 128], strides = [1, 1]} : vector<8x512xf32> to vector<8x128xf32>
    %177 = arith.negf %176 : vector<8x128xf32>
    %178 = math.exp %177 : vector<8x128xf32>
    %cst_62 = arith.constant 1.000000e+00 : f32
    %179 = vector.broadcast %cst_62 : f32 to vector<8x128xf32>
    %180 = arith.addf %179, %178 : vector<8x128xf32>
    %181 = arith.divf %179, %180 : vector<8x128xf32>
    %182 = vector.extract_strided_slice %175 {offsets = [0, 128], sizes = [8, 128], strides = [1, 1]} : vector<8x512xf32> to vector<8x128xf32>
    %183 = arith.negf %182 : vector<8x128xf32>
    %184 = math.exp %183 : vector<8x128xf32>
    %cst_63 = arith.constant 1.000000e+00 : f32
    %185 = vector.broadcast %cst_63 : f32 to vector<8x128xf32>
    %186 = arith.addf %185, %184 : vector<8x128xf32>
    %187 = arith.divf %185, %186 : vector<8x128xf32>
    %188 = vector.extract_strided_slice %175 {offsets = [0, 256], sizes = [8, 128], strides = [1, 1]} : vector<8x512xf32> to vector<8x128xf32>
    %189 = math.tanh %188 : vector<8x128xf32>
    %190 = vector.extract_strided_slice %175 {offsets = [0, 384], sizes = [8, 128], strides = [1, 1]} : vector<8x512xf32> to vector<8x128xf32>
    %191 = arith.negf %190 : vector<8x128xf32>
    %192 = math.exp %191 : vector<8x128xf32>
    %cst_64 = arith.constant 1.000000e+00 : f32
    %193 = vector.broadcast %cst_64 : f32 to vector<8x128xf32>
    %194 = arith.addf %193, %192 : vector<8x128xf32>
    %195 = arith.divf %193, %194 : vector<8x128xf32>
    %196 = arith.mulf %187, %166 : vector<8x128xf32>
    %197 = arith.mulf %181, %189 : vector<8x128xf32>
    %198 = arith.addf %196, %197 : vector<8x128xf32>
    %199 = math.tanh %198 : vector<8x128xf32>
    %200 = arith.mulf %195, %199 : vector<8x128xf32>
    %c5_65 = arith.constant 5 : index
    %c0_66 = arith.constant 0 : index
    %c0_67 = arith.constant 0 : index
    %201 = vector.load %arg11[%c5_65, %c0_66, %c0_67] : memref<8x8x128xf32, #tpu.memory_space<vmem>>, vector<1x8x128xf32>
    %202 = vector.shape_cast %201 : vector<1x8x128xf32> to vector<8x128xf32>
    %203 = vector.shape_cast %200 : vector<8x128xf32> to vector<1x8x128xf32>
    tpu.vector_store %arg11[%c5_65, %c0_66, %c0_67], %203 {strides = array<i32>} : memref<8x8x128xf32, #tpu.memory_space<vmem>>, vector<1x8x128xf32>,
    %c6 = arith.constant 6 : index
    %c0_68 = arith.constant 0 : index
    %c0_69 = arith.constant 0 : index
    %204 = vector.load %arg10[%c6, %c0_68, %c0_69] : memref<8x8x512xf32, #tpu.memory_space<vmem>>, vector<1x8x512xf32>
    %205 = vector.shape_cast %204 : vector<1x8x512xf32> to vector<8x512xf32>
    %cst_70 = arith.constant dense<0.000000e+00> : vector<8x512xf32>
    %206 = tpu.matmul %200, %1, %cst_70 {dimension_numbers = #tpu.dot_dimension_numbers<[1], [0], [0], [1], [0, 0, 1, 1], [], []>} : vector<8x128xf32>, vector<128x512xf32>, vector<8x512xf32> -> vector<8x512xf32>
    %207 = arith.addf %205, %206 : vector<8x512xf32>
    %208 = vector.extract_strided_slice %207 {offsets = [0, 0], sizes = [8, 128], strides = [1, 1]} : vector<8x512xf32> to vector<8x128xf32>
    %209 = arith.negf %208 : vector<8x128xf32>
    %210 = math.exp %209 : vector<8x128xf32>
    %cst_71 = arith.constant 1.000000e+00 : f32
    %211 = vector.broadcast %cst_71 : f32 to vector<8x128xf32>
    %212 = arith.addf %211, %210 : vector<8x128xf32>
    %213 = arith.divf %211, %212 : vector<8x128xf32>
    %214 = vector.extract_strided_slice %207 {offsets = [0, 128], sizes = [8, 128], strides = [1, 1]} : vector<8x512xf32> to vector<8x128xf32>
    %215 = arith.negf %214 : vector<8x128xf32>
    %216 = math.exp %215 : vector<8x128xf32>
    %cst_72 = arith.constant 1.000000e+00 : f32
    %217 = vector.broadcast %cst_72 : f32 to vector<8x128xf32>
    %218 = arith.addf %217, %216 : vector<8x128xf32>
    %219 = arith.divf %217, %218 : vector<8x128xf32>
    %220 = vector.extract_strided_slice %207 {offsets = [0, 256], sizes = [8, 128], strides = [1, 1]} : vector<8x512xf32> to vector<8x128xf32>
    %221 = math.tanh %220 : vector<8x128xf32>
    %222 = vector.extract_strided_slice %207 {offsets = [0, 384], sizes = [8, 128], strides = [1, 1]} : vector<8x512xf32> to vector<8x128xf32>
    %223 = arith.negf %222 : vector<8x128xf32>
    %224 = math.exp %223 : vector<8x128xf32>
    %cst_73 = arith.constant 1.000000e+00 : f32
    %225 = vector.broadcast %cst_73 : f32 to vector<8x128xf32>
    %226 = arith.addf %225, %224 : vector<8x128xf32>
    %227 = arith.divf %225, %226 : vector<8x128xf32>
    %228 = arith.mulf %219, %198 : vector<8x128xf32>
    %229 = arith.mulf %213, %221 : vector<8x128xf32>
    %230 = arith.addf %228, %229 : vector<8x128xf32>
    %231 = math.tanh %230 : vector<8x128xf32>
    %232 = arith.mulf %227, %231 : vector<8x128xf32>
    %c6_74 = arith.constant 6 : index
    %c0_75 = arith.constant 0 : index
    %c0_76 = arith.constant 0 : index
    %233 = vector.load %arg11[%c6_74, %c0_75, %c0_76] : memref<8x8x128xf32, #tpu.memory_space<vmem>>, vector<1x8x128xf32>
    %234 = vector.shape_cast %233 : vector<1x8x128xf32> to vector<8x128xf32>
    %235 = vector.shape_cast %232 : vector<8x128xf32> to vector<1x8x128xf32>
    tpu.vector_store %arg11[%c6_74, %c0_75, %c0_76], %235 {strides = array<i32>} : memref<8x8x128xf32, #tpu.memory_space<vmem>>, vector<1x8x128xf32>,
    %c7 = arith.constant 7 : index
    %c0_77 = arith.constant 0 : index
    %c0_78 = arith.constant 0 : index
    %236 = vector.load %arg10[%c7, %c0_77, %c0_78] : memref<8x8x512xf32, #tpu.memory_space<vmem>>, vector<1x8x512xf32>
    %237 = vector.shape_cast %236 : vector<1x8x512xf32> to vector<8x512xf32>
    %cst_79 = arith.constant dense<0.000000e+00> : vector<8x512xf32>
    %238 = tpu.matmul %232, %1, %cst_79 {dimension_numbers = #tpu.dot_dimension_numbers<[1], [0], [0], [1], [0, 0, 1, 1], [], []>} : vector<8x128xf32>, vector<128x512xf32>, vector<8x512xf32> -> vector<8x512xf32>
    %239 = arith.addf %237, %238 : vector<8x512xf32>
    %240 = vector.extract_strided_slice %239 {offsets = [0, 0], sizes = [8, 128], strides = [1, 1]} : vector<8x512xf32> to vector<8x128xf32>
    %241 = arith.negf %240 : vector<8x128xf32>
    %242 = math.exp %241 : vector<8x128xf32>
    %cst_80 = arith.constant 1.000000e+00 : f32
    %243 = vector.broadcast %cst_80 : f32 to vector<8x128xf32>
    %244 = arith.addf %243, %242 : vector<8x128xf32>
    %245 = arith.divf %243, %244 : vector<8x128xf32>
    %246 = vector.extract_strided_slice %239 {offsets = [0, 128], sizes = [8, 128], strides = [1, 1]} : vector<8x512xf32> to vector<8x128xf32>
    %247 = arith.negf %246 : vector<8x128xf32>
    %248 = math.exp %247 : vector<8x128xf32>
    %cst_81 = arith.constant 1.000000e+00 : f32
    %249 = vector.broadcast %cst_81 : f32 to vector<8x128xf32>
    %250 = arith.addf %249, %248 : vector<8x128xf32>
    %251 = arith.divf %249, %250 : vector<8x128xf32>
    %252 = vector.extract_strided_slice %239 {offsets = [0, 256], sizes = [8, 128], strides = [1, 1]} : vector<8x512xf32> to vector<8x128xf32>
    %253 = math.tanh %252 : vector<8x128xf32>
    %254 = vector.extract_strided_slice %239 {offsets = [0, 384], sizes = [8, 128], strides = [1, 1]} : vector<8x512xf32> to vector<8x128xf32>
    %255 = arith.negf %254 : vector<8x128xf32>
    %256 = math.exp %255 : vector<8x128xf32>
    %cst_82 = arith.constant 1.000000e+00 : f32
    %257 = vector.broadcast %cst_82 : f32 to vector<8x128xf32>
    %258 = arith.addf %257, %256 : vector<8x128xf32>
    %259 = arith.divf %257, %258 : vector<8x128xf32>
    %260 = arith.mulf %251, %230 : vector<8x128xf32>
    %261 = arith.mulf %245, %253 : vector<8x128xf32>
    %262 = arith.addf %260, %261 : vector<8x128xf32>
    %263 = math.tanh %262 : vector<8x128xf32>
    %264 = arith.mulf %259, %263 : vector<8x128xf32>
    %c7_83 = arith.constant 7 : index
    %c0_84 = arith.constant 0 : index
    %c0_85 = arith.constant 0 : index
    %265 = vector.load %arg11[%c7_83, %c0_84, %c0_85] : memref<8x8x128xf32, #tpu.memory_space<vmem>>, vector<1x8x128xf32>
    %266 = vector.shape_cast %265 : vector<1x8x128xf32> to vector<8x128xf32>
    %267 = vector.shape_cast %264 : vector<8x128xf32> to vector<1x8x128xf32>
    tpu.vector_store %arg11[%c7_83, %c0_84, %c0_85], %267 {strides = array<i32>} : memref<8x8x128xf32, #tpu.memory_space<vmem>>, vector<1x8x128xf32>,
    %c0_86 = arith.constant 0 : index
    %c0_87 = arith.constant 0 : index
    %268 = vector.load %arg4[%c0_86, %c0_87] : memref<128x512xf32, #tpu.memory_space<vmem>>, vector<128x512xf32>
    %c0_88 = arith.constant 0 : index
    %c0_89 = arith.constant 0 : index
    %269 = vector.load %arg5[%c0_88, %c0_89] : memref<128x512xf32, #tpu.memory_space<vmem>>, vector<128x512xf32>
    %c0_90 = arith.constant 0 : index
    %c0_91 = arith.constant 0 : index
    %270 = vector.load %arg6[%c0_90, %c0_91] : memref<1x512xf32, #tpu.memory_space<vmem>>, vector<1x512xf32>
    %c0_92 = arith.constant 0 : index
    %c0_93 = arith.constant 0 : index
    %c0_94 = arith.constant 0 : index
    %271 = vector.load %arg11[%c0_92, %c0_93, %c0_94] : memref<8x8x128xf32, #tpu.memory_space<vmem>>, vector<8x8x128xf32>
    %272 = vector.shape_cast %271 : vector<8x8x128xf32> to vector<64x128xf32>
    %cst_95 = arith.constant dense<0.000000e+00> : vector<64x512xf32>
    %273 = tpu.matmul %272, %268, %cst_95 {dimension_numbers = #tpu.dot_dimension_numbers<[1], [0], [0], [1], [0, 0, 1, 1], [], []>} : vector<64x128xf32>, vector<128x512xf32>, vector<64x512xf32> -> vector<64x512xf32>
    %274 = vector.broadcast %270 : vector<1x512xf32> to vector<64x512xf32>
    %275 = arith.addf %273, %274 : vector<64x512xf32>
    %276 = vector.shape_cast %275 : vector<64x512xf32> to vector<8x8x512xf32>
    %c0_96 = arith.constant 0 : index
    %c0_97 = arith.constant 0 : index
    %c0_98 = arith.constant 0 : index
    %277 = vector.load %arg10[%c0_96, %c0_97, %c0_98] : memref<8x8x512xf32, #tpu.memory_space<vmem>>, vector<8x8x512xf32>
    tpu.vector_store %arg10[%c0_96, %c0_97, %c0_98], %276 {strides = array<i32>} : memref<8x8x512xf32, #tpu.memory_space<vmem>>, vector<8x8x512xf32>,
    %cst_99 = arith.constant 0.000000e+00 : f32
    %278 = vector.broadcast %cst_99 : f32 to vector<8x128xf32>
    %cst_100 = arith.constant 0.000000e+00 : f32
    %279 = vector.broadcast %cst_100 : f32 to vector<8x128xf32>
    %c0_101 = arith.constant 0 : index
    %c0_102 = arith.constant 0 : index
    %c0_103 = arith.constant 0 : index
    %280 = vector.load %arg10[%c0_101, %c0_102, %c0_103] : memref<8x8x512xf32, #tpu.memory_space<vmem>>, vector<1x8x512xf32>
    %281 = vector.shape_cast %280 : vector<1x8x512xf32> to vector<8x512xf32>
    %cst_104 = arith.constant dense<0.000000e+00> : vector<8x512xf32>
    %282 = tpu.matmul %278, %269, %cst_104 {dimension_numbers = #tpu.dot_dimension_numbers<[1], [0], [0], [1], [0, 0, 1, 1], [], []>} : vector<8x128xf32>, vector<128x512xf32>, vector<8x512xf32> -> vector<8x512xf32>
    %283 = arith.addf %281, %282 : vector<8x512xf32>
    %284 = vector.extract_strided_slice %283 {offsets = [0, 0], sizes = [8, 128], strides = [1, 1]} : vector<8x512xf32> to vector<8x128xf32>
    %285 = arith.negf %284 : vector<8x128xf32>
    %286 = math.exp %285 : vector<8x128xf32>
    %cst_105 = arith.constant 1.000000e+00 : f32
    %287 = vector.broadcast %cst_105 : f32 to vector<8x128xf32>
    %288 = arith.addf %287, %286 : vector<8x128xf32>
    %289 = arith.divf %287, %288 : vector<8x128xf32>
    %290 = vector.extract_strided_slice %283 {offsets = [0, 128], sizes = [8, 128], strides = [1, 1]} : vector<8x512xf32> to vector<8x128xf32>
    %291 = arith.negf %290 : vector<8x128xf32>
    %292 = math.exp %291 : vector<8x128xf32>
    %cst_106 = arith.constant 1.000000e+00 : f32
    %293 = vector.broadcast %cst_106 : f32 to vector<8x128xf32>
    %294 = arith.addf %293, %292 : vector<8x128xf32>
    %295 = arith.divf %293, %294 : vector<8x128xf32>
    %296 = vector.extract_strided_slice %283 {offsets = [0, 256], sizes = [8, 128], strides = [1, 1]} : vector<8x512xf32> to vector<8x128xf32>
    %297 = math.tanh %296 : vector<8x128xf32>
    %298 = vector.extract_strided_slice %283 {offsets = [0, 384], sizes = [8, 128], strides = [1, 1]} : vector<8x512xf32> to vector<8x128xf32>
    %299 = arith.negf %298 : vector<8x128xf32>
    %300 = math.exp %299 : vector<8x128xf32>
    %cst_107 = arith.constant 1.000000e+00 : f32
    %301 = vector.broadcast %cst_107 : f32 to vector<8x128xf32>
    %302 = arith.addf %301, %300 : vector<8x128xf32>
    %303 = arith.divf %301, %302 : vector<8x128xf32>
    %304 = arith.mulf %295, %279 : vector<8x128xf32>
    %305 = arith.mulf %289, %297 : vector<8x128xf32>
    %306 = arith.addf %304, %305 : vector<8x128xf32>
    %307 = math.tanh %306 : vector<8x128xf32>
    %308 = arith.mulf %303, %307 : vector<8x128xf32>
    %c0_108 = arith.constant 0 : index
    %c0_109 = arith.constant 0 : index
    %c0_110 = arith.constant 0 : index
    %309 = vector.load %arg11[%c0_108, %c0_109, %c0_110] : memref<8x8x128xf32, #tpu.memory_space<vmem>>, vector<1x8x128xf32>
    %310 = vector.shape_cast %309 : vector<1x8x128xf32> to vector<8x128xf32>
    %311 = vector.shape_cast %308 : vector<8x128xf32> to vector<1x8x128xf32>
    tpu.vector_store %arg11[%c0_108, %c0_109, %c0_110], %311 {strides = array<i32>} : memref<8x8x128xf32, #tpu.memory_space<vmem>>, vector<1x8x128xf32>,
    %c1_111 = arith.constant 1 : index
    %c0_112 = arith.constant 0 : index
    %c0_113 = arith.constant 0 : index
    %312 = vector.load %arg10[%c1_111, %c0_112, %c0_113] : memref<8x8x512xf32, #tpu.memory_space<vmem>>, vector<1x8x512xf32>
    %313 = vector.shape_cast %312 : vector<1x8x512xf32> to vector<8x512xf32>
    %cst_114 = arith.constant dense<0.000000e+00> : vector<8x512xf32>
    %314 = tpu.matmul %308, %269, %cst_114 {dimension_numbers = #tpu.dot_dimension_numbers<[1], [0], [0], [1], [0, 0, 1, 1], [], []>} : vector<8x128xf32>, vector<128x512xf32>, vector<8x512xf32> -> vector<8x512xf32>
    %315 = arith.addf %313, %314 : vector<8x512xf32>
    %316 = vector.extract_strided_slice %315 {offsets = [0, 0], sizes = [8, 128], strides = [1, 1]} : vector<8x512xf32> to vector<8x128xf32>
    %317 = arith.negf %316 : vector<8x128xf32>
    %318 = math.exp %317 : vector<8x128xf32>
    %cst_115 = arith.constant 1.000000e+00 : f32
    %319 = vector.broadcast %cst_115 : f32 to vector<8x128xf32>
    %320 = arith.addf %319, %318 : vector<8x128xf32>
    %321 = arith.divf %319, %320 : vector<8x128xf32>
    %322 = vector.extract_strided_slice %315 {offsets = [0, 128], sizes = [8, 128], strides = [1, 1]} : vector<8x512xf32> to vector<8x128xf32>
    %323 = arith.negf %322 : vector<8x128xf32>
    %324 = math.exp %323 : vector<8x128xf32>
    %cst_116 = arith.constant 1.000000e+00 : f32
    %325 = vector.broadcast %cst_116 : f32 to vector<8x128xf32>
    %326 = arith.addf %325, %324 : vector<8x128xf32>
    %327 = arith.divf %325, %326 : vector<8x128xf32>
    %328 = vector.extract_strided_slice %315 {offsets = [0, 256], sizes = [8, 128], strides = [1, 1]} : vector<8x512xf32> to vector<8x128xf32>
    %329 = math.tanh %328 : vector<8x128xf32>
    %330 = vector.extract_strided_slice %315 {offsets = [0, 384], sizes = [8, 128], strides = [1, 1]} : vector<8x512xf32> to vector<8x128xf32>
    %331 = arith.negf %330 : vector<8x128xf32>
    %332 = math.exp %331 : vector<8x128xf32>
    %cst_117 = arith.constant 1.000000e+00 : f32
    %333 = vector.broadcast %cst_117 : f32 to vector<8x128xf32>
    %334 = arith.addf %333, %332 : vector<8x128xf32>
    %335 = arith.divf %333, %334 : vector<8x128xf32>
    %336 = arith.mulf %327, %306 : vector<8x128xf32>
    %337 = arith.mulf %321, %329 : vector<8x128xf32>
    %338 = arith.addf %336, %337 : vector<8x128xf32>
    %339 = math.tanh %338 : vector<8x128xf32>
    %340 = arith.mulf %335, %339 : vector<8x128xf32>
    %c1_118 = arith.constant 1 : index
    %c0_119 = arith.constant 0 : index
    %c0_120 = arith.constant 0 : index
    %341 = vector.load %arg11[%c1_118, %c0_119, %c0_120] : memref<8x8x128xf32, #tpu.memory_space<vmem>>, vector<1x8x128xf32>
    %342 = vector.shape_cast %341 : vector<1x8x128xf32> to vector<8x128xf32>
    %343 = vector.shape_cast %340 : vector<8x128xf32> to vector<1x8x128xf32>
    tpu.vector_store %arg11[%c1_118, %c0_119, %c0_120], %343 {strides = array<i32>} : memref<8x8x128xf32, #tpu.memory_space<vmem>>, vector<1x8x128xf32>,
    %c2_121 = arith.constant 2 : index
    %c0_122 = arith.constant 0 : index
    %c0_123 = arith.constant 0 : index
    %344 = vector.load %arg10[%c2_121, %c0_122, %c0_123] : memref<8x8x512xf32, #tpu.memory_space<vmem>>, vector<1x8x512xf32>
    %345 = vector.shape_cast %344 : vector<1x8x512xf32> to vector<8x512xf32>
    %cst_124 = arith.constant dense<0.000000e+00> : vector<8x512xf32>
    %346 = tpu.matmul %340, %269, %cst_124 {dimension_numbers = #tpu.dot_dimension_numbers<[1], [0], [0], [1], [0, 0, 1, 1], [], []>} : vector<8x128xf32>, vector<128x512xf32>, vector<8x512xf32> -> vector<8x512xf32>
    %347 = arith.addf %345, %346 : vector<8x512xf32>
    %348 = vector.extract_strided_slice %347 {offsets = [0, 0], sizes = [8, 128], strides = [1, 1]} : vector<8x512xf32> to vector<8x128xf32>
    %349 = arith.negf %348 : vector<8x128xf32>
    %350 = math.exp %349 : vector<8x128xf32>
    %cst_125 = arith.constant 1.000000e+00 : f32
    %351 = vector.broadcast %cst_125 : f32 to vector<8x128xf32>
    %352 = arith.addf %351, %350 : vector<8x128xf32>
    %353 = arith.divf %351, %352 : vector<8x128xf32>
    %354 = vector.extract_strided_slice %347 {offsets = [0, 128], sizes = [8, 128], strides = [1, 1]} : vector<8x512xf32> to vector<8x128xf32>
    %355 = arith.negf %354 : vector<8x128xf32>
    %356 = math.exp %355 : vector<8x128xf32>
    %cst_126 = arith.constant 1.000000e+00 : f32
    %357 = vector.broadcast %cst_126 : f32 to vector<8x128xf32>
    %358 = arith.addf %357, %356 : vector<8x128xf32>
    %359 = arith.divf %357, %358 : vector<8x128xf32>
    %360 = vector.extract_strided_slice %347 {offsets = [0, 256], sizes = [8, 128], strides = [1, 1]} : vector<8x512xf32> to vector<8x128xf32>
    %361 = math.tanh %360 : vector<8x128xf32>
    %362 = vector.extract_strided_slice %347 {offsets = [0, 384], sizes = [8, 128], strides = [1, 1]} : vector<8x512xf32> to vector<8x128xf32>
    %363 = arith.negf %362 : vector<8x128xf32>
    %364 = math.exp %363 : vector<8x128xf32>
    %cst_127 = arith.constant 1.000000e+00 : f32
    %365 = vector.broadcast %cst_127 : f32 to vector<8x128xf32>
    %366 = arith.addf %365, %364 : vector<8x128xf32>
    %367 = arith.divf %365, %366 : vector<8x128xf32>
    %368 = arith.mulf %359, %338 : vector<8x128xf32>
    %369 = arith.mulf %353, %361 : vector<8x128xf32>
    %370 = arith.addf %368, %369 : vector<8x128xf32>
    %371 = math.tanh %370 : vector<8x128xf32>
    %372 = arith.mulf %367, %371 : vector<8x128xf32>
    %c2_128 = arith.constant 2 : index
    %c0_129 = arith.constant 0 : index
    %c0_130 = arith.constant 0 : index
    %373 = vector.load %arg11[%c2_128, %c0_129, %c0_130] : memref<8x8x128xf32, #tpu.memory_space<vmem>>, vector<1x8x128xf32>
    %374 = vector.shape_cast %373 : vector<1x8x128xf32> to vector<8x128xf32>
    %375 = vector.shape_cast %372 : vector<8x128xf32> to vector<1x8x128xf32>
    tpu.vector_store %arg11[%c2_128, %c0_129, %c0_130], %375 {strides = array<i32>} : memref<8x8x128xf32, #tpu.memory_space<vmem>>, vector<1x8x128xf32>,
    %c3_131 = arith.constant 3 : index
    %c0_132 = arith.constant 0 : index
    %c0_133 = arith.constant 0 : index
    %376 = vector.load %arg10[%c3_131, %c0_132, %c0_133] : memref<8x8x512xf32, #tpu.memory_space<vmem>>, vector<1x8x512xf32>
    %377 = vector.shape_cast %376 : vector<1x8x512xf32> to vector<8x512xf32>
    %cst_134 = arith.constant dense<0.000000e+00> : vector<8x512xf32>
    %378 = tpu.matmul %372, %269, %cst_134 {dimension_numbers = #tpu.dot_dimension_numbers<[1], [0], [0], [1], [0, 0, 1, 1], [], []>} : vector<8x128xf32>, vector<128x512xf32>, vector<8x512xf32> -> vector<8x512xf32>
    %379 = arith.addf %377, %378 : vector<8x512xf32>
    %380 = vector.extract_strided_slice %379 {offsets = [0, 0], sizes = [8, 128], strides = [1, 1]} : vector<8x512xf32> to vector<8x128xf32>
    %381 = arith.negf %380 : vector<8x128xf32>
    %382 = math.exp %381 : vector<8x128xf32>
    %cst_135 = arith.constant 1.000000e+00 : f32
    %383 = vector.broadcast %cst_135 : f32 to vector<8x128xf32>
    %384 = arith.addf %383, %382 : vector<8x128xf32>
    %385 = arith.divf %383, %384 : vector<8x128xf32>
    %386 = vector.extract_strided_slice %379 {offsets = [0, 128], sizes = [8, 128], strides = [1, 1]} : vector<8x512xf32> to vector<8x128xf32>
    %387 = arith.negf %386 : vector<8x128xf32>
    %388 = math.exp %387 : vector<8x128xf32>
    %cst_136 = arith.constant 1.000000e+00 : f32
    %389 = vector.broadcast %cst_136 : f32 to vector<8x128xf32>
    %390 = arith.addf %389, %388 : vector<8x128xf32>
    %391 = arith.divf %389, %390 : vector<8x128xf32>
    %392 = vector.extract_strided_slice %379 {offsets = [0, 256], sizes = [8, 128], strides = [1, 1]} : vector<8x512xf32> to vector<8x128xf32>
    %393 = math.tanh %392 : vector<8x128xf32>
    %394 = vector.extract_strided_slice %379 {offsets = [0, 384], sizes = [8, 128], strides = [1, 1]} : vector<8x512xf32> to vector<8x128xf32>
    %395 = arith.negf %394 : vector<8x128xf32>
    %396 = math.exp %395 : vector<8x128xf32>
    %cst_137 = arith.constant 1.000000e+00 : f32
    %397 = vector.broadcast %cst_137 : f32 to vector<8x128xf32>
    %398 = arith.addf %397, %396 : vector<8x128xf32>
    %399 = arith.divf %397, %398 : vector<8x128xf32>
    %400 = arith.mulf %391, %370 : vector<8x128xf32>
    %401 = arith.mulf %385, %393 : vector<8x128xf32>
    %402 = arith.addf %400, %401 : vector<8x128xf32>
    %403 = math.tanh %402 : vector<8x128xf32>
    %404 = arith.mulf %399, %403 : vector<8x128xf32>
    %c3_138 = arith.constant 3 : index
    %c0_139 = arith.constant 0 : index
    %c0_140 = arith.constant 0 : index
    %405 = vector.load %arg11[%c3_138, %c0_139, %c0_140] : memref<8x8x128xf32, #tpu.memory_space<vmem>>, vector<1x8x128xf32>
    %406 = vector.shape_cast %405 : vector<1x8x128xf32> to vector<8x128xf32>
    %407 = vector.shape_cast %404 : vector<8x128xf32> to vector<1x8x128xf32>
    tpu.vector_store %arg11[%c3_138, %c0_139, %c0_140], %407 {strides = array<i32>} : memref<8x8x128xf32, #tpu.memory_space<vmem>>, vector<1x8x128xf32>,
    %c4_141 = arith.constant 4 : index
    %c0_142 = arith.constant 0 : index
    %c0_143 = arith.constant 0 : index
    %408 = vector.load %arg10[%c4_141, %c0_142, %c0_143] : memref<8x8x512xf32, #tpu.memory_space<vmem>>, vector<1x8x512xf32>
    %409 = vector.shape_cast %408 : vector<1x8x512xf32> to vector<8x512xf32>
    %cst_144 = arith.constant dense<0.000000e+00> : vector<8x512xf32>
    %410 = tpu.matmul %404, %269, %cst_144 {dimension_numbers = #tpu.dot_dimension_numbers<[1], [0], [0], [1], [0, 0, 1, 1], [], []>} : vector<8x128xf32>, vector<128x512xf32>, vector<8x512xf32> -> vector<8x512xf32>
    %411 = arith.addf %409, %410 : vector<8x512xf32>
    %412 = vector.extract_strided_slice %411 {offsets = [0, 0], sizes = [8, 128], strides = [1, 1]} : vector<8x512xf32> to vector<8x128xf32>
    %413 = arith.negf %412 : vector<8x128xf32>
    %414 = math.exp %413 : vector<8x128xf32>
    %cst_145 = arith.constant 1.000000e+00 : f32
    %415 = vector.broadcast %cst_145 : f32 to vector<8x128xf32>
    %416 = arith.addf %415, %414 : vector<8x128xf32>
    %417 = arith.divf %415, %416 : vector<8x128xf32>
    %418 = vector.extract_strided_slice %411 {offsets = [0, 128], sizes = [8, 128], strides = [1, 1]} : vector<8x512xf32> to vector<8x128xf32>
    %419 = arith.negf %418 : vector<8x128xf32>
    %420 = math.exp %419 : vector<8x128xf32>
    %cst_146 = arith.constant 1.000000e+00 : f32
    %421 = vector.broadcast %cst_146 : f32 to vector<8x128xf32>
    %422 = arith.addf %421, %420 : vector<8x128xf32>
    %423 = arith.divf %421, %422 : vector<8x128xf32>
    %424 = vector.extract_strided_slice %411 {offsets = [0, 256], sizes = [8, 128], strides = [1, 1]} : vector<8x512xf32> to vector<8x128xf32>
    %425 = math.tanh %424 : vector<8x128xf32>
    %426 = vector.extract_strided_slice %411 {offsets = [0, 384], sizes = [8, 128], strides = [1, 1]} : vector<8x512xf32> to vector<8x128xf32>
    %427 = arith.negf %426 : vector<8x128xf32>
    %428 = math.exp %427 : vector<8x128xf32>
    %cst_147 = arith.constant 1.000000e+00 : f32
    %429 = vector.broadcast %cst_147 : f32 to vector<8x128xf32>
    %430 = arith.addf %429, %428 : vector<8x128xf32>
    %431 = arith.divf %429, %430 : vector<8x128xf32>
    %432 = arith.mulf %423, %402 : vector<8x128xf32>
    %433 = arith.mulf %417, %425 : vector<8x128xf32>
    %434 = arith.addf %432, %433 : vector<8x128xf32>
    %435 = math.tanh %434 : vector<8x128xf32>
    %436 = arith.mulf %431, %435 : vector<8x128xf32>
    %c4_148 = arith.constant 4 : index
    %c0_149 = arith.constant 0 : index
    %c0_150 = arith.constant 0 : index
    %437 = vector.load %arg11[%c4_148, %c0_149, %c0_150] : memref<8x8x128xf32, #tpu.memory_space<vmem>>, vector<1x8x128xf32>
    %438 = vector.shape_cast %437 : vector<1x8x128xf32> to vector<8x128xf32>
    %439 = vector.shape_cast %436 : vector<8x128xf32> to vector<1x8x128xf32>
    tpu.vector_store %arg11[%c4_148, %c0_149, %c0_150], %439 {strides = array<i32>} : memref<8x8x128xf32, #tpu.memory_space<vmem>>, vector<1x8x128xf32>,
    %c5_151 = arith.constant 5 : index
    %c0_152 = arith.constant 0 : index
    %c0_153 = arith.constant 0 : index
    %440 = vector.load %arg10[%c5_151, %c0_152, %c0_153] : memref<8x8x512xf32, #tpu.memory_space<vmem>>, vector<1x8x512xf32>
    %441 = vector.shape_cast %440 : vector<1x8x512xf32> to vector<8x512xf32>
    %cst_154 = arith.constant dense<0.000000e+00> : vector<8x512xf32>
    %442 = tpu.matmul %436, %269, %cst_154 {dimension_numbers = #tpu.dot_dimension_numbers<[1], [0], [0], [1], [0, 0, 1, 1], [], []>} : vector<8x128xf32>, vector<128x512xf32>, vector<8x512xf32> -> vector<8x512xf32>
    %443 = arith.addf %441, %442 : vector<8x512xf32>
    %444 = vector.extract_strided_slice %443 {offsets = [0, 0], sizes = [8, 128], strides = [1, 1]} : vector<8x512xf32> to vector<8x128xf32>
    %445 = arith.negf %444 : vector<8x128xf32>
    %446 = math.exp %445 : vector<8x128xf32>
    %cst_155 = arith.constant 1.000000e+00 : f32
    %447 = vector.broadcast %cst_155 : f32 to vector<8x128xf32>
    %448 = arith.addf %447, %446 : vector<8x128xf32>
    %449 = arith.divf %447, %448 : vector<8x128xf32>
    %450 = vector.extract_strided_slice %443 {offsets = [0, 128], sizes = [8, 128], strides = [1, 1]} : vector<8x512xf32> to vector<8x128xf32>
    %451 = arith.negf %450 : vector<8x128xf32>
    %452 = math.exp %451 : vector<8x128xf32>
    %cst_156 = arith.constant 1.000000e+00 : f32
    %453 = vector.broadcast %cst_156 : f32 to vector<8x128xf32>
    %454 = arith.addf %453, %452 : vector<8x128xf32>
    %455 = arith.divf %453, %454 : vector<8x128xf32>
    %456 = vector.extract_strided_slice %443 {offsets = [0, 256], sizes = [8, 128], strides = [1, 1]} : vector<8x512xf32> to vector<8x128xf32>
    %457 = math.tanh %456 : vector<8x128xf32>
    %458 = vector.extract_strided_slice %443 {offsets = [0, 384], sizes = [8, 128], strides = [1, 1]} : vector<8x512xf32> to vector<8x128xf32>
    %459 = arith.negf %458 : vector<8x128xf32>
    %460 = math.exp %459 : vector<8x128xf32>
    %cst_157 = arith.constant 1.000000e+00 : f32
    %461 = vector.broadcast %cst_157 : f32 to vector<8x128xf32>
    %462 = arith.addf %461, %460 : vector<8x128xf32>
    %463 = arith.divf %461, %462 : vector<8x128xf32>
    %464 = arith.mulf %455, %434 : vector<8x128xf32>
    %465 = arith.mulf %449, %457 : vector<8x128xf32>
    %466 = arith.addf %464, %465 : vector<8x128xf32>
    %467 = math.tanh %466 : vector<8x128xf32>
    %468 = arith.mulf %463, %467 : vector<8x128xf32>
    %c5_158 = arith.constant 5 : index
    %c0_159 = arith.constant 0 : index
    %c0_160 = arith.constant 0 : index
    %469 = vector.load %arg11[%c5_158, %c0_159, %c0_160] : memref<8x8x128xf32, #tpu.memory_space<vmem>>, vector<1x8x128xf32>
    %470 = vector.shape_cast %469 : vector<1x8x128xf32> to vector<8x128xf32>
    %471 = vector.shape_cast %468 : vector<8x128xf32> to vector<1x8x128xf32>
    tpu.vector_store %arg11[%c5_158, %c0_159, %c0_160], %471 {strides = array<i32>} : memref<8x8x128xf32, #tpu.memory_space<vmem>>, vector<1x8x128xf32>,
    %c6_161 = arith.constant 6 : index
    %c0_162 = arith.constant 0 : index
    %c0_163 = arith.constant 0 : index
    %472 = vector.load %arg10[%c6_161, %c0_162, %c0_163] : memref<8x8x512xf32, #tpu.memory_space<vmem>>, vector<1x8x512xf32>
    %473 = vector.shape_cast %472 : vector<1x8x512xf32> to vector<8x512xf32>
    %cst_164 = arith.constant dense<0.000000e+00> : vector<8x512xf32>
    %474 = tpu.matmul %468, %269, %cst_164 {dimension_numbers = #tpu.dot_dimension_numbers<[1], [0], [0], [1], [0, 0, 1, 1], [], []>} : vector<8x128xf32>, vector<128x512xf32>, vector<8x512xf32> -> vector<8x512xf32>
    %475 = arith.addf %473, %474 : vector<8x512xf32>
    %476 = vector.extract_strided_slice %475 {offsets = [0, 0], sizes = [8, 128], strides = [1, 1]} : vector<8x512xf32> to vector<8x128xf32>
    %477 = arith.negf %476 : vector<8x128xf32>
    %478 = math.exp %477 : vector<8x128xf32>
    %cst_165 = arith.constant 1.000000e+00 : f32
    %479 = vector.broadcast %cst_165 : f32 to vector<8x128xf32>
    %480 = arith.addf %479, %478 : vector<8x128xf32>
    %481 = arith.divf %479, %480 : vector<8x128xf32>
    %482 = vector.extract_strided_slice %475 {offsets = [0, 128], sizes = [8, 128], strides = [1, 1]} : vector<8x512xf32> to vector<8x128xf32>
    %483 = arith.negf %482 : vector<8x128xf32>
    %484 = math.exp %483 : vector<8x128xf32>
    %cst_166 = arith.constant 1.000000e+00 : f32
    %485 = vector.broadcast %cst_166 : f32 to vector<8x128xf32>
    %486 = arith.addf %485, %484 : vector<8x128xf32>
    %487 = arith.divf %485, %486 : vector<8x128xf32>
    %488 = vector.extract_strided_slice %475 {offsets = [0, 256], sizes = [8, 128], strides = [1, 1]} : vector<8x512xf32> to vector<8x128xf32>
    %489 = math.tanh %488 : vector<8x128xf32>
    %490 = vector.extract_strided_slice %475 {offsets = [0, 384], sizes = [8, 128], strides = [1, 1]} : vector<8x512xf32> to vector<8x128xf32>
    %491 = arith.negf %490 : vector<8x128xf32>
    %492 = math.exp %491 : vector<8x128xf32>
    %cst_167 = arith.constant 1.000000e+00 : f32
    %493 = vector.broadcast %cst_167 : f32 to vector<8x128xf32>
    %494 = arith.addf %493, %492 : vector<8x128xf32>
    %495 = arith.divf %493, %494 : vector<8x128xf32>
    %496 = arith.mulf %487, %466 : vector<8x128xf32>
    %497 = arith.mulf %481, %489 : vector<8x128xf32>
    %498 = arith.addf %496, %497 : vector<8x128xf32>
    %499 = math.tanh %498 : vector<8x128xf32>
    %500 = arith.mulf %495, %499 : vector<8x128xf32>
    %c6_168 = arith.constant 6 : index
    %c0_169 = arith.constant 0 : index
    %c0_170 = arith.constant 0 : index
    %501 = vector.load %arg11[%c6_168, %c0_169, %c0_170] : memref<8x8x128xf32, #tpu.memory_space<vmem>>, vector<1x8x128xf32>
    %502 = vector.shape_cast %501 : vector<1x8x128xf32> to vector<8x128xf32>
    %503 = vector.shape_cast %500 : vector<8x128xf32> to vector<1x8x128xf32>
    tpu.vector_store %arg11[%c6_168, %c0_169, %c0_170], %503 {strides = array<i32>} : memref<8x8x128xf32, #tpu.memory_space<vmem>>, vector<1x8x128xf32>,
    %c7_171 = arith.constant 7 : index
    %c0_172 = arith.constant 0 : index
    %c0_173 = arith.constant 0 : index
    %504 = vector.load %arg10[%c7_171, %c0_172, %c0_173] : memref<8x8x512xf32, #tpu.memory_space<vmem>>, vector<1x8x512xf32>
    %505 = vector.shape_cast %504 : vector<1x8x512xf32> to vector<8x512xf32>
    %cst_174 = arith.constant dense<0.000000e+00> : vector<8x512xf32>
    %506 = tpu.matmul %500, %269, %cst_174 {dimension_numbers = #tpu.dot_dimension_numbers<[1], [0], [0], [1], [0, 0, 1, 1], [], []>} : vector<8x128xf32>, vector<128x512xf32>, vector<8x512xf32> -> vector<8x512xf32>
    %507 = arith.addf %505, %506 : vector<8x512xf32>
    %508 = vector.extract_strided_slice %507 {offsets = [0, 0], sizes = [8, 128], strides = [1, 1]} : vector<8x512xf32> to vector<8x128xf32>
    %509 = arith.negf %508 : vector<8x128xf32>
    %510 = math.exp %509 : vector<8x128xf32>
    %cst_175 = arith.constant 1.000000e+00 : f32
    %511 = vector.broadcast %cst_175 : f32 to vector<8x128xf32>
    %512 = arith.addf %511, %510 : vector<8x128xf32>
    %513 = arith.divf %511, %512 : vector<8x128xf32>
    %514 = vector.extract_strided_slice %507 {offsets = [0, 128], sizes = [8, 128], strides = [1, 1]} : vector<8x512xf32> to vector<8x128xf32>
    %515 = arith.negf %514 : vector<8x128xf32>
    %516 = math.exp %515 : vector<8x128xf32>
    %cst_176 = arith.constant 1.000000e+00 : f32
    %517 = vector.broadcast %cst_176 : f32 to vector<8x128xf32>
    %518 = arith.addf %517, %516 : vector<8x128xf32>
    %519 = arith.divf %517, %518 : vector<8x128xf32>
    %520 = vector.extract_strided_slice %507 {offsets = [0, 256], sizes = [8, 128], strides = [1, 1]} : vector<8x512xf32> to vector<8x128xf32>
    %521 = math.tanh %520 : vector<8x128xf32>
    %522 = vector.extract_strided_slice %507 {offsets = [0, 384], sizes = [8, 128], strides = [1, 1]} : vector<8x512xf32> to vector<8x128xf32>
    %523 = arith.negf %522 : vector<8x128xf32>
    %524 = math.exp %523 : vector<8x128xf32>
    %cst_177 = arith.constant 1.000000e+00 : f32
    %525 = vector.broadcast %cst_177 : f32 to vector<8x128xf32>
    %526 = arith.addf %525, %524 : vector<8x128xf32>
    %527 = arith.divf %525, %526 : vector<8x128xf32>
    %528 = arith.mulf %519, %498 : vector<8x128xf32>
    %529 = arith.mulf %513, %521 : vector<8x128xf32>
    %530 = arith.addf %528, %529 : vector<8x128xf32>
    %531 = math.tanh %530 : vector<8x128xf32>
    %532 = arith.mulf %527, %531 : vector<8x128xf32>
    %c7_178 = arith.constant 7 : index
    %c0_179 = arith.constant 0 : index
    %c0_180 = arith.constant 0 : index
    %533 = vector.load %arg11[%c7_178, %c0_179, %c0_180] : memref<8x8x128xf32, #tpu.memory_space<vmem>>, vector<1x8x128xf32>
    %534 = vector.shape_cast %533 : vector<1x8x128xf32> to vector<8x128xf32>
    %535 = vector.shape_cast %532 : vector<8x128xf32> to vector<1x8x128xf32>
    tpu.vector_store %arg11[%c7_178, %c0_179, %c0_180], %535 {strides = array<i32>} : memref<8x8x128xf32, #tpu.memory_space<vmem>>, vector<1x8x128xf32>,
    %c0_181 = arith.constant 0 : index
    %c0_182 = arith.constant 0 : index
    %c0_183 = arith.constant 0 : index
    %536 = vector.load %arg11[%c0_181, %c0_182, %c0_183] : memref<8x8x128xf32, #tpu.memory_space<vmem>>, vector<8x8x128xf32>
    %537 = vector.shape_cast %536 : vector<8x8x128xf32> to vector<64x128xf32>
    %c0_184 = arith.constant 0 : index
    %c0_185 = arith.constant 0 : index
    %538 = vector.load %arg7[%c0_184, %c0_185] : memref<128x128xf32, #tpu.memory_space<vmem>>, vector<128x128xf32>
    %cst_186 = arith.constant dense<0.000000e+00> : vector<64x128xf32>
    %539 = tpu.matmul %537, %538, %cst_186 {dimension_numbers = #tpu.dot_dimension_numbers<[1], [0], [0], [1], [0, 0, 1, 1], [], []>} : vector<64x128xf32>, vector<128x128xf32>, vector<64x128xf32> -> vector<64x128xf32>
    %c0_187 = arith.constant 0 : index
    %c0_188 = arith.constant 0 : index
    %540 = vector.load %arg8[%c0_187, %c0_188] : memref<1x128xf32, #tpu.memory_space<vmem>>, vector<1x128xf32>
    %541 = vector.broadcast %540 : vector<1x128xf32> to vector<64x128xf32>
    %542 = arith.addf %539, %541 : vector<64x128xf32>
    %c0_189 = arith.constant 0 : index
    %c0_190 = arith.constant 0 : index
    %543 = vector.load %arg9[%c0_189, %c0_190] : memref<64x128xf32, #tpu.memory_space<vmem>>, vector<64x128xf32>
    tpu.vector_store %arg9[%c0_189, %c0_190], %542 {strides = array<i32>} : memref<64x128xf32, #tpu.memory_space<vmem>>, vector<64x128xf32>,
    return
  }
}

</mosaic_0001>

<llo_original>
// kernel: tpu_custom_call.1
$region0: #{tpu_custom_call.1}
  #allocation0 [shape = 'u32[]', space=smem, size = 0x4, offset = 0x4, fixed_abs, tag = 'smem constant byte address 0x4 - core index']
  #allocation1 [shape = 'u32[144,128]{1,0:T(1,128)}', space=vmem, size = 0x12000, scoped, tag = 'internal scratch']
  #allocation2 [shape = 'f32[8,8,512]{2,1,0:T(8,128)}', space=vmem, size = 0x20000, scoped, tag = 'scratch operand']
  #allocation3 [shape = 'f32[8,8,128]{2,1,0:T(8,128)}', space=vmem, size = 0x8000, scoped, tag = 'scratch operand']
  %s0 = inlined_call_operand.hbm [shape: f32[8,8,128], index: 0, kind: input, shape index: {}]
  %s1 = inlined_call_operand.hbm [shape: f32[128,512], index: 1, kind: input, shape index: {}]
  %s2 = inlined_call_operand.hbm [shape: f32[128,512], index: 2, kind: input, shape index: {}]
  %s3 = inlined_call_operand.vmem [shape: f32[1,512], index: 3, kind: input, shape index: {}]
  %s4 = inlined_call_operand.hbm [shape: f32[128,512], index: 4, kind: input, shape index: {}]
  %s5 = inlined_call_operand.hbm [shape: f32[128,512], index: 5, kind: input, shape index: {}]
  %s6 = inlined_call_operand.vmem [shape: f32[1,512], index: 6, kind: input, shape index: {}]
  %s7 = inlined_call_operand.hbm [shape: f32[128,128], index: 7, kind: input, shape index: {}]
  %s8 = inlined_call_operand.vmem [shape: f32[1,128], index: 8, kind: input, shape index: {}]
  %s9 = inlined_call_operand.hbm [shape: f32[64,128], index: 9, kind: output, shape index: {}]
  %s10 = sld [smem:[#allocation0]]
  $region70: #{tpu_custom_call.1} parent=0
    _
  %s12 = ssub.s32 1, %s10
  %s13 = scalar_select 0, %s12, %s10
  $region1: #{tpu_custom_call.1} parent=0
    #allocation4 [shape = 'u8[32768]{0}', space=vmem, size = 0x8000, scoped, tag = 'input window, operand 0, single buffered']
    #allocation5 [shape = 's32[1]{0}', space=sflag, size = 0x4, scoped, tag = 'scoped memory for tpu_custom_call.1']
    #allocation6 [shape = 's32[1]{0}', space=sflag, size = 0x4, scoped, tag = 'scoped memory for tpu_custom_call.1']
    #allocation7 [shape = 'u8[262144]{0}', space=vmem, size = 0x40000, scoped, tag = 'input window, operand 1, single buffered']
    #allocation8 [shape = 's32[1]{0}', space=sflag, size = 0x4, scoped, tag = 'scoped memory for tpu_custom_call.1']
    #allocation9 [shape = 'u8[262144]{0}', space=vmem, size = 0x40000, scoped, tag = 'input window, operand 2, single buffered']
    #allocation10 [shape = 'u8[262144]{0}', space=vmem, size = 0x40000, scoped, tag = 'input window, operand 4, single buffered']
    #allocation11 [shape = 's32[1]{0}', space=sflag, size = 0x4, scoped, tag = 'scoped memory for tpu_custom_call.1']
    #allocation12 [shape = 'u8[262144]{0}', space=vmem, size = 0x40000, scoped, tag = 'input window, operand 5, single buffered']
    #allocation13 [shape = 'u8[65536]{0}', space=vmem, size = 0x10000, scoped, tag = 'input window, operand 7, single buffered']
    #allocation14 [shape = 's32[1]{0}', space=sflag, size = 0x4, scoped, tag = 'scoped memory for tpu_custom_call.1']
    #allocation15 [shape = 'u8[32768]{0}', space=vmem, size = 0x8000, scoped, tag = 'output window, operand 0, single buffered']
    %14 = vsyncpa [#allocation5], 0
    %15 = vsyncpa [#allocation8], 0
    %16 = vsyncpa [#allocation11], 0
    %17 = vsyncpa [#allocation14], 0
    %18 = vsyncpa [#allocation6], 0
    // Predicated region
    $region2: #{tpu_custom_call.1} parent=1 // pred_check
      _
    $region3: #{tpu_custom_call.1} parent=1 // pred_check_branch
      %20 = sbr.rel (0) target = $region5
    $region4: #{tpu_custom_call.1} parent=1 // pred_region
      %s22 = ssub.s32 1024, 1024
      %23 = vsyncadd [#allocation5], %s22
      %s24 = sshll.u32 [#allocation4], 4
      %s25 = int_to_ptr.vmem [resolvable:$true] %s24
      %30 = dma.hbm_to_vmem [thread:$0]  %s0, 1024, %s25, [#allocation5], 128, 128, 8
    $region5: #{tpu_custom_call.1} parent=1 // pred_fallthru
      _
    // Predicated region
    $region6: #{tpu_custom_call.1} parent=1 // pred_check
      _
    $region7: #{tpu_custom_call.1} parent=1 // pred_check_branch
      %32 = sbr.rel (0) target = $region9
    $region8: #{tpu_custom_call.1} parent=1 // pred_region
      %s34 = ssub.s32 8192, 8192
      %35 = vsyncadd [#allocation8], %s34
      %s36 = sshll.u32 [#allocation7], 4
      %s37 = int_to_ptr.vmem [resolvable:$true] %s36
      %42 = dma.hbm_to_vmem [thread:$0]  %s1, 8192, %s37, [#allocation8], 512, 512, 32
    $region9: #{tpu_custom_call.1} parent=1 // pred_fallthru
      _
    // Predicated region
    $region10: #{tpu_custom_call.1} parent=1 // pred_check
      _
    $region11: #{tpu_custom_call.1} parent=1 // pred_check_branch
      %44 = sbr.rel (0) target = $region13
    $region12: #{tpu_custom_call.1} parent=1 // pred_region
      %s46 = ssub.s32 8192, 8192
      %47 = vsyncadd [#allocation8], %s46
      %s48 = sshll.u32 [#allocation9], 4
      %s49 = int_to_ptr.vmem [resolvable:$true] %s48
      %54 = dma.hbm_to_vmem [thread:$0]  %s2, 8192, %s49, [#allocation8], 512, 512, 32
    $region13: #{tpu_custom_call.1} parent=1 // pred_fallthru
      _
    // Predicated region
    $region14: #{tpu_custom_call.1} parent=1 // pred_check
      _
    $region15: #{tpu_custom_call.1} parent=1 // pred_check_branch
      %56 = sbr.rel (0) target = $region17
    $region16: #{tpu_custom_call.1} parent=1 // pred_region
      _
    $region17: #{tpu_custom_call.1} parent=1 // pred_fallthru
      _
    // Predicated region
    $region18: #{tpu_custom_call.1} parent=1 // pred_check
      _
    $region19: #{tpu_custom_call.1} parent=1 // pred_check_branch
      %58 = sbr.rel (0) target = $region21
    $region20: #{tpu_custom_call.1} parent=1 // pred_region
      %s60 = ssub.s32 8192, 8192
      %61 = vsyncadd [#allocation11], %s60
      %s62 = sshll.u32 [#allocation10], 4
      %s63 = int_to_ptr.vmem [resolvable:$true] %s62
      %68 = dma.hbm_to_vmem [thread:$0]  %s4, 8192, %s63, [#allocation11], 512, 512, 32
    $region21: #{tpu_custom_call.1} parent=1 // pred_fallthru
      _
    // Predicated region
    $region22: #{tpu_custom_call.1} parent=1 // pred_check
      _
    $region23: #{tpu_custom_call.1} parent=1 // pred_check_branch
      %70 = sbr.rel (0) target = $region25
    $region24: #{tpu_custom_call.1} parent=1 // pred_region
      %s72 = ssub.s32 8192, 8192
      %73 = vsyncadd [#allocation11], %s72
      %s74 = sshll.u32 [#allocation12], 4
      %s75 = int_to_ptr.vmem [resolvable:$true] %s74
      %80 = dma.hbm_to_vmem [thread:$0]  %s5, 8192, %s75, [#allocation11], 512, 512, 32
    $region25: #{tpu_custom_call.1} parent=1 // pred_fallthru
      _
    // Predicated region
    $region26: #{tpu_custom_call.1} parent=1 // pred_check
      _
    $region27: #{tpu_custom_call.1} parent=1 // pred_check_branch
      %82 = sbr.rel (0) target = $region29
    $region28: #{tpu_custom_call.1} parent=1 // pred_region
      _
    $region29: #{tpu_custom_call.1} parent=1 // pred_fallthru
      _
    // Predicated region
    $region30: #{tpu_custom_call.1} parent=1 // pred_check
      _
    $region31: #{tpu_custom_call.1} parent=1 // pred_check_branch
      %84 = sbr.rel (0) target = $region33
    $region32: #{tpu_custom_call.1} parent=1 // pred_region
      %s86 = ssub.s32 2048, 2048
      %87 = vsyncadd [#allocation14], %s86
      %s88 = sshll.u32 [#allocation13], 4
      %s89 = int_to_ptr.vmem [resolvable:$true] %s88
      %94 = dma.hbm_to_vmem [thread:$0]  %s7, 2048, %s89, [#allocation14], 128, 128, 8
    $region33: #{tpu_custom_call.1} parent=1 // pred_fallthru
      _
    // Predicated region
    $region34: #{tpu_custom_call.1} parent=1 // pred_check
      _
    $region35: #{tpu_custom_call.1} parent=1 // pred_check_branch
      %96 = sbr.rel (0) target = $region37
    $region36: #{tpu_custom_call.1} parent=1 // pred_region
      _
    $region37: #{tpu_custom_call.1} parent=1 // pred_fallthru
      _
    // Predicated region
    $region38: #{tpu_custom_call.1} parent=1 // pred_check
      _
    $region39: #{tpu_custom_call.1} parent=1 // pred_check_branch
      %98 = sbr.rel (0) target = $region41
    $region40: #{tpu_custom_call.1} parent=1 // pred_region
      %99 = dma.done [#allocation5], 1024
    $region41: #{tpu_custom_call.1} parent=1 // pred_fallthru
      _
    // Predicated region
    $region42: #{tpu_custom_call.1} parent=1 // pred_check
      _
    $region43: #{tpu_custom_call.1} parent=1 // pred_check_branch
      %101 = sbr.rel (0) target = $region45
    $region44: #{tpu_custom_call.1} parent=1 // pred_region
      %102 = dma.done [#allocation8], 8192
    $region45: #{tpu_custom_call.1} parent=1 // pred_fallthru
      _
    // Predicated region
    $region46: #{tpu_custom_call.1} parent=1 // pred_check
      _
    $region47: #{tpu_custom_call.1} parent=1 // pred_check_branch
      %104 = sbr.rel (0) target = $region49
    $region48: #{tpu_custom_call.1} parent=1 // pred_region
      %105 = dma.done [#allocation8], 8192
    $region49: #{tpu_custom_call.1} parent=1 // pred_fallthru
      _
    // Predicated region
    $region50: #{tpu_custom_call.1} parent=1 // pred_check
      _
    $region51: #{tpu_custom_call.1} parent=1 // pred_check_branch
      %107 = sbr.rel (0) target = $region53
    $region52: #{tpu_custom_call.1} parent=1 // pred_region
      %108 = dma.done [#allocation11], 8192
    $region53: #{tpu_custom_call.1} parent=1 // pred_fallthru
      _
    // Predicated region
    $region54: #{tpu_custom_call.1} parent=1 // pred_check
      _
    $region55: #{tpu_custom_call.1} parent=1 // pred_check_branch
      %110 = sbr.rel (0) target = $region57
    $region56: #{tpu_custom_call.1} parent=1 // pred_region
      %111 = dma.done [#allocation11], 8192
    $region57: #{tpu_custom_call.1} parent=1 // pred_fallthru
      _
    // Predicated region
    $region58: #{tpu_custom_call.1} parent=1 // pred_check
      _
    $region59: #{tpu_custom_call.1} parent=1 // pred_check_branch
      %113 = sbr.rel (0) target = $region61
    $region60: #{tpu_custom_call.1} parent=1 // pred_region
      %114 = dma.done [#allocation14], 2048
    $region61: #{tpu_custom_call.1} parent=1 // pred_fallthru
      _
    %v115 = vld [vmem:[#allocation7] sm:$0xff]
    %v116 = vld [vmem:[#allocation7 + $0x8] sm:$0xff]
    %v117 = vld [vmem:[#allocation7 + $0x10] sm:$0xff]
    %v118 = vld [vmem:[#allocation7 + $0x18] sm:$0xff]
    %v119 = vld [vmem:[#allocation7 + $0x20] sm:$0xff]
    %v120 = vld [vmem:[#allocation7 + $0x28] sm:$0xff]
    %v121 = vld [vmem:[#allocation7 + $0x30] sm:$0xff]
    %v122 = vld [vmem:[#allocation7 + $0x38] sm:$0xff]
    %v123 = vld [vmem:[#allocation7 + $0x40] sm:$0xff]
    %v124 = vld [vmem:[#allocation7 + $0x48] sm:$0xff]
    %v125 = vld [vmem:[#allocation7 + $0x50] sm:$0xff]
    %v126 = vld [vmem:[#allocation7 + $0x58] sm:$0xff]
    %v127 = vld [vmem:[#allocation7 + $0x60] sm:$0xff]
    %v128 = vld [vmem:[#allocation7 + $0x68] sm:$0xff]
    %v129 = vld [vmem:[#allocation7 + $0x70] sm:$0xff]
    %v130 = vld [vmem:[#allocation7 + $0x78] sm:$0xff]
    %v131 = vld [vmem:[#allocation7 + $0x80] sm:$0xff]
    %v132 = vld [vmem:[#allocation7 + $0x88] sm:$0xff]
    %v133 = vld [vmem:[#allocation7 + $0x90] sm:$0xff]
    %v134 = vld [vmem:[#allocation7 + $0x98] sm:$0xff]
    %v135 = vld [vmem:[#allocation7 + $0xa0] sm:$0xff]
    %v136 = vld [vmem:[#allocation7 + $0xa8] sm:$0xff]
    %v137 = vld [vmem:[#allocation7 + $0xb0] sm:$0xff]
    %v138 = vld [vmem:[#allocation7 + $0xb8] sm:$0xff]
    %v139 = vld [vmem:[#allocation7 + $0xc0] sm:$0xff]
    %v140 = vld [vmem:[#allocation7 + $0xc8] sm:$0xff]
    %v141 = vld [vmem:[#allocation7 + $0xd0] sm:$0xff]
    %v142 = vld [vmem:[#allocation7 + $0xd8] sm:$0xff]
    %v143 = vld [vmem:[#allocation7 + $0xe0] sm:$0xff]
    %v144 = vld [vmem:[#allocation7 + $0xe8] sm:$0xff]
    %v145 = vld [vmem:[#allocation7 + $0xf0] sm:$0xff]
    %v146 = vld [vmem:[#allocation7 + $0xf8] sm:$0xff]
    %v147 = vld [vmem:[#allocation7 + $0x100] sm:$0xff]
    %v148 = vld [vmem:[#allocation7 + $0x108] sm:$0xff]
    %v149 = vld [vmem:[#allocation7 + $0x110] sm:$0xff]
    %v150 = vld [vmem:[#allocation7 + $0x118] sm:$0xff]
    %v151 = vld [vmem:[#allocation7 + $0x120] sm:$0xff]
    %v152 = vld [vmem:[#allocation7 + $0x128] sm:$0xff]
    %v153 = vld [vmem:[#allocation7 + $0x130] sm:$0xff]
    %v154 = vld [vmem:[#allocation7 + $0x138] sm:$0xff]
    %v155 = vld [vmem:[#allocation7 + $0x140] sm:$0xff]
    %v156 = vld [vmem:[#allocation7 + $0x148] sm:$0xff]
    %v157 = vld [vmem:[#allocation7 + $0x150] sm:$0xff]
    %v158 = vld [vmem:[#allocation7 + $0x158] sm:$0xff]
    %v159 = vld [vmem:[#allocation7 + $0x160] sm:$0xff]
    %v160 = vld [vmem:[#allocation7 + $0x168] sm:$0xff]
    %v161 = vld [vmem:[#allocation7 + $0x170] sm:$0xff]
    %v162 = vld [vmem:[#allocation7 + $0x178] sm:$0xff]
    %v163 = vld [vmem:[#allocation7 + $0x180] sm:$0xff]
    %v164 = vld [vmem:[#allocation7 + $0x188] sm:$0xff]
    %v165 = vld [vmem:[#allocation7 + $0x190] sm:$0xff]
    %v166 = vld [vmem:[#allocation7 + $0x198] sm:$0xff]
    %v167 = vld [vmem:[#allocation7 + $0x1a0] sm:$0xff]
    %v168 = vld [vmem:[#allocation7 + $0x1a8] sm:$0xff]
    %v169 = vld [vmem:[#allocation7 + $0x1b0] sm:$0xff]
    %v170 = vld [vmem:[#allocation7 + $0x1b8] sm:$0xff]
    %v171 = vld [vmem:[#allocation7 + $0x1c0] sm:$0xff]
    %v172 = vld [vmem:[#allocation7 + $0x1c8] sm:$0xff]
    %v173 = vld [vmem:[#allocation7 + $0x1d0] sm:$0xff]
    %v174 = vld [vmem:[#allocation7 + $0x1d8] sm:$0xff]
    %v175 = vld [vmem:[#allocation7 + $0x1e0] sm:$0xff]
    %v176 = vld [vmem:[#allocation7 + $0x1e8] sm:$0xff]
    %v177 = vld [vmem:[#allocation7 + $0x1f0] sm:$0xff]
    %v178 = vld [vmem:[#allocation7 + $0x1f8] sm:$0xff]
    %v179 = vld [vmem:[#allocation9] sm:$0xff]
    %v180 = vld [vmem:[#allocation9 + $0x8] sm:$0xff]
    %v181 = vld [vmem:[#allocation9 + $0x10] sm:$0xff]
    %v182 = vld [vmem:[#allocation9 + $0x18] sm:$0xff]
    %v183 = vld [vmem:[#allocation9 + $0x20] sm:$0xff]
    %v184 = vld [vmem:[#allocation9 + $0x28] sm:$0xff]
    %v185 = vld [vmem:[#allocation9 + $0x30] sm:$0xff]
    %v186 = vld [vmem:[#allocation9 + $0x38] sm:$0xff]
    %v187 = vld [vmem:[#allocation9 + $0x40] sm:$0xff]
    %v188 = vld [vmem:[#allocation9 + $0x48] sm:$0xff]
    %v189 = vld [vmem:[#allocation9 + $0x50] sm:$0xff]
    %v190 = vld [vmem:[#allocation9 + $0x58] sm:$0xff]
    %v191 = vld [vmem:[#allocation9 + $0x60] sm:$0xff]
    %v192 = vld [vmem:[#allocation9 + $0x68] sm:$0xff]
    %v193 = vld [vmem:[#allocation9 + $0x70] sm:$0xff]
    %v194 = vld [vmem:[#allocation9 + $0x78] sm:$0xff]
    %v195 = vld [vmem:[#allocation9 + $0x80] sm:$0xff]
    %v196 = vld [vmem:[#allocation9 + $0x88] sm:$0xff]
    %v197 = vld [vmem:[#allocation9 + $0x90] sm:$0xff]
    %v198 = vld [vmem:[#allocation9 + $0x98] sm:$0xff]
    %v199 = vld [vmem:[#allocation9 + $0xa0] sm:$0xff]
    %v200 = vld [vmem:[#allocation9 + $0xa8] sm:$0xff]
    %v201 = vld [vmem:[#allocation9 + $0xb0] sm:$0xff]
    %v202 = vld [vmem:[#allocation9 + $0xb8] sm:$0xff]
    %v203 = vld [vmem:[#allocation9 + $0xc0] sm:$0xff]
    %v204 = vld [vmem:[#allocation9 + $0xc8] sm:$0xff]
    %v205 = vld [vmem:[#allocation9 + $0xd0] sm:$0xff]
    %v206 = vld [vmem:[#allocation9 + $0xd8] sm:$0xff]
    %v207 = vld [vmem:[#allocation9 + $0xe0] sm:$0xff]
    %v208 = vld [vmem:[#allocation9 + $0xe8] sm:$0xff]
    %v209 = vld [vmem:[#allocation9 + $0xf0] sm:$0xff]
    %v210 = vld [vmem:[#allocation9 + $0xf8] sm:$0xff]
    %v211 = vld [vmem:[#allocation9 + $0x100] sm:$0xff]
    %v212 = vld [vmem:[#allocation9 + $0x108] sm:$0xff]
    %v213 = vld [vmem:[#allocation9 + $0x110] sm:$0xff]
    %v214 = vld [vmem:[#allocation9 + $0x118] sm:$0xff]
    %v215 = vld [vmem:[#allocation9 + $0x120] sm:$0xff]
    %v216 = vld [vmem:[#allocation9 + $0x128] sm:$0xff]
    %v217 = vld [vmem:[#allocation9 + $0x130] sm:$0xff]
    %v218 = vld [vmem:[#allocation9 + $0x138] sm:$0xff]
    %v219 = vld [vmem:[#allocation9 + $0x140] sm:$0xff]
    %v220 = vld [vmem:[#allocation9 + $0x148] sm:$0xff]
    %v221 = vld [vmem:[#allocation9 + $0x150] sm:$0xff]
    %v222 = vld [vmem:[#allocation9 + $0x158] sm:$0xff]
    %v223 = vld [vmem:[#allocation9 + $0x160] sm:$0xff]
    %v224 = vld [vmem:[#allocation9 + $0x168] sm:$0xff]
    %v225 = vld [vmem:[#allocation9 + $0x170] sm:$0xff]
    %v226 = vld [vmem:[#allocation9 + $0x178] sm:$0xff]
    %v227 = vld [vmem:[#allocation9 + $0x180] sm:$0xff]
    %v228 = vld [vmem:[#allocation9 + $0x188] sm:$0xff]
    %v229 = vld [vmem:[#allocation9 + $0x190] sm:$0xff]
    %v230 = vld [vmem:[#allocation9 + $0x198] sm:$0xff]
    %v231 = vld [vmem:[#allocation9 + $0x1a0] sm:$0xff]
    %v232 = vld [vmem:[#allocation9 + $0x1a8] sm:$0xff]
    %v233 = vld [vmem:[#allocation9 + $0x1b0] sm:$0xff]
    %v234 = vld [vmem:[#allocation9 + $0x1b8] sm:$0xff]
    %v235 = vld [vmem:[#allocation9 + $0x1c0] sm:$0xff]
    %v236 = vld [vmem:[#allocation9 + $0x1c8] sm:$0xff]
    %v237 = vld [vmem:[#allocation9 + $0x1d0] sm:$0xff]
    %v238 = vld [vmem:[#allocation9 + $0x1d8] sm:$0xff]
    %v239 = vld [vmem:[#allocation9 + $0x1e0] sm:$0xff]
    %v240 = vld [vmem:[#allocation9 + $0x1e8] sm:$0xff]
    %v241 = vld [vmem:[#allocation9 + $0x1f0] sm:$0xff]
    %v242 = vld [vmem:[#allocation9 + $0x1f8] sm:$0xff]
    %v243 = vld [vmem:[%s3] sm:$0xf]
    %v244 = vld [vmem:[#allocation4] sm:$0xff]
    %v245 = vld [vmem:[#allocation4 + $0x8] sm:$0xff]
    %v246 = vld [vmem:[#allocation4 + $0x10] sm:$0xff]
    %v247 = vld [vmem:[#allocation4 + $0x18] sm:$0xff]
    %v248 = vld [vmem:[#allocation4 + $0x20] sm:$0xff]
    %v249 = vld [vmem:[#allocation4 + $0x28] sm:$0xff]
    %v250 = vld [vmem:[#allocation4 + $0x30] sm:$0xff]
    %v251 = vld [vmem:[#allocation4 + $0x38] sm:$0xff]
    %v253 = vlaneseq
    %v254 = vshrl.u32 %v253, 7
    %v255 = vsub.s32 0, %v254
    %v256 = vrot.slane %v243, %v255
    %v257 = vlaneseq
    %v258 = vshrl.u32 %v257, 7
    %v259 = vsub.s32 1, %v258
    %v260 = vrot.slane %v243, %v259
    %v261 = vlaneseq
    %v262 = vshrl.u32 %v261, 7
    %v263 = vsub.s32 2, %v262
    %v264 = vrot.slane %v243, %v263
    %v265 = vlaneseq
    %v266 = vshrl.u32 %v265, 7
    %v267 = vsub.s32 3, %v266
    %v268 = vrot.slane %v243, %v267
    %273 = vmatprep.subr.mxu0 %v116
    %274 = vmatpush1.msra.mxu0 %v115
    %275 = vmatprep.subr.mxu0 %v120
    %276 = vmatpush1.msra.mxu0 %v119
    %277 = vmatprep.subr.mxu0 %v124
    %278 = vmatpush1.msra.mxu0 %v123
    %279 = vmatprep.subr.mxu0 %v128
    %280 = vmatpush1.msra.mxu0 %v127
    %281 = vmatprep.subr.mxu0 %v132
    %282 = vmatpush1.msra.mxu0 %v131
    %283 = vmatprep.subr.mxu0 %v136
    %284 = vmatpush1.msra.mxu0 %v135
    %285 = vmatprep.subr.mxu0 %v140
    %286 = vmatpush1.msra.mxu0 %v139
    %287 = vmatprep.subr.mxu0 %v144
    %288 = vmatpush1.msra.mxu0 %v143
    %289 = vmatprep.subr.mxu0 %v148
    %290 = vmatpush1.msra.mxu0 %v147
    %291 = vmatprep.subr.mxu0 %v152
    %292 = vmatpush1.msra.mxu0 %v151
    %293 = vmatprep.subr.mxu0 %v156
    %294 = vmatpush1.msra.mxu0 %v155
    %295 = vmatprep.subr.mxu0 %v160
    %296 = vmatpush1.msra.mxu0 %v159
    %297 = vmatprep.subr.mxu0 %v164
    %298 = vmatpush1.msra.mxu0 %v163
    %299 = vmatprep.subr.mxu0 %v168
    %300 = vmatpush1.msra.mxu0 %v167
    %301 = vmatprep.subr.mxu0 %v172
    %302 = vmatpush1.msra.mxu0 %v171
    %303 = vmatprep.subr.mxu0 %v176
    %304 = vmatpush1.msra.mxu0 %v175
    %305 = vmatprep.subr.mxu0 0.0
    %306 = vmatpush1.msra.mxu0 0.0
    %307 = vmatprep.subr.mxu0 0.0
    %308 = vmatpush1.msra.mxu0 0.0
    %309 = vmatprep.subr.mxu0 0.0
    %310 = vmatpush1.msra.mxu0 0.0
    %311 = vmatprep.subr.mxu0 0.0
    %312 = vmatpush1.msra.mxu0 0.0
    %313 = vmatprep.subr.mxu0 0.0
    %314 = vmatpush1.msra.mxu0 0.0
    %315 = vmatprep.subr.mxu0 0.0
    %316 = vmatpush1.msra.mxu0 0.0
    %317 = vmatprep.subr.mxu0 0.0
    %318 = vmatpush1.msra.mxu0 0.0
    %319 = vmatprep.subr.mxu0 0.0
    %320 = vmatpush1.msra.mxu0 0.0
    %321 = vmatprep.subr.mxu0 0.0
    %322 = vmatpush1.msra.mxu0 0.0
    %323 = vmatprep.subr.mxu0 0.0
    %324 = vmatpush1.msra.mxu0 0.0
    %325 = vmatprep.subr.mxu0 0.0
    %326 = vmatpush1.msra.mxu0 0.0
    %327 = vmatprep.subr.mxu0 0.0
    %328 = vmatpush1.msra.mxu0 0.0
    %329 = vmatprep.subr.mxu0 0.0
    %330 = vmatpush1.msra.mxu0 0.0
    %331 = vmatprep.subr.mxu0 0.0
    %332 = vmatpush1.msra.mxu0 0.0
    %333 = vmatprep.subr.mxu0 0.0
    %334 = vmatpush1.msra.mxu0 0.0
    %335 = vmatprep.subr.mxu0 0.0
    %336 = vmatpush1.msra.mxu0 0.0
    %337 = vmatprep.mubr.f32.mxu0 0.0
    %338 = vmatmul.mubr.f32.gmra.mrb[0].mxu0 %v244
    %v339 = vpop.f32.mrb[0].mxu0
    %v340 = vadd.f32 %v256, %v339
    %v341 = vpop.f32.mrb[0].mxu0
    %v342 = vadd.f32 %v260, %v341
    %343 = vmatprep.mubr.f32.mxu0 0.0
    %344 = vmatmul.mubr.f32.gmra.mrb[0].mxu0 %v245
    %v345 = vpop.f32.mrb[0].mxu0
    %v346 = vadd.f32 %v256, %v345
    %v347 = vpop.f32.mrb[0].mxu0
    %v348 = vadd.f32 %v260, %v347
    %349 = vmatprep.mubr.f32.mxu0 0.0
    %350 = vmatmul.mubr.f32.gmra.mrb[0].mxu0 %v246
    %v351 = vpop.f32.mrb[0].mxu0
    %v352 = vadd.f32 %v256, %v351
    %v353 = vpop.f32.mrb[0].mxu0
    %v354 = vadd.f32 %v260, %v353
    %355 = vmatprep.mubr.f32.mxu0 0.0
    %356 = vmatmul.mubr.f32.gmra.mrb[0].mxu0 %v247
    %v357 = vpop.f32.mrb[0].mxu0
    %v358 = vadd.f32 %v256, %v357
    %v359 = vpop.f32.mrb[0].mxu0
    %v360 = vadd.f32 %v260, %v359
    %361 = vmatprep.mubr.f32.mxu0 0.0
    %362 = vmatmul.mubr.f32.gmra.mrb[0].mxu0 %v248
    %v363 = vpop.f32.mrb[0].mxu0
    %v364 = vadd.f32 %v256, %v363
    %v365 = vpop.f32.mrb[0].mxu0
    %v366 = vadd.f32 %v260, %v365
    %367 = vmatprep.mubr.f32.mxu0 0.0
    %368 = vmatmul.mubr.f32.gmra.mrb[0].mxu0 %v249
    %v369 = vpop.f32.mrb[0].mxu0
    %v370 = vadd.f32 %v256, %v369
    %v371 = vpop.f32.mrb[0].mxu0
    %v372 = vadd.f32 %v260, %v371
    %373 = vmatprep.mubr.f32.mxu0 0.0
    %374 = vmatmul.mubr.f32.gmra.mrb[0].mxu0 %v250
    %v375 = vpop.f32.mrb[0].mxu0
    %v376 = vadd.f32 %v256, %v375
    %v377 = vpop.f32.mrb[0].mxu0
    %v378 = vadd.f32 %v260, %v377
    %379 = vmatprep.mubr.f32.mxu0 0.0
    %380 = vmatmul.mubr.f32.gmra.mrb[0].mxu0 %v251
    %v381 = vpop.f32.mrb[0].mxu0
    %v382 = vadd.f32 %v256, %v381
    %v383 = vpop.f32.mrb[0].mxu0
    %v384 = vadd.f32 %v260, %v383
    %385 = vdwg.mxu0
    %386 = vmatprep.subr.mxu0 %v118
    %387 = vmatpush1.msra.mxu0 %v117
    %388 = vmatprep.subr.mxu0 %v122
    %389 = vmatpush1.msra.mxu0 %v121
    %390 = vmatprep.subr.mxu0 %v126
    %391 = vmatpush1.msra.mxu0 %v125
    %392 = vmatprep.subr.mxu0 %v130
    %393 = vmatpush1.msra.mxu0 %v129
    %394 = vmatprep.subr.mxu0 %v134
    %395 = vmatpush1.msra.mxu0 %v133
    %396 = vmatprep.subr.mxu0 %v138
    %397 = vmatpush1.msra.mxu0 %v137
    %398 = vmatprep.subr.mxu0 %v142
    %399 = vmatpush1.msra.mxu0 %v141
    %400 = vmatprep.subr.mxu0 %v146
    %401 = vmatpush1.msra.mxu0 %v145
    %402 = vmatprep.subr.mxu0 %v150
    %403 = vmatpush1.msra.mxu0 %v149
    %404 = vmatprep.subr.mxu0 %v154
    %405 = vmatpush1.msra.mxu0 %v153
    %406 = vmatprep.subr.mxu0 %v158
    %407 = vmatpush1.msra.mxu0 %v157
    %408 = vmatprep.subr.mxu0 %v162
    %409 = vmatpush1.msra.mxu0 %v161
    %410 = vmatprep.subr.mxu0 %v166
    %411 = vmatpush1.msra.mxu0 %v165
    %412 = vmatprep.subr.mxu0 %v170
    %413 = vmatpush1.msra.mxu0 %v169
    %414 = vmatprep.subr.mxu0 %v174
    %415 = vmatpush1.msra.mxu0 %v173
    %416 = vmatprep.subr.mxu0 %v178
    %417 = vmatpush1.msra.mxu0 %v177
    %418 = vmatprep.subr.mxu0 0.0
    %419 = vmatpush1.msra.mxu0 0.0
    %420 = vmatprep.subr.mxu0 0.0
    %421 = vmatpush1.msra.mxu0 0.0
    %422 = vmatprep.subr.mxu0 0.0
    %423 = vmatpush1.msra.mxu0 0.0
    %424 = vmatprep.subr.mxu0 0.0
    %425 = vmatpush1.msra.mxu0 0.0
    %426 = vmatprep.subr.mxu0 0.0
    %427 = vmatpush1.msra.mxu0 0.0
    %428 = vmatprep.subr.mxu0 0.0
    %429 = vmatpush1.msra.mxu0 0.0
    %430 = vmatprep.subr.mxu0 0.0
    %431 = vmatpush1.msra.mxu0 0.0
    %432 = vmatprep.subr.mxu0 0.0
    %433 = vmatpush1.msra.mxu0 0.0
    %434 = vmatprep.subr.mxu0 0.0
    %435 = vmatpush1.msra.mxu0 0.0
    %436 = vmatprep.subr.mxu0 0.0
    %437 = vmatpush1.msra.mxu0 0.0
    %438 = vmatprep.subr.mxu0 0.0
    %439 = vmatpush1.msra.mxu0 0.0
    %440 = vmatprep.subr.mxu0 0.0
    %441 = vmatpush1.msra.mxu0 0.0
    %442 = vmatprep.subr.mxu0 0.0
    %443 = vmatpush1.msra.mxu0 0.0
    %444 = vmatprep.subr.mxu0 0.0
    %445 = vmatpush1.msra.mxu0 0.0
    %446 = vmatprep.subr.mxu0 0.0
    %447 = vmatpush1.msra.mxu0 0.0
    %448 = vmatprep.subr.mxu0 0.0
    %449 = vmatpush1.msra.mxu0 0.0
    %450 = vmatprep.mubr.f32.mxu0 0.0
    %451 = vmatmul.mubr.f32.gmra.mrb[0].mxu0 %v244
    %v452 = vpop.f32.mrb[0].mxu0
    %v453 = vadd.f32 %v264, %v452
    %v454 = vpop.f32.mrb[0].mxu0
    %v455 = vadd.f32 %v268, %v454
    %456 = vmatprep.mubr.f32.mxu0 0.0
    %457 = vmatmul.mubr.f32.gmra.mrb[0].mxu0 %v245
    %v458 = vpop.f32.mrb[0].mxu0
    %v459 = vadd.f32 %v264, %v458
    %v460 = vpop.f32.mrb[0].mxu0
    %v461 = vadd.f32 %v268, %v460
    %462 = vmatprep.mubr.f32.mxu0 0.0
    %463 = vmatmul.mubr.f32.gmra.mrb[0].mxu0 %v246
    %v464 = vpop.f32.mrb[0].mxu0
    %v465 = vadd.f32 %v264, %v464
    %v466 = vpop.f32.mrb[0].mxu0
    %v467 = vadd.f32 %v268, %v466
    %468 = vmatprep.mubr.f32.mxu0 0.0
    %469 = vmatmul.mubr.f32.gmra.mrb[0].mxu0 %v247
    %v470 = vpop.f32.mrb[0].mxu0
    %v471 = vadd.f32 %v264, %v470
    %v472 = vpop.f32.mrb[0].mxu0
    %v473 = vadd.f32 %v268, %v472
    %474 = vmatprep.mubr.f32.mxu0 0.0
    %475 = vmatmul.mubr.f32.gmra.mrb[0].mxu0 %v248
    %v476 = vpop.f32.mrb[0].mxu0
    %v477 = vadd.f32 %v264, %v476
    %v478 = vpop.f32.mrb[0].mxu0
    %v479 = vadd.f32 %v268, %v478
    %480 = vmatprep.mubr.f32.mxu0 0.0
    %481 = vmatmul.mubr.f32.gmra.mrb[0].mxu0 %v249
    %v482 = vpop.f32.mrb[0].mxu0
    %v483 = vadd.f32 %v264, %v482
    %v484 = vpop.f32.mrb[0].mxu0
    %v485 = vadd.f32 %v268, %v484
    %486 = vmatprep.mubr.f32.mxu0 0.0
    %487 = vmatmul.mubr.f32.gmra.mrb[0].mxu0 %v250
    %v488 = vpop.f32.mrb[0].mxu0
    %v489 = vadd.f32 %v264, %v488
    %v490 = vpop.f32.mrb[0].mxu0
    %v491 = vadd.f32 %v268, %v490
    %492 = vmatprep.mubr.f32.mxu0 0.0
    %493 = vmatmul.mubr.f32.gmra.mrb[0].mxu0 %v251
    %v494 = vpop.f32.mrb[0].mxu0
    %v495 = vadd.f32 %v264, %v494
    %v496 = vpop.f32.mrb[0].mxu0
    %v497 = vadd.f32 %v268, %v496
    %498 = vdwg.mxu0
    %499 = vst [vmem:[#allocation2] sm:$0xff] %v340
    %500 = vst [vmem:[#allocation2 + $0x8] sm:$0xff] %v342
    %501 = vst [vmem:[#allocation2 + $0x10] sm:$0xff] %v453
    %502 = vst [vmem:[#allocation2 + $0x18] sm:$0xff] %v455
    %503 = vst [vmem:[#allocation2 + $0x20] sm:$0xff] %v346
    %504 = vst [vmem:[#allocation2 + $0x28] sm:$0xff] %v348
    %505 = vst [vmem:[#allocation2 + $0x30] sm:$0xff] %v459
    %506 = vst [vmem:[#allocation2 + $0x38] sm:$0xff] %v461
    %507 = vst [vmem:[#allocation2 + $0x40] sm:$0xff] %v352
    %508 = vst [vmem:[#allocation2 + $0x48] sm:$0xff] %v354
    %509 = vst [vmem:[#allocation2 + $0x50] sm:$0xff] %v465
    %510 = vst [vmem:[#allocation2 + $0x58] sm:$0xff] %v467
    %511 = vst [vmem:[#allocation2 + $0x60] sm:$0xff] %v358
    %512 = vst [vmem:[#allocation2 + $0x68] sm:$0xff] %v360
    %513 = vst [vmem:[#allocation2 + $0x70] sm:$0xff] %v471
    %514 = vst [vmem:[#allocation2 + $0x78] sm:$0xff] %v473
    %515 = vst [vmem:[#allocation2 + $0x80] sm:$0xff] %v364
    %516 = vst [vmem:[#allocation2 + $0x88] sm:$0xff] %v366
    %517 = vst [vmem:[#allocation2 + $0x90] sm:$0xff] %v477
    %518 = vst [vmem:[#allocation2 + $0x98] sm:$0xff] %v479
    %519 = vst [vmem:[#allocation2 + $0xa0] sm:$0xff] %v370
    %520 = vst [vmem:[#allocation2 + $0xa8] sm:$0xff] %v372
    %521 = vst [vmem:[#allocation2 + $0xb0] sm:$0xff] %v483
    %522 = vst [vmem:[#allocation2 + $0xb8] sm:$0xff] %v485
    %523 = vst [vmem:[#allocation2 + $0xc0] sm:$0xff] %v376
    %524 = vst [vmem:[#allocation2 + $0xc8] sm:$0xff] %v378
    %525 = vst [vmem:[#allocation2 + $0xd0] sm:$0xff] %v489
    %526 = vst [vmem:[#allocation2 + $0xd8] sm:$0xff] %v491
    %527 = vst [vmem:[#allocation2 + $0xe0] sm:$0xff] %v382
    %528 = vst [vmem:[#allocation2 + $0xe8] sm:$0xff] %v384
    %529 = vst [vmem:[#allocation2 + $0xf0] sm:$0xff] %v495
    %530 = vst [vmem:[#allocation2 + $0xf8] sm:$0xff] %v497
    %v531 = vld [vmem:[#allocation2] sm:$0xff]
    %v532 = vld [vmem:[#allocation2 + $0x8] sm:$0xff]
    %v533 = vld [vmem:[#allocation2 + $0x10] sm:$0xff]
    %v534 = vld [vmem:[#allocation2 + $0x18] sm:$0xff]
    %535 = vmatprep.subr.mxu0 %v180
    %536 = vmatpush1.msra.mxu0 %v179
    %537 = vmatprep.subr.mxu0 %v184
    %538 = vmatpush1.msra.mxu0 %v183
    %539 = vmatprep.subr.mxu0 %v188
    %540 = vmatpush1.msra.mxu0 %v187
    %541 = vmatprep.subr.mxu0 %v192
    %542 = vmatpush1.msra.mxu0 %v191
    %543 = vmatprep.subr.mxu0 %v196
    %544 = vmatpush1.msra.mxu0 %v195
    %545 = vmatprep.subr.mxu0 %v200
    %546 = vmatpush1.msra.mxu0 %v199
    %547 = vmatprep.subr.mxu0 %v204
    %548 = vmatpush1.msra.mxu0 %v203
    %549 = vmatprep.subr.mxu0 %v208
    %550 = vmatpush1.msra.mxu0 %v207
    %551 = vmatprep.subr.mxu0 %v212
    %552 = vmatpush1.msra.mxu0 %v211
    %553 = vmatprep.subr.mxu0 %v216
    %554 = vmatpush1.msra.mxu0 %v215
    %555 = vmatprep.subr.mxu0 %v220
    %556 = vmatpush1.msra.mxu0 %v219
    %557 = vmatprep.subr.mxu0 %v224
    %558 = vmatpush1.msra.mxu0 %v223
    %559 = vmatprep.subr.mxu0 %v228
    %560 = vmatpush1.msra.mxu0 %v227
    %561 = vmatprep.subr.mxu0 %v232
    %562 = vmatpush1.msra.mxu0 %v231
    %563 = vmatprep.subr.mxu0 %v236
    %564 = vmatpush1.msra.mxu0 %v235
    %565 = vmatprep.subr.mxu0 %v240
    %566 = vmatpush1.msra.mxu0 %v239
    %567 = vmatprep.subr.mxu0 0.0
    %568 = vmatpush1.msra.mxu0 0.0
    %569 = vmatprep.subr.mxu0 0.0
    %570 = vmatpush1.msra.mxu0 0.0
    %571 = vmatprep.subr.mxu0 0.0
    %572 = vmatpush1.msra.mxu0 0.0
    %573 = vmatprep.subr.mxu0 0.0
    %574 = vmatpush1.msra.mxu0 0.0
    %575 = vmatprep.subr.mxu0 0.0
    %576 = vmatpush1.msra.mxu0 0.0
    %577 = vmatprep.subr.mxu0 0.0
    %578 = vmatpush1.msra.mxu0 0.0
    %579 = vmatprep.subr.mxu0 0.0
    %580 = vmatpush1.msra.mxu0 0.0
    %581 = vmatprep.subr.mxu0 0.0
    %582 = vmatpush1.msra.mxu0 0.0
    %583 = vmatprep.subr.mxu0 0.0
    %584 = vmatpush1.msra.mxu0 0.0
    %585 = vmatprep.subr.mxu0 0.0
    %586 = vmatpush1.msra.mxu0 0.0
    %587 = vmatprep.subr.mxu0 0.0
    %588 = vmatpush1.msra.mxu0 0.0
    %589 = vmatprep.subr.mxu0 0.0
    %590 = vmatpush1.msra.mxu0 0.0
    %591 = vmatprep.subr.mxu0 0.0
    %592 = vmatpush1.msra.mxu0 0.0
    %593 = vmatprep.subr.mxu0 0.0
    %594 = vmatpush1.msra.mxu0 0.0
    %595 = vmatprep.subr.mxu0 0.0
    %596 = vmatpush1.msra.mxu0 0.0
    %597 = vmatprep.subr.mxu0 0.0
    %598 = vmatpush1.msra.mxu0 0.0
    %599 = vmatprep.mubr.f32.mxu0 0.0
    %600 = vmatmul.mubr.f32.gmra.mrb[0].mxu0 0.0
    %v601 = vpop.f32.mrb[0].mxu0
    %v602 = vadd.f32 0.0, %v601
    %v603 = vpop.f32.mrb[0].mxu0
    %v604 = vadd.f32 0.0, %v603
    %605 = vdwg.mxu0
    %606 = vmatprep.subr.mxu0 %v182
    %607 = vmatpush1.msra.mxu0 %v181
    %608 = vmatprep.subr.mxu0 %v186
    %609 = vmatpush1.msra.mxu0 %v185
    %610 = vmatprep.subr.mxu0 %v190
    %611 = vmatpush1.msra.mxu0 %v189
    %612 = vmatprep.subr.mxu0 %v194
    %613 = vmatpush1.msra.mxu0 %v193
    %614 = vmatprep.subr.mxu0 %v198
    %615 = vmatpush1.msra.mxu0 %v197
    %616 = vmatprep.subr.mxu0 %v202
    %617 = vmatpush1.msra.mxu0 %v201
    %618 = vmatprep.subr.mxu0 %v206
    %619 = vmatpush1.msra.mxu0 %v205
    %620 = vmatprep.subr.mxu0 %v210
    %621 = vmatpush1.msra.mxu0 %v209
    %622 = vmatprep.subr.mxu0 %v214
    %623 = vmatpush1.msra.mxu0 %v213
    %624 = vmatprep.subr.mxu0 %v218
    %625 = vmatpush1.msra.mxu0 %v217
    %626 = vmatprep.subr.mxu0 %v222
    %627 = vmatpush1.msra.mxu0 %v221
    %628 = vmatprep.subr.mxu0 %v226
    %629 = vmatpush1.msra.mxu0 %v225
    %630 = vmatprep.subr.mxu0 %v230
    %631 = vmatpush1.msra.mxu0 %v229
    %632 = vmatprep.subr.mxu0 %v234
    %633 = vmatpush1.msra.mxu0 %v233
    %634 = vmatprep.subr.mxu0 %v238
    %635 = vmatpush1.msra.mxu0 %v237
    %636 = vmatprep.subr.mxu0 %v242
    %637 = vmatpush1.msra.mxu0 %v241
    %638 = vmatprep.subr.mxu0 0.0
    %639 = vmatpush1.msra.mxu0 0.0
    %640 = vmatprep.subr.mxu0 0.0
    %641 = vmatpush1.msra.mxu0 0.0
    %642 = vmatprep.subr.mxu0 0.0
    %643 = vmatpush1.msra.mxu0 0.0
    %644 = vmatprep.subr.mxu0 0.0
    %645 = vmatpush1.msra.mxu0 0.0
    %646 = vmatprep.subr.mxu0 0.0
    %647 = vmatpush1.msra.mxu0 0.0
    %648 = vmatprep.subr.mxu0 0.0
    %649 = vmatpush1.msra.mxu0 0.0
    %650 = vmatprep.subr.mxu0 0.0
    %651 = vmatpush1.msra.mxu0 0.0
    %652 = vmatprep.subr.mxu0 0.0
    %653 = vmatpush1.msra.mxu0 0.0
    %654 = vmatprep.subr.mxu0 0.0
    %655 = vmatpush1.msra.mxu0 0.0
    %656 = vmatprep.subr.mxu0 0.0
    %657 = vmatpush1.msra.mxu0 0.0
    %658 = vmatprep.subr.mxu0 0.0
    %659 = vmatpush1.msra.mxu0 0.0
    %660 = vmatprep.subr.mxu0 0.0
    %661 = vmatpush1.msra.mxu0 0.0
    %662 = vmatprep.subr.mxu0 0.0
    %663 = vmatpush1.msra.mxu0 0.0
    %664 = vmatprep.subr.mxu0 0.0
    %665 = vmatpush1.msra.mxu0 0.0
    %666 = vmatprep.subr.mxu0 0.0
    %667 = vmatpush1.msra.mxu0 0.0
    %668 = vmatprep.subr.mxu0 0.0
    %669 = vmatpush1.msra.mxu0 0.0
    %670 = vmatprep.mubr.f32.mxu0 0.0
    %671 = vmatmul.mubr.f32.gmra.mrb[0].mxu0 0.0
    %v672 = vpop.f32.mrb[0].mxu0
    %v673 = vadd.f32 0.0, %v672
    %v674 = vpop.f32.mrb[0].mxu0
    %v675 = vadd.f32 0.0, %v674
    %676 = vdwg.mxu0
    %v677 = vadd.f32 %v531, %v602
    %v678 = vadd.f32 %v532, %v604
    %v679 = vadd.f32 %v533, %v673
    %v680 = vadd.f32 %v534, %v675
    %v681 = vxor.u32 %v677, 2147483648
    %v682 = vmul.f32 %v681, 1.442695
    %v683 = vpow.pop %v682
    %v684 = vadd.f32 %v683, 1.0
    %v685 = vrcp.pop %v684
    %v686 = vmul.f32 1.0, %v685
    %v687 = vxor.u32 %v678, 2147483648
    %v688 = vmul.f32 %v687, 1.442695
    %v689 = vpow.pop %v688
    %v690 = vadd.f32 %v689, 1.0
    %v691 = vrcp.pop %v690
    %v692 = vmul.f32 1.0, %v691
    %v693 = vtanh.pop %v679
    %v694 = vxor.u32 %v680, 2147483648
    %v695 = vmul.f32 %v694, 1.442695
    %v696 = vpow.pop %v695
    %v697 = vadd.f32 %v696, 1.0
    %v698 = vrcp.pop %v697
    %v699 = vmul.f32 1.0, %v698
    %v700 = vmul.f32 %v692, 0.0
    %v701 = vmul.f32 %v686, %v693
    %v702 = vadd.f32 %v700, %v701
    %v703 = vtanh.pop %v702
    %v704 = vmul.f32 %v699, %v703
    %705 = vst [vmem:[#allocation3] sm:$0xff] %v704
    %s706 = scalar_lea.vmem [#allocation2], 32
    %v707 = vld [vmem:[%s706] sm:$0xff]
    %v708 = vld [vmem:[%s706 + $0x8] sm:$0xff]
    %v709 = vld [vmem:[%s706 + $0x10] sm:$0xff]
    %v710 = vld [vmem:[%s706 + $0x18] sm:$0xff]
    %711 = vmatprep.subr.mxu0 %v180
    %712 = vmatpush1.msra.mxu0 %v179
    %713 = vmatprep.subr.mxu0 %v184
    %714 = vmatpush1.msra.mxu0 %v183
    %715 = vmatprep.subr.mxu0 %v188
    %716 = vmatpush1.msra.mxu0 %v187
    %717 = vmatprep.subr.mxu0 %v192
    %718 = vmatpush1.msra.mxu0 %v191
    %719 = vmatprep.subr.mxu0 %v196
    %720 = vmatpush1.msra.mxu0 %v195
    %721 = vmatprep.subr.mxu0 %v200
    %722 = vmatpush1.msra.mxu0 %v199
    %723 = vmatprep.subr.mxu0 %v204
    %724 = vmatpush1.msra.mxu0 %v203
    %725 = vmatprep.subr.mxu0 %v208
    %726 = vmatpush1.msra.mxu0 %v207
    %727 = vmatprep.subr.mxu0 %v212
    %728 = vmatpush1.msra.mxu0 %v211
    %729 = vmatprep.subr.mxu0 %v216
    %730 = vmatpush1.msra.mxu0 %v215
    %731 = vmatprep.subr.mxu0 %v220
    %732 = vmatpush1.msra.mxu0 %v219
    %733 = vmatprep.subr.mxu0 %v224
    %734 = vmatpush1.msra.mxu0 %v223
    %735 = vmatprep.subr.mxu0 %v228
    %736 = vmatpush1.msra.mxu0 %v227
    %737 = vmatprep.subr.mxu0 %v232
    %738 = vmatpush1.msra.mxu0 %v231
    %739 = vmatprep.subr.mxu0 %v236
    %740 = vmatpush1.msra.mxu0 %v235
    %741 = vmatprep.subr.mxu0 %v240
    %742 = vmatpush1.msra.mxu0 %v239
    %743 = vmatprep.subr.mxu0 0.0
    %744 = vmatpush1.msra.mxu0 0.0
    %745 = vmatprep.subr.mxu0 0.0
    %746 = vmatpush1.msra.mxu0 0.0
    %747 = vmatprep.subr.mxu0 0.0
    %748 = vmatpush1.msra.mxu0 0.0
    %749 = vmatprep.subr.mxu0 0.0
    %750 = vmatpush1.msra.mxu0 0.0
    %751 = vmatprep.subr.mxu0 0.0
    %752 = vmatpush1.msra.mxu0 0.0
    %753 = vmatprep.subr.mxu0 0.0
    %754 = vmatpush1.msra.mxu0 0.0
    %755 = vmatprep.subr.mxu0 0.0
    %756 = vmatpush1.msra.mxu0 0.0
    %757 = vmatprep.subr.mxu0 0.0
    %758 = vmatpush1.msra.mxu0 0.0
    %759 = vmatprep.subr.mxu0 0.0
    %760 = vmatpush1.msra.mxu0 0.0
    %761 = vmatprep.subr.mxu0 0.0
    %762 = vmatpush1.msra.mxu0 0.0
    %763 = vmatprep.subr.mxu0 0.0
    %764 = vmatpush1.msra.mxu0 0.0
    %765 = vmatprep.subr.mxu0 0.0
    %766 = vmatpush1.msra.mxu0 0.0
    %767 = vmatprep.subr.mxu0 0.0
    %768 = vmatpush1.msra.mxu0 0.0
    %769 = vmatprep.subr.mxu0 0.0
    %770 = vmatpush1.msra.mxu0 0.0
    %771 = vmatprep.subr.mxu0 0.0
    %772 = vmatpush1.msra.mxu0 0.0
    %773 = vmatprep.subr.mxu0 0.0
    %774 = vmatpush1.msra.mxu0 0.0
    %775 = vmatprep.mubr.f32.mxu0 0.0
    %776 = vmatmul.mubr.f32.gmra.mrb[0].mxu0 %v704
    %v777 = vpop.f32.mrb[0].mxu0
    %v778 = vadd.f32 0.0, %v777
    %v779 = vpop.f32.mrb[0].mxu0
    %v780 = vadd.f32 0.0, %v779
    %781 = vdwg.mxu0
    %782 = vmatprep.subr.mxu0 %v182
    %783 = vmatpush1.msra.mxu0 %v181
    %784 = vmatprep.subr.mxu0 %v186
    %785 = vmatpush1.msra.mxu0 %v185
    %786 = vmatprep.subr.mxu0 %v190
    %787 = vmatpush1.msra.mxu0 %v189
    %788 = vmatprep.subr.mxu0 %v194
    %789 = vmatpush1.msra.mxu0 %v193
    %790 = vmatprep.subr.mxu0 %v198
    %791 = vmatpush1.msra.mxu0 %v197
    %792 = vmatprep.subr.mxu0 %v202
    %793 = vmatpush1.msra.mxu0 %v201
    %794 = vmatprep.subr.mxu0 %v206
    %795 = vmatpush1.msra.mxu0 %v205
    %796 = vmatprep.subr.mxu0 %v210
    %797 = vmatpush1.msra.mxu0 %v209
    %798 = vmatprep.subr.mxu0 %v214
    %799 = vmatpush1.msra.mxu0 %v213
    %800 = vmatprep.subr.mxu0 %v218
    %801 = vmatpush1.msra.mxu0 %v217
    %802 = vmatprep.subr.mxu0 %v222
    %803 = vmatpush1.msra.mxu0 %v221
    %804 = vmatprep.subr.mxu0 %v226
    %805 = vmatpush1.msra.mxu0 %v225
    %806 = vmatprep.subr.mxu0 %v230
    %807 = vmatpush1.msra.mxu0 %v229
    %808 = vmatprep.subr.mxu0 %v234
    %809 = vmatpush1.msra.mxu0 %v233
    %810 = vmatprep.subr.mxu0 %v238
    %811 = vmatpush1.msra.mxu0 %v237
    %812 = vmatprep.subr.mxu0 %v242
    %813 = vmatpush1.msra.mxu0 %v241
    %814 = vmatprep.subr.mxu0 0.0
    %815 = vmatpush1.msra.mxu0 0.0
    %816 = vmatprep.subr.mxu0 0.0
    %817 = vmatpush1.msra.mxu0 0.0
    %818 = vmatprep.subr.mxu0 0.0
    %819 = vmatpush1.msra.mxu0 0.0
    %820 = vmatprep.subr.mxu0 0.0
    %821 = vmatpush1.msra.mxu0 0.0
    %822 = vmatprep.subr.mxu0 0.0
    %823 = vmatpush1.msra.mxu0 0.0
    %824 = vmatprep.subr.mxu0 0.0
    %825 = vmatpush1.msra.mxu0 0.0
    %826 = vmatprep.subr.mxu0 0.0
    %827 = vmatpush1.msra.mxu0 0.0
    %828 = vmatprep.subr.mxu0 0.0
    %829 = vmatpush1.msra.mxu0 0.0
    %830 = vmatprep.subr.mxu0 0.0
    %831 = vmatpush1.msra.mxu0 0.0
    %832 = vmatprep.subr.mxu0 0.0
    %833 = vmatpush1.msra.mxu0 0.0
    %834 = vmatprep.subr.mxu0 0.0
    %835 = vmatpush1.msra.mxu0 0.0
    %836 = vmatprep.subr.mxu0 0.0
    %837 = vmatpush1.msra.mxu0 0.0
    %838 = vmatprep.subr.mxu0 0.0
    %839 = vmatpush1.msra.mxu0 0.0
    %840 = vmatprep.subr.mxu0 0.0
    %841 = vmatpush1.msra.mxu0 0.0
    %842 = vmatprep.subr.mxu0 0.0
    %843 = vmatpush1.msra.mxu0 0.0
    %844 = vmatprep.subr.mxu0 0.0
    %845 = vmatpush1.msra.mxu0 0.0
    %846 = vmatprep.mubr.f32.mxu0 0.0
    %847 = vmatmul.mubr.f32.gmra.mrb[0].mxu0 %v704
    %v848 = vpop.f32.mrb[0].mxu0
    %v849 = vadd.f32 0.0, %v848
    %v850 = vpop.f32.mrb[0].mxu0
    %v851 = vadd.f32 0.0, %v850
    %852 = vdwg.mxu0
    %v853 = vadd.f32 %v707, %v778
    %v854 = vadd.f32 %v708, %v780
    %v855 = vadd.f32 %v709, %v849
    %v856 = vadd.f32 %v710, %v851
    %v857 = vxor.u32 %v853, 2147483648
    %v858 = vmul.f32 %v857, 1.442695
    %v859 = vpow.pop %v858
    %v860 = vadd.f32 %v859, 1.0
    %v861 = vrcp.pop %v860
    %v862 = vmul.f32 1.0, %v861
    %v863 = vxor.u32 %v854, 2147483648
    %v864 = vmul.f32 %v863, 1.442695
    %v865 = vpow.pop %v864
    %v866 = vadd.f32 %v865, 1.0
    %v867 = vrcp.pop %v866
    %v868 = vmul.f32 1.0, %v867
    %v869 = vtanh.pop %v855
    %v870 = vxor.u32 %v856, 2147483648
    %v871 = vmul.f32 %v870, 1.442695
    %v872 = vpow.pop %v871
    %v873 = vadd.f32 %v872, 1.0
    %v874 = vrcp.pop %v873
    %v875 = vmul.f32 1.0, %v874
    %v876 = vmul.f32 %v868, %v702
    %v877 = vmul.f32 %v862, %v869
    %v878 = vadd.f32 %v876, %v877
    %v879 = vtanh.pop %v878
    %v880 = vmul.f32 %v875, %v879
    %s881 = scalar_lea.vmem [#allocation3], 8
    %882 = vst [vmem:[%s881] sm:$0xff] %v880
    %s883 = scalar_lea.vmem [#allocation2], 64
    %v884 = vld [vmem:[%s883] sm:$0xff]
    %v885 = vld [vmem:[%s883 + $0x8] sm:$0xff]
    %v886 = vld [vmem:[%s883 + $0x10] sm:$0xff]
    %v887 = vld [vmem:[%s883 + $0x18] sm:$0xff]
    %888 = vmatprep.subr.mxu0 %v180
    %889 = vmatpush1.msra.mxu0 %v179
    %890 = vmatprep.subr.mxu0 %v184
    %891 = vmatpush1.msra.mxu0 %v183
    %892 = vmatprep.subr.mxu0 %v188
    %893 = vmatpush1.msra.mxu0 %v187
    %894 = vmatprep.subr.mxu0 %v192
    %895 = vmatpush1.msra.mxu0 %v191
    %896 = vmatprep.subr.mxu0 %v196
    %897 = vmatpush1.msra.mxu0 %v195
    %898 = vmatprep.subr.mxu0 %v200
    %899 = vmatpush1.msra.mxu0 %v199
    %900 = vmatprep.subr.mxu0 %v204
    %901 = vmatpush1.msra.mxu0 %v203
    %902 = vmatprep.subr.mxu0 %v208
    %903 = vmatpush1.msra.mxu0 %v207
    %904 = vmatprep.subr.mxu0 %v212
    %905 = vmatpush1.msra.mxu0 %v211
    %906 = vmatprep.subr.mxu0 %v216
    %907 = vmatpush1.msra.mxu0 %v215
    %908 = vmatprep.subr.mxu0 %v220
    %909 = vmatpush1.msra.mxu0 %v219
    %910 = vmatprep.subr.mxu0 %v224
    %911 = vmatpush1.msra.mxu0 %v223
    %912 = vmatprep.subr.mxu0 %v228
    %913 = vmatpush1.msra.mxu0 %v227
    %914 = vmatprep.subr.mxu0 %v232
    %915 = vmatpush1.msra.mxu0 %v231
    %916 = vmatprep.subr.mxu0 %v236
    %917 = vmatpush1.msra.mxu0 %v235
    %918 = vmatprep.subr.mxu0 %v240
    %919 = vmatpush1.msra.mxu0 %v239
    %920 = vmatprep.subr.mxu0 0.0
    %921 = vmatpush1.msra.mxu0 0.0
    %922 = vmatprep.subr.mxu0 0.0
    %923 = vmatpush1.msra.mxu0 0.0
    %924 = vmatprep.subr.mxu0 0.0
    %925 = vmatpush1.msra.mxu0 0.0
    %926 = vmatprep.subr.mxu0 0.0
    %927 = vmatpush1.msra.mxu0 0.0
    %928 = vmatprep.subr.mxu0 0.0
    %929 = vmatpush1.msra.mxu0 0.0
    %930 = vmatprep.subr.mxu0 0.0
    %931 = vmatpush1.msra.mxu0 0.0
    %932 = vmatprep.subr.mxu0 0.0
    %933 = vmatpush1.msra.mxu0 0.0
    %934 = vmatprep.subr.mxu0 0.0
    %935 = vmatpush1.msra.mxu0 0.0
    %936 = vmatprep.subr.mxu0 0.0
    %937 = vmatpush1.msra.mxu0 0.0
    %938 = vmatprep.subr.mxu0 0.0
    %939 = vmatpush1.msra.mxu0 0.0
    %940 = vmatprep.subr.mxu0 0.0
    %941 = vmatpush1.msra.mxu0 0.0
    %942 = vmatprep.subr.mxu0 0.0
    %943 = vmatpush1.msra.mxu0 0.0
    %944 = vmatprep.subr.mxu0 0.0
    %945 = vmatpush1.msra.mxu0 0.0
    %946 = vmatprep.subr.mxu0 0.0
    %947 = vmatpush1.msra.mxu0 0.0
    %948 = vmatprep.subr.mxu0 0.0
    %949 = vmatpush1.msra.mxu0 0.0
    %950 = vmatprep.subr.mxu0 0.0
    %951 = vmatpush1.msra.mxu0 0.0
    %952 = vmatprep.mubr.f32.mxu0 0.0
    %953 = vmatmul.mubr.f32.gmra.mrb[0].mxu0 %v880
    %v954 = vpop.f32.mrb[0].mxu0
    %v955 = vadd.f32 0.0, %v954
    %v956 = vpop.f32.mrb[0].mxu0
    %v957 = vadd.f32 0.0, %v956
    %958 = vdwg.mxu0
    %959 = vmatprep.subr.mxu0 %v182
    %960 = vmatpush1.msra.mxu0 %v181
    %961 = vmatprep.subr.mxu0 %v186
    %962 = vmatpush1.msra.mxu0 %v185
    %963 = vmatprep.subr.mxu0 %v190
    %964 = vmatpush1.msra.mxu0 %v189
    %965 = vmatprep.subr.mxu0 %v194
    %966 = vmatpush1.msra.mxu0 %v193
    %967 = vmatprep.subr.mxu0 %v198
    %968 = vmatpush1.msra.mxu0 %v197
    %969 = vmatprep.subr.mxu0 %v202
    %970 = vmatpush1.msra.mxu0 %v201
    %971 = vmatprep.subr.mxu0 %v206
    %972 = vmatpush1.msra.mxu0 %v205
    %973 = vmatprep.subr.mxu0 %v210
    %974 = vmatpush1.msra.mxu0 %v209
    %975 = vmatprep.subr.mxu0 %v214
    %976 = vmatpush1.msra.mxu0 %v213
    %977 = vmatprep.subr.mxu0 %v218
    %978 = vmatpush1.msra.mxu0 %v217
    %979 = vmatprep.subr.mxu0 %v222
    %980 = vmatpush1.msra.mxu0 %v221
    %981 = vmatprep.subr.mxu0 %v226
    %982 = vmatpush1.msra.mxu0 %v225
    %983 = vmatprep.subr.mxu0 %v230
    %984 = vmatpush1.msra.mxu0 %v229
    %985 = vmatprep.subr.mxu0 %v234
    %986 = vmatpush1.msra.mxu0 %v233
    %987 = vmatprep.subr.mxu0 %v238
    %988 = vmatpush1.msra.mxu0 %v237
    %989 = vmatprep.subr.mxu0 %v242
    %990 = vmatpush1.msra.mxu0 %v241
    %991 = vmatprep.subr.mxu0 0.0
    %992 = vmatpush1.msra.mxu0 0.0
    %993 = vmatprep.subr.mxu0 0.0
    %994 = vmatpush1.msra.mxu0 0.0
    %995 = vmatprep.subr.mxu0 0.0
    %996 = vmatpush1.msra.mxu0 0.0
    %997 = vmatprep.subr.mxu0 0.0
    %998 = vmatpush1.msra.mxu0 0.0
    %999 = vmatprep.subr.mxu0 0.0
    %1000 = vmatpush1.msra.mxu0 0.0
    %1001 = vmatprep.subr.mxu0 0.0
    %1002 = vmatpush1.msra.mxu0 0.0
    %1003 = vmatprep.subr.mxu0 0.0
    %1004 = vmatpush1.msra.mxu0 0.0
    %1005 = vmatprep.subr.mxu0 0.0
    %1006 = vmatpush1.msra.mxu0 0.0
    %1007 = vmatprep.subr.mxu0 0.0
    %1008 = vmatpush1.msra.mxu0 0.0
    %1009 = vmatprep.subr.mxu0 0.0
    %1010 = vmatpush1.msra.mxu0 0.0
    %1011 = vmatprep.subr.mxu0 0.0
    %1012 = vmatpush1.msra.mxu0 0.0
    %1013 = vmatprep.subr.mxu0 0.0
    %1014 = vmatpush1.msra.mxu0 0.0
    %1015 = vmatprep.subr.mxu0 0.0
    %1016 = vmatpush1.msra.mxu0 0.0
    %1017 = vmatprep.subr.mxu0 0.0
    %1018 = vmatpush1.msra.mxu0 0.0
    %1019 = vmatprep.subr.mxu0 0.0
    %1020 = vmatpush1.msra.mxu0 0.0
    %1021 = vmatprep.subr.mxu0 0.0
    %1022 = vmatpush1.msra.mxu0 0.0
    %1023 = vmatprep.mubr.f32.mxu0 0.0
    %1024 = vmatmul.mubr.f32.gmra.mrb[0].mxu0 %v880
    %v1025 = vpop.f32.mrb[0].mxu0
    %v1026 = vadd.f32 0.0, %v1025
    %v1027 = vpop.f32.mrb[0].mxu0
    %v1028 = vadd.f32 0.0, %v1027
    %1029 = vdwg.mxu0
    %v1030 = vadd.f32 %v884, %v955
    %v1031 = vadd.f32 %v885, %v957
    %v1032 = vadd.f32 %v886, %v1026
    %v1033 = vadd.f32 %v887, %v1028
    %v1034 = vxor.u32 %v1030, 2147483648
    %v1035 = vmul.f32 %v1034, 1.442695
    %v1036 = vpow.pop %v1035
    %v1037 = vadd.f32 %v1036, 1.0
    %v1038 = vrcp.pop %v1037
    %v1039 = vmul.f32 1.0, %v1038
    %v1040 = vxor.u32 %v1031, 2147483648
    %v1041 = vmul.f32 %v1040, 1.442695
    %v1042 = vpow.pop %v1041
    %v1043 = vadd.f32 %v1042, 1.0
    %v1044 = vrcp.pop %v1043
    %v1045 = vmul.f32 1.0, %v1044
    %v1046 = vtanh.pop %v1032
    %v1047 = vxor.u32 %v1033, 2147483648
    %v1048 = vmul.f32 %v1047, 1.442695
    %v1049 = vpow.pop %v1048
    %v1050 = vadd.f32 %v1049, 1.0
    %v1051 = vrcp.pop %v1050
    %v1052 = vmul.f32 1.0, %v1051
    %v1053 = vmul.f32 %v1045, %v878
    %v1054 = vmul.f32 %v1039, %v1046
    %v1055 = vadd.f32 %v1053, %v1054
    %v1056 = vtanh.pop %v1055
    %v1057 = vmul.f32 %v1052, %v1056
    %s1058 = scalar_lea.vmem [#allocation3], 16
    %1059 = vst [vmem:[%s1058] sm:$0xff] %v1057
    %s1060 = scalar_lea.vmem [#allocation2], 96
    %v1061 = vld [vmem:[%s1060] sm:$0xff]
    %v1062 = vld [vmem:[%s1060 + $0x8] sm:$0xff]
    %v1063 = vld [vmem:[%s1060 + $0x10] sm:$0xff]
    %v1064 = vld [vmem:[%s1060 + $0x18] sm:$0xff]
    %1065 = vmatprep.subr.mxu0 %v180
    %1066 = vmatpush1.msra.mxu0 %v179
    %1067 = vmatprep.subr.mxu0 %v184
    %1068 = vmatpush1.msra.mxu0 %v183
    %1069 = vmatprep.subr.mxu0 %v188
    %1070 = vmatpush1.msra.mxu0 %v187
    %1071 = vmatprep.subr.mxu0 %v192
    %1072 = vmatpush1.msra.mxu0 %v191
    %1073 = vmatprep.subr.mxu0 %v196
    %1074 = vmatpush1.msra.mxu0 %v195
    %1075 = vmatprep.subr.mxu0 %v200
    %1076 = vmatpush1.msra.mxu0 %v199
    %1077 = vmatprep.subr.mxu0 %v204
    %1078 = vmatpush1.msra.mxu0 %v203
    %1079 = vmatprep.subr.mxu0 %v208
    %1080 = vmatpush1.msra.mxu0 %v207
    %1081 = vmatprep.subr.mxu0 %v212
    %1082 = vmatpush1.msra.mxu0 %v211
    %1083 = vmatprep.subr.mxu0 %v216
    %1084 = vmatpush1.msra.mxu0 %v215
    %1085 = vmatprep.subr.mxu0 %v220
    %1086 = vmatpush1.msra.mxu0 %v219
    %1087 = vmatprep.subr.mxu0 %v224
    %1088 = vmatpush1.msra.mxu0 %v223
    %1089 = vmatprep.subr.mxu0 %v228
    %1090 = vmatpush1.msra.mxu0 %v227
    %1091 = vmatprep.subr.mxu0 %v232
    %1092 = vmatpush1.msra.mxu0 %v231
    %1093 = vmatprep.subr.mxu0 %v236
    %1094 = vmatpush1.msra.mxu0 %v235
    %1095 = vmatprep.subr.mxu0 %v240
    %1096 = vmatpush1.msra.mxu0 %v239
    %1097 = vmatprep.subr.mxu0 0.0
    %1098 = vmatpush1.msra.mxu0 0.0
    %1099 = vmatprep.subr.mxu0 0.0
    %1100 = vmatpush1.msra.mxu0 0.0
    %1101 = vmatprep.subr.mxu0 0.0
    %1102 = vmatpush1.msra.mxu0 0.0
    %1103 = vmatprep.subr.mxu0 0.0
    %1104 = vmatpush1.msra.mxu0 0.0
    %1105 = vmatprep.subr.mxu0 0.0
    %1106 = vmatpush1.msra.mxu0 0.0
    %1107 = vmatprep.subr.mxu0 0.0
    %1108 = vmatpush1.msra.mxu0 0.0
    %1109 = vmatprep.subr.mxu0 0.0
    %1110 = vmatpush1.msra.mxu0 0.0
    %1111 = vmatprep.subr.mxu0 0.0
    %1112 = vmatpush1.msra.mxu0 0.0
    %1113 = vmatprep.subr.mxu0 0.0
    %1114 = vmatpush1.msra.mxu0 0.0
    %1115 = vmatprep.subr.mxu0 0.0
    %1116 = vmatpush1.msra.mxu0 0.0
    %1117 = vmatprep.subr.mxu0 0.0
    %1118 = vmatpush1.msra.mxu0 0.0
    %1119 = vmatprep.subr.mxu0 0.0
    %1120 = vmatpush1.msra.mxu0 0.0
    %1121 = vmatprep.subr.mxu0 0.0
    %1122 = vmatpush1.msra.mxu0 0.0
    %1123 = vmatprep.subr.mxu0 0.0
    %1124 = vmatpush1.msra.mxu0 0.0
    %1125 = vmatprep.subr.mxu0 0.0
    %1126 = vmatpush1.msra.mxu0 0.0
    %1127 = vmatprep.subr.mxu0 0.0
    %1128 = vmatpush1.msra.mxu0 0.0
    %1129 = vmatprep.mubr.f32.mxu0 0.0
    %1130 = vmatmul.mubr.f32.gmra.mrb[0].mxu0 %v1057
    %v1131 = vpop.f32.mrb[0].mxu0
    %v1132 = vadd.f32 0.0, %v1131
    %v1133 = vpop.f32.mrb[0].mxu0
    %v1134 = vadd.f32 0.0, %v1133
    %1135 = vdwg.mxu0
    %1136 = vmatprep.subr.mxu0 %v182
    %1137 = vmatpush1.msra.mxu0 %v181
    %1138 = vmatprep.subr.mxu0 %v186
    %1139 = vmatpush1.msra.mxu0 %v185
    %1140 = vmatprep.subr.mxu0 %v190
    %1141 = vmatpush1.msra.mxu0 %v189
    %1142 = vmatprep.subr.mxu0 %v194
    %1143 = vmatpush1.msra.mxu0 %v193
    %1144 = vmatprep.subr.mxu0 %v198
    %1145 = vmatpush1.msra.mxu0 %v197
    %1146 = vmatprep.subr.mxu0 %v202
    %1147 = vmatpush1.msra.mxu0 %v201
    %1148 = vmatprep.subr.mxu0 %v206
    %1149 = vmatpush1.msra.mxu0 %v205
    %1150 = vmatprep.subr.mxu0 %v210
    %1151 = vmatpush1.msra.mxu0 %v209
    %1152 = vmatprep.subr.mxu0 %v214
    %1153 = vmatpush1.msra.mxu0 %v213
    %1154 = vmatprep.subr.mxu0 %v218
    %1155 = vmatpush1.msra.mxu0 %v217
    %1156 = vmatprep.subr.mxu0 %v222
    %1157 = vmatpush1.msra.mxu0 %v221
    %1158 = vmatprep.subr.mxu0 %v226
    %1159 = vmatpush1.msra.mxu0 %v225
    %1160 = vmatprep.subr.mxu0 %v230
    %1161 = vmatpush1.msra.mxu0 %v229
    %1162 = vmatprep.subr.mxu0 %v234
    %1163 = vmatpush1.msra.mxu0 %v233
    %1164 = vmatprep.subr.mxu0 %v238
    %1165 = vmatpush1.msra.mxu0 %v237
    %1166 = vmatprep.subr.mxu0 %v242
    %1167 = vmatpush1.msra.mxu0 %v241
    %1168 = vmatprep.subr.mxu0 0.0
    %1169 = vmatpush1.msra.mxu0 0.0
    %1170 = vmatprep.subr.mxu0 0.0
    %1171 = vmatpush1.msra.mxu0 0.0
    %1172 = vmatprep.subr.mxu0 0.0
    %1173 = vmatpush1.msra.mxu0 0.0
    %1174 = vmatprep.subr.mxu0 0.0
    %1175 = vmatpush1.msra.mxu0 0.0
    %1176 = vmatprep.subr.mxu0 0.0
    %1177 = vmatpush1.msra.mxu0 0.0
    %1178 = vmatprep.subr.mxu0 0.0
    %1179 = vmatpush1.msra.mxu0 0.0
    %1180 = vmatprep.subr.mxu0 0.0
    %1181 = vmatpush1.msra.mxu0 0.0
    %1182 = vmatprep.subr.mxu0 0.0
    %1183 = vmatpush1.msra.mxu0 0.0
    %1184 = vmatprep.subr.mxu0 0.0
    %1185 = vmatpush1.msra.mxu0 0.0
    %1186 = vmatprep.subr.mxu0 0.0
    %1187 = vmatpush1.msra.mxu0 0.0
    %1188 = vmatprep.subr.mxu0 0.0
    %1189 = vmatpush1.msra.mxu0 0.0
    %1190 = vmatprep.subr.mxu0 0.0
    %1191 = vmatpush1.msra.mxu0 0.0
    %1192 = vmatprep.subr.mxu0 0.0
    %1193 = vmatpush1.msra.mxu0 0.0
    %1194 = vmatprep.subr.mxu0 0.0
    %1195 = vmatpush1.msra.mxu0 0.0
    %1196 = vmatprep.subr.mxu0 0.0
    %1197 = vmatpush1.msra.mxu0 0.0
    %1198 = vmatprep.subr.mxu0 0.0
    %1199 = vmatpush1.msra.mxu0 0.0
    %1200 = vmatprep.mubr.f32.mxu0 0.0
    %1201 = vmatmul.mubr.f32.gmra.mrb[0].mxu0 %v1057
    %v1202 = vpop.f32.mrb[0].mxu0
    %v1203 = vadd.f32 0.0, %v1202
    %v1204 = vpop.f32.mrb[0].mxu0
    %v1205 = vadd.f32 0.0, %v1204
    %1206 = vdwg.mxu0
    %v1207 = vadd.f32 %v1061, %v1132
    %v1208 = vadd.f32 %v1062, %v1134
    %v1209 = vadd.f32 %v1063, %v1203
    %v1210 = vadd.f32 %v1064, %v1205
    %v1211 = vxor.u32 %v1207, 2147483648
    %v1212 = vmul.f32 %v1211, 1.442695
    %v1213 = vpow.pop %v1212
    %v1214 = vadd.f32 %v1213, 1.0
    %v1215 = vrcp.pop %v1214
    %v1216 = vmul.f32 1.0, %v1215
    %v1217 = vxor.u32 %v1208, 2147483648
    %v1218 = vmul.f32 %v1217, 1.442695
    %v1219 = vpow.pop %v1218
    %v1220 = vadd.f32 %v1219, 1.0
    %v1221 = vrcp.pop %v1220
    %v1222 = vmul.f32 1.0, %v1221
    %v1223 = vtanh.pop %v1209
    %v1224 = vxor.u32 %v1210, 2147483648
    %v1225 = vmul.f32 %v1224, 1.442695
    %v1226 = vpow.pop %v1225
    %v1227 = vadd.f32 %v1226, 1.0
    %v1228 = vrcp.pop %v1227
    %v1229 = vmul.f32 1.0, %v1228
    %v1230 = vmul.f32 %v1222, %v1055
    %v1231 = vmul.f32 %v1216, %v1223
    %v1232 = vadd.f32 %v1230, %v1231
    %v1233 = vtanh.pop %v1232
    %v1234 = vmul.f32 %v1229, %v1233
    %s1235 = scalar_lea.vmem [#allocation3], 24
    %1236 = vst [vmem:[%s1235] sm:$0xff] %v1234
    %s1237 = scalar_lea.vmem [#allocation2], 128
    %v1238 = vld [vmem:[%s1237] sm:$0xff]
    %v1239 = vld [vmem:[%s1237 + $0x8] sm:$0xff]
    %v1240 = vld [vmem:[%s1237 + $0x10] sm:$0xff]
    %v1241 = vld [vmem:[%s1237 + $0x18] sm:$0xff]
    %1242 = vmatprep.subr.mxu0 %v180
    %1243 = vmatpush1.msra.mxu0 %v179
    %1244 = vmatprep.subr.mxu0 %v184
    %1245 = vmatpush1.msra.mxu0 %v183
    %1246 = vmatprep.subr.mxu0 %v188
    %1247 = vmatpush1.msra.mxu0 %v187
    %1248 = vmatprep.subr.mxu0 %v192
    %1249 = vmatpush1.msra.mxu0 %v191
    %1250 = vmatprep.subr.mxu0 %v196
    %1251 = vmatpush1.msra.mxu0 %v195
    %1252 = vmatprep.subr.mxu0 %v200
    %1253 = vmatpush1.msra.mxu0 %v199
    %1254 = vmatprep.subr.mxu0 %v204
    %1255 = vmatpush1.msra.mxu0 %v203
    %1256 = vmatprep.subr.mxu0 %v208
    %1257 = vmatpush1.msra.mxu0 %v207
    %1258 = vmatprep.subr.mxu0 %v212
    %1259 = vmatpush1.msra.mxu0 %v211
    %1260 = vmatprep.subr.mxu0 %v216
    %1261 = vmatpush1.msra.mxu0 %v215
    %1262 = vmatprep.subr.mxu0 %v220
    %1263 = vmatpush1.msra.mxu0 %v219
    %1264 = vmatprep.subr.mxu0 %v224
    %1265 = vmatpush1.msra.mxu0 %v223
    %1266 = vmatprep.subr.mxu0 %v228
    %1267 = vmatpush1.msra.mxu0 %v227
    %1268 = vmatprep.subr.mxu0 %v232
    %1269 = vmatpush1.msra.mxu0 %v231
    %1270 = vmatprep.subr.mxu0 %v236
    %1271 = vmatpush1.msra.mxu0 %v235
    %1272 = vmatprep.subr.mxu0 %v240
    %1273 = vmatpush1.msra.mxu0 %v239
    %1274 = vmatprep.subr.mxu0 0.0
    %1275 = vmatpush1.msra.mxu0 0.0
    %1276 = vmatprep.subr.mxu0 0.0
    %1277 = vmatpush1.msra.mxu0 0.0
    %1278 = vmatprep.subr.mxu0 0.0
    %1279 = vmatpush1.msra.mxu0 0.0
    %1280 = vmatprep.subr.mxu0 0.0
    %1281 = vmatpush1.msra.mxu0 0.0
    %1282 = vmatprep.subr.mxu0 0.0
    %1283 = vmatpush1.msra.mxu0 0.0
    %1284 = vmatprep.subr.mxu0 0.0
    %1285 = vmatpush1.msra.mxu0 0.0
    %1286 = vmatprep.subr.mxu0 0.0
    %1287 = vmatpush1.msra.mxu0 0.0
    %1288 = vmatprep.subr.mxu0 0.0
    %1289 = vmatpush1.msra.mxu0 0.0
    %1290 = vmatprep.subr.mxu0 0.0
    %1291 = vmatpush1.msra.mxu0 0.0
    %1292 = vmatprep.subr.mxu0 0.0
    %1293 = vmatpush1.msra.mxu0 0.0
    %1294 = vmatprep.subr.mxu0 0.0
    %1295 = vmatpush1.msra.mxu0 0.0
    %1296 = vmatprep.subr.mxu0 0.0
    %1297 = vmatpush1.msra.mxu0 0.0
    %1298 = vmatprep.subr.mxu0 0.0
    %1299 = vmatpush1.msra.mxu0 0.0
    %1300 = vmatprep.subr.mxu0 0.0
    %1301 = vmatpush1.msra.mxu0 0.0
    %1302 = vmatprep.subr.mxu0 0.0
    %1303 = vmatpush1.msra.mxu0 0.0
    %1304 = vmatprep.subr.mxu0 0.0
    %1305 = vmatpush1.msra.mxu0 0.0
    %1306 = vmatprep.mubr.f32.mxu0 0.0
    %1307 = vmatmul.mubr.f32.gmra.mrb[0].mxu0 %v1234
    %v1308 = vpop.f32.mrb[0].mxu0
    %v1309 = vadd.f32 0.0, %v1308
    %v1310 = vpop.f32.mrb[0].mxu0
    %v1311 = vadd.f32 0.0, %v1310
    %1312 = vdwg.mxu0
    %1313 = vmatprep.subr.mxu0 %v182
    %1314 = vmatpush1.msra.mxu0 %v181
    %1315 = vmatprep.subr.mxu0 %v186
    %1316 = vmatpush1.msra.mxu0 %v185
    %1317 = vmatprep.subr.mxu0 %v190
    %1318 = vmatpush1.msra.mxu0 %v189
    %1319 = vmatprep.subr.mxu0 %v194
    %1320 = vmatpush1.msra.mxu0 %v193
    %1321 = vmatprep.subr.mxu0 %v198
    %1322 = vmatpush1.msra.mxu0 %v197
    %1323 = vmatprep.subr.mxu0 %v202
    %1324 = vmatpush1.msra.mxu0 %v201
    %1325 = vmatprep.subr.mxu0 %v206
    %1326 = vmatpush1.msra.mxu0 %v205
    %1327 = vmatprep.subr.mxu0 %v210
    %1328 = vmatpush1.msra.mxu0 %v209
    %1329 = vmatprep.subr.mxu0 %v214
    %1330 = vmatpush1.msra.mxu0 %v213
    %1331 = vmatprep.subr.mxu0 %v218
    %1332 = vmatpush1.msra.mxu0 %v217
    %1333 = vmatprep.subr.mxu0 %v222
    %1334 = vmatpush1.msra.mxu0 %v221
    %1335 = vmatprep.subr.mxu0 %v226
    %1336 = vmatpush1.msra.mxu0 %v225
    %1337 = vmatprep.subr.mxu0 %v230
    %1338 = vmatpush1.msra.mxu0 %v229
    %1339 = vmatprep.subr.mxu0 %v234
    %1340 = vmatpush1.msra.mxu0 %v233
    %1341 = vmatprep.subr.mxu0 %v238
    %1342 = vmatpush1.msra.mxu0 %v237
    %1343 = vmatprep.subr.mxu0 %v242
    %1344 = vmatpush1.msra.mxu0 %v241
    %1345 = vmatprep.subr.mxu0 0.0
    %1346 = vmatpush1.msra.mxu0 0.0
    %1347 = vmatprep.subr.mxu0 0.0
    %1348 = vmatpush1.msra.mxu0 0.0
    %1349 = vmatprep.subr.mxu0 0.0
    %1350 = vmatpush1.msra.mxu0 0.0
    %1351 = vmatprep.subr.mxu0 0.0
    %1352 = vmatpush1.msra.mxu0 0.0
    %1353 = vmatprep.subr.mxu0 0.0
    %1354 = vmatpush1.msra.mxu0 0.0
    %1355 = vmatprep.subr.mxu0 0.0
    %1356 = vmatpush1.msra.mxu0 0.0
    %1357 = vmatprep.subr.mxu0 0.0
    %1358 = vmatpush1.msra.mxu0 0.0
    %1359 = vmatprep.subr.mxu0 0.0
    %1360 = vmatpush1.msra.mxu0 0.0
    %1361 = vmatprep.subr.mxu0 0.0
    %1362 = vmatpush1.msra.mxu0 0.0
    %1363 = vmatprep.subr.mxu0 0.0
    %1364 = vmatpush1.msra.mxu0 0.0
    %1365 = vmatprep.subr.mxu0 0.0
    %1366 = vmatpush1.msra.mxu0 0.0
    %1367 = vmatprep.subr.mxu0 0.0
    %1368 = vmatpush1.msra.mxu0 0.0
    %1369 = vmatprep.subr.mxu0 0.0
    %1370 = vmatpush1.msra.mxu0 0.0
    %1371 = vmatprep.subr.mxu0 0.0
    %1372 = vmatpush1.msra.mxu0 0.0
    %1373 = vmatprep.subr.mxu0 0.0
    %1374 = vmatpush1.msra.mxu0 0.0
    %1375 = vmatprep.subr.mxu0 0.0
    %1376 = vmatpush1.msra.mxu0 0.0
    %1377 = vmatprep.mubr.f32.mxu0 0.0
    %1378 = vmatmul.mubr.f32.gmra.mrb[0].mxu0 %v1234
    %v1379 = vpop.f32.mrb[0].mxu0
    %v1380 = vadd.f32 0.0, %v1379
    %v1381 = vpop.f32.mrb[0].mxu0
    %v1382 = vadd.f32 0.0, %v1381
    %1383 = vdwg.mxu0
    %v1384 = vadd.f32 %v1238, %v1309
    %v1385 = vadd.f32 %v1239, %v1311
    %v1386 = vadd.f32 %v1240, %v1380
    %v1387 = vadd.f32 %v1241, %v1382
    %v1388 = vxor.u32 %v1384, 2147483648
    %v1389 = vmul.f32 %v1388, 1.442695
    %v1390 = vpow.pop %v1389
    %v1391 = vadd.f32 %v1390, 1.0
    %v1392 = vrcp.pop %v1391
    %v1393 = vmul.f32 1.0, %v1392
    %v1394 = vxor.u32 %v1385, 2147483648
    %v1395 = vmul.f32 %v1394, 1.442695
    %v1396 = vpow.pop %v1395
    %v1397 = vadd.f32 %v1396, 1.0
    %v1398 = vrcp.pop %v1397
    %v1399 = vmul.f32 1.0, %v1398
    %v1400 = vtanh.pop %v1386
    %v1401 = vxor.u32 %v1387, 2147483648
    %v1402 = vmul.f32 %v1401, 1.442695
    %v1403 = vpow.pop %v1402
    %v1404 = vadd.f32 %v1403, 1.0
    %v1405 = vrcp.pop %v1404
    %v1406 = vmul.f32 1.0, %v1405
    %v1407 = vmul.f32 %v1399, %v1232
    %v1408 = vmul.f32 %v1393, %v1400
    %v1409 = vadd.f32 %v1407, %v1408
    %v1410 = vtanh.pop %v1409
    %v1411 = vmul.f32 %v1406, %v1410
    %s1412 = scalar_lea.vmem [#allocation3], 32
    %1413 = vst [vmem:[%s1412] sm:$0xff] %v1411
    %s1414 = scalar_lea.vmem [#allocation2], 160
    %v1415 = vld [vmem:[%s1414] sm:$0xff]
    %v1416 = vld [vmem:[%s1414 + $0x8] sm:$0xff]
    %v1417 = vld [vmem:[%s1414 + $0x10] sm:$0xff]
    %v1418 = vld [vmem:[%s1414 + $0x18] sm:$0xff]
    %1419 = vmatprep.subr.mxu0 %v180
    %1420 = vmatpush1.msra.mxu0 %v179
    %1421 = vmatprep.subr.mxu0 %v184
    %1422 = vmatpush1.msra.mxu0 %v183
    %1423 = vmatprep.subr.mxu0 %v188
    %1424 = vmatpush1.msra.mxu0 %v187
    %1425 = vmatprep.subr.mxu0 %v192
    %1426 = vmatpush1.msra.mxu0 %v191
    %1427 = vmatprep.subr.mxu0 %v196
    %1428 = vmatpush1.msra.mxu0 %v195
    %1429 = vmatprep.subr.mxu0 %v200
    %1430 = vmatpush1.msra.mxu0 %v199
    %1431 = vmatprep.subr.mxu0 %v204
    %1432 = vmatpush1.msra.mxu0 %v203
    %1433 = vmatprep.subr.mxu0 %v208
    %1434 = vmatpush1.msra.mxu0 %v207
    %1435 = vmatprep.subr.mxu0 %v212
    %1436 = vmatpush1.msra.mxu0 %v211
    %1437 = vmatprep.subr.mxu0 %v216
    %1438 = vmatpush1.msra.mxu0 %v215
    %1439 = vmatprep.subr.mxu0 %v220
    %1440 = vmatpush1.msra.mxu0 %v219
    %1441 = vmatprep.subr.mxu0 %v224
    %1442 = vmatpush1.msra.mxu0 %v223
    %1443 = vmatprep.subr.mxu0 %v228
    %1444 = vmatpush1.msra.mxu0 %v227
    %1445 = vmatprep.subr.mxu0 %v232
    %1446 = vmatpush1.msra.mxu0 %v231
    %1447 = vmatprep.subr.mxu0 %v236
    %1448 = vmatpush1.msra.mxu0 %v235
    %1449 = vmatprep.subr.mxu0 %v240
    %1450 = vmatpush1.msra.mxu0 %v239
    %1451 = vmatprep.subr.mxu0 0.0
    %1452 = vmatpush1.msra.mxu0 0.0
    %1453 = vmatprep.subr.mxu0 0.0
    %1454 = vmatpush1.msra.mxu0 0.0
    %1455 = vmatprep.subr.mxu0 0.0
    %1456 = vmatpush1.msra.mxu0 0.0
    %1457 = vmatprep.subr.mxu0 0.0
    %1458 = vmatpush1.msra.mxu0 0.0
    %1459 = vmatprep.subr.mxu0 0.0
    %1460 = vmatpush1.msra.mxu0 0.0
    %1461 = vmatprep.subr.mxu0 0.0
    %1462 = vmatpush1.msra.mxu0 0.0
    %1463 = vmatprep.subr.mxu0 0.0
    %1464 = vmatpush1.msra.mxu0 0.0
    %1465 = vmatprep.subr.mxu0 0.0
    %1466 = vmatpush1.msra.mxu0 0.0
    %1467 = vmatprep.subr.mxu0 0.0
    %1468 = vmatpush1.msra.mxu0 0.0
    %1469 = vmatprep.subr.mxu0 0.0
    %1470 = vmatpush1.msra.mxu0 0.0
    %1471 = vmatprep.subr.mxu0 0.0
    %1472 = vmatpush1.msra.mxu0 0.0
    %1473 = vmatprep.subr.mxu0 0.0
    %1474 = vmatpush1.msra.mxu0 0.0
    %1475 = vmatprep.subr.mxu0 0.0
    %1476 = vmatpush1.msra.mxu0 0.0
    %1477 = vmatprep.subr.mxu0 0.0
    %1478 = vmatpush1.msra.mxu0 0.0
    %1479 = vmatprep.subr.mxu0 0.0
    %1480 = vmatpush1.msra.mxu0 0.0
    %1481 = vmatprep.subr.mxu0 0.0
    %1482 = vmatpush1.msra.mxu0 0.0
    %1483 = vmatprep.mubr.f32.mxu0 0.0
    %1484 = vmatmul.mubr.f32.gmra.mrb[0].mxu0 %v1411
    %v1485 = vpop.f32.mrb[0].mxu0
    %v1486 = vadd.f32 0.0, %v1485
    %v1487 = vpop.f32.mrb[0].mxu0
    %v1488 = vadd.f32 0.0, %v1487
    %1489 = vdwg.mxu0
    %1490 = vmatprep.subr.mxu0 %v182
    %1491 = vmatpush1.msra.mxu0 %v181
    %1492 = vmatprep.subr.mxu0 %v186
    %1493 = vmatpush1.msra.mxu0 %v185
    %1494 = vmatprep.subr.mxu0 %v190
    %1495 = vmatpush1.msra.mxu0 %v189
    %1496 = vmatprep.subr.mxu0 %v194
    %1497 = vmatpush1.msra.mxu0 %v193
    %1498 = vmatprep.subr.mxu0 %v198
    %1499 = vmatpush1.msra.mxu0 %v197
    %1500 = vmatprep.subr.mxu0 %v202
    %1501 = vmatpush1.msra.mxu0 %v201
    %1502 = vmatprep.subr.mxu0 %v206
    %1503 = vmatpush1.msra.mxu0 %v205
    %1504 = vmatprep.subr.mxu0 %v210
    %1505 = vmatpush1.msra.mxu0 %v209
    %1506 = vmatprep.subr.mxu0 %v214
    %1507 = vmatpush1.msra.mxu0 %v213
    %1508 = vmatprep.subr.mxu0 %v218
    %1509 = vmatpush1.msra.mxu0 %v217
    %1510 = vmatprep.subr.mxu0 %v222
    %1511 = vmatpush1.msra.mxu0 %v221
    %1512 = vmatprep.subr.mxu0 %v226
    %1513 = vmatpush1.msra.mxu0 %v225
    %1514 = vmatprep.subr.mxu0 %v230
    %1515 = vmatpush1.msra.mxu0 %v229
    %1516 = vmatprep.subr.mxu0 %v234
    %1517 = vmatpush1.msra.mxu0 %v233
    %1518 = vmatprep.subr.mxu0 %v238
    %1519 = vmatpush1.msra.mxu0 %v237
    %1520 = vmatprep.subr.mxu0 %v242
    %1521 = vmatpush1.msra.mxu0 %v241
    %1522 = vmatprep.subr.mxu0 0.0
    %1523 = vmatpush1.msra.mxu0 0.0
    %1524 = vmatprep.subr.mxu0 0.0
    %1525 = vmatpush1.msra.mxu0 0.0
    %1526 = vmatprep.subr.mxu0 0.0
    %1527 = vmatpush1.msra.mxu0 0.0
    %1528 = vmatprep.subr.mxu0 0.0
    %1529 = vmatpush1.msra.mxu0 0.0
    %1530 = vmatprep.subr.mxu0 0.0
    %1531 = vmatpush1.msra.mxu0 0.0
    %1532 = vmatprep.subr.mxu0 0.0
    %1533 = vmatpush1.msra.mxu0 0.0
    %1534 = vmatprep.subr.mxu0 0.0
    %1535 = vmatpush1.msra.mxu0 0.0
    %1536 = vmatprep.subr.mxu0 0.0
    %1537 = vmatpush1.msra.mxu0 0.0
    %1538 = vmatprep.subr.mxu0 0.0
    %1539 = vmatpush1.msra.mxu0 0.0
    %1540 = vmatprep.subr.mxu0 0.0
    %1541 = vmatpush1.msra.mxu0 0.0
    %1542 = vmatprep.subr.mxu0 0.0
    %1543 = vmatpush1.msra.mxu0 0.0
    %1544 = vmatprep.subr.mxu0 0.0
    %1545 = vmatpush1.msra.mxu0 0.0
    %1546 = vmatprep.subr.mxu0 0.0
    %1547 = vmatpush1.msra.mxu0 0.0
    %1548 = vmatprep.subr.mxu0 0.0
    %1549 = vmatpush1.msra.mxu0 0.0
    %1550 = vmatprep.subr.mxu0 0.0
    %1551 = vmatpush1.msra.mxu0 0.0
    %1552 = vmatprep.subr.mxu0 0.0
    %1553 = vmatpush1.msra.mxu0 0.0
    %1554 = vmatprep.mubr.f32.mxu0 0.0
    %1555 = vmatmul.mubr.f32.gmra.mrb[0].mxu0 %v1411
    %v1556 = vpop.f32.mrb[0].mxu0
    %v1557 = vadd.f32 0.0, %v1556
    %v1558 = vpop.f32.mrb[0].mxu0
    %v1559 = vadd.f32 0.0, %v1558
    %1560 = vdwg.mxu0
    %v1561 = vadd.f32 %v1415, %v1486
    %v1562 = vadd.f32 %v1416, %v1488
    %v1563 = vadd.f32 %v1417, %v1557
    %v1564 = vadd.f32 %v1418, %v1559
    %v1565 = vxor.u32 %v1561, 2147483648
    %v1566 = vmul.f32 %v1565, 1.442695
    %v1567 = vpow.pop %v1566
    %v1568 = vadd.f32 %v1567, 1.0
    %v1569 = vrcp.pop %v1568
    %v1570 = vmul.f32 1.0, %v1569
    %v1571 = vxor.u32 %v1562, 2147483648
    %v1572 = vmul.f32 %v1571, 1.442695
    %v1573 = vpow.pop %v1572
    %v1574 = vadd.f32 %v1573, 1.0
    %v1575 = vrcp.pop %v1574
    %v1576 = vmul.f32 1.0, %v1575
    %v1577 = vtanh.pop %v1563
    %v1578 = vxor.u32 %v1564, 2147483648
    %v1579 = vmul.f32 %v1578, 1.442695
    %v1580 = vpow.pop %v1579
    %v1581 = vadd.f32 %v1580, 1.0
    %v1582 = vrcp.pop %v1581
    %v1583 = vmul.f32 1.0, %v1582
    %v1584 = vmul.f32 %v1576, %v1409
    %v1585 = vmul.f32 %v1570, %v1577
    %v1586 = vadd.f32 %v1584, %v1585
    %v1587 = vtanh.pop %v1586
    %v1588 = vmul.f32 %v1583, %v1587
    %s1589 = scalar_lea.vmem [#allocation3], 40
    %1590 = vst [vmem:[%s1589] sm:$0xff] %v1588
    %s1591 = scalar_lea.vmem [#allocation2], 192
    %v1592 = vld [vmem:[%s1591] sm:$0xff]
    %v1593 = vld [vmem:[%s1591 + $0x8] sm:$0xff]
    %v1594 = vld [vmem:[%s1591 + $0x10] sm:$0xff]
    %v1595 = vld [vmem:[%s1591 + $0x18] sm:$0xff]
    %1596 = vmatprep.subr.mxu0 %v180
    %1597 = vmatpush1.msra.mxu0 %v179
    %1598 = vmatprep.subr.mxu0 %v184
    %1599 = vmatpush1.msra.mxu0 %v183
    %1600 = vmatprep.subr.mxu0 %v188
    %1601 = vmatpush1.msra.mxu0 %v187
    %1602 = vmatprep.subr.mxu0 %v192
    %1603 = vmatpush1.msra.mxu0 %v191
    %1604 = vmatprep.subr.mxu0 %v196
    %1605 = vmatpush1.msra.mxu0 %v195
    %1606 = vmatprep.subr.mxu0 %v200
    %1607 = vmatpush1.msra.mxu0 %v199
    %1608 = vmatprep.subr.mxu0 %v204
    %1609 = vmatpush1.msra.mxu0 %v203
    %1610 = vmatprep.subr.mxu0 %v208
    %1611 = vmatpush1.msra.mxu0 %v207
    %1612 = vmatprep.subr.mxu0 %v212
    %1613 = vmatpush1.msra.mxu0 %v211
    %1614 = vmatprep.subr.mxu0 %v216
    %1615 = vmatpush1.msra.mxu0 %v215
    %1616 = vmatprep.subr.mxu0 %v220
    %1617 = vmatpush1.msra.mxu0 %v219
    %1618 = vmatprep.subr.mxu0 %v224
    %1619 = vmatpush1.msra.mxu0 %v223
    %1620 = vmatprep.subr.mxu0 %v228
    %1621 = vmatpush1.msra.mxu0 %v227
    %1622 = vmatprep.subr.mxu0 %v232
    %1623 = vmatpush1.msra.mxu0 %v231
    %1624 = vmatprep.subr.mxu0 %v236
    %1625 = vmatpush1.msra.mxu0 %v235
    %1626 = vmatprep.subr.mxu0 %v240
    %1627 = vmatpush1.msra.mxu0 %v239
    %1628 = vmatprep.subr.mxu0 0.0
    %1629 = vmatpush1.msra.mxu0 0.0
    %1630 = vmatprep.subr.mxu0 0.0
    %1631 = vmatpush1.msra.mxu0 0.0
    %1632 = vmatprep.subr.mxu0 0.0
    %1633 = vmatpush1.msra.mxu0 0.0
    %1634 = vmatprep.subr.mxu0 0.0
    %1635 = vmatpush1.msra.mxu0 0.0
    %1636 = vmatprep.subr.mxu0 0.0
    %1637 = vmatpush1.msra.mxu0 0.0
    %1638 = vmatprep.subr.mxu0 0.0
    %1639 = vmatpush1.msra.mxu0 0.0
    %1640 = vmatprep.subr.mxu0 0.0
    %1641 = vmatpush1.msra.mxu0 0.0
    %1642 = vmatprep.subr.mxu0 0.0
    %1643 = vmatpush1.msra.mxu0 0.0
    %1644 = vmatprep.subr.mxu0 0.0
    %1645 = vmatpush1.msra.mxu0 0.0
    %1646 = vmatprep.subr.mxu0 0.0
    %1647 = vmatpush1.msra.mxu0 0.0
    %1648 = vmatprep.subr.mxu0 0.0
    %1649 = vmatpush1.msra.mxu0 0.0
    %1650 = vmatprep.subr.mxu0 0.0
    %1651 = vmatpush1.msra.mxu0 0.0
    %1652 = vmatprep.subr.mxu0 0.0
    %1653 = vmatpush1.msra.mxu0 0.0
    %1654 = vmatprep.subr.mxu0 0.0
    %1655 = vmatpush1.msra.mxu0 0.0
    %1656 = vmatprep.subr.mxu0 0.0
    %1657 = vmatpush1.msra.mxu0 0.0
    %1658 = vmatprep.subr.mxu0 0.0
    %1659 = vmatpush1.msra.mxu0 0.0
    %1660 = vmatprep.mubr.f32.mxu0 0.0
    %1661 = vmatmul.mubr.f32.gmra.mrb[0].mxu0 %v1588
    %v1662 = vpop.f32.mrb[0].mxu0
    %v1663 = vadd.f32 0.0, %v1662
    %v1664 = vpop.f32.mrb[0].mxu0
    %v1665 = vadd.f32 0.0, %v1664
    %1666 = vdwg.mxu0
    %1667 = vmatprep.subr.mxu0 %v182
    %1668 = vmatpush1.msra.mxu0 %v181
    %1669 = vmatprep.subr.mxu0 %v186
    %1670 = vmatpush1.msra.mxu0 %v185
    %1671 = vmatprep.subr.mxu0 %v190
    %1672 = vmatpush1.msra.mxu0 %v189
    %1673 = vmatprep.subr.mxu0 %v194
    %1674 = vmatpush1.msra.mxu0 %v193
    %1675 = vmatprep.subr.mxu0 %v198
    %1676 = vmatpush1.msra.mxu0 %v197
    %1677 = vmatprep.subr.mxu0 %v202
    %1678 = vmatpush1.msra.mxu0 %v201
    %1679 = vmatprep.subr.mxu0 %v206
    %1680 = vmatpush1.msra.mxu0 %v205
    %1681 = vmatprep.subr.mxu0 %v210
    %1682 = vmatpush1.msra.mxu0 %v209
    %1683 = vmatprep.subr.mxu0 %v214
    %1684 = vmatpush1.msra.mxu0 %v213
    %1685 = vmatprep.subr.mxu0 %v218
    %1686 = vmatpush1.msra.mxu0 %v217
    %1687 = vmatprep.subr.mxu0 %v222
    %1688 = vmatpush1.msra.mxu0 %v221
    %1689 = vmatprep.subr.mxu0 %v226
    %1690 = vmatpush1.msra.mxu0 %v225
    %1691 = vmatprep.subr.mxu0 %v230
    %1692 = vmatpush1.msra.mxu0 %v229
    %1693 = vmatprep.subr.mxu0 %v234
    %1694 = vmatpush1.msra.mxu0 %v233
    %1695 = vmatprep.subr.mxu0 %v238
    %1696 = vmatpush1.msra.mxu0 %v237
    %1697 = vmatprep.subr.mxu0 %v242
    %1698 = vmatpush1.msra.mxu0 %v241
    %1699 = vmatprep.subr.mxu0 0.0
    %1700 = vmatpush1.msra.mxu0 0.0
    %1701 = vmatprep.subr.mxu0 0.0
    %1702 = vmatpush1.msra.mxu0 0.0
    %1703 = vmatprep.subr.mxu0 0.0
    %1704 = vmatpush1.msra.mxu0 0.0
    %1705 = vmatprep.subr.mxu0 0.0
    %1706 = vmatpush1.msra.mxu0 0.0
    %1707 = vmatprep.subr.mxu0 0.0
    %1708 = vmatpush1.msra.mxu0 0.0
    %1709 = vmatprep.subr.mxu0 0.0
    %1710 = vmatpush1.msra.mxu0 0.0
    %1711 = vmatprep.subr.mxu0 0.0
    %1712 = vmatpush1.msra.mxu0 0.0
    %1713 = vmatprep.subr.mxu0 0.0
    %1714 = vmatpush1.msra.mxu0 0.0
    %1715 = vmatprep.subr.mxu0 0.0
    %1716 = vmatpush1.msra.mxu0 0.0
    %1717 = vmatprep.subr.mxu0 0.0
    %1718 = vmatpush1.msra.mxu0 0.0
    %1719 = vmatprep.subr.mxu0 0.0
    %1720 = vmatpush1.msra.mxu0 0.0
    %1721 = vmatprep.subr.mxu0 0.0
    %1722 = vmatpush1.msra.mxu0 0.0
    %1723 = vmatprep.subr.mxu0 0.0
    %1724 = vmatpush1.msra.mxu0 0.0
    %1725 = vmatprep.subr.mxu0 0.0
    %1726 = vmatpush1.msra.mxu0 0.0
    %1727 = vmatprep.subr.mxu0 0.0
    %1728 = vmatpush1.msra.mxu0 0.0
    %1729 = vmatprep.subr.mxu0 0.0
    %1730 = vmatpush1.msra.mxu0 0.0
    %1731 = vmatprep.mubr.f32.mxu0 0.0
    %1732 = vmatmul.mubr.f32.gmra.mrb[0].mxu0 %v1588
    %v1733 = vpop.f32.mrb[0].mxu0
    %v1734 = vadd.f32 0.0, %v1733
    %v1735 = vpop.f32.mrb[0].mxu0
    %v1736 = vadd.f32 0.0, %v1735
    %1737 = vdwg.mxu0
    %v1738 = vadd.f32 %v1592, %v1663
    %v1739 = vadd.f32 %v1593, %v1665
    %v1740 = vadd.f32 %v1594, %v1734
    %v1741 = vadd.f32 %v1595, %v1736
    %v1742 = vxor.u32 %v1738, 2147483648
    %v1743 = vmul.f32 %v1742, 1.442695
    %v1744 = vpow.pop %v1743
    %v1745 = vadd.f32 %v1744, 1.0
    %v1746 = vrcp.pop %v1745
    %v1747 = vmul.f32 1.0, %v1746
    %v1748 = vxor.u32 %v1739, 2147483648
    %v1749 = vmul.f32 %v1748, 1.442695
    %v1750 = vpow.pop %v1749
    %v1751 = vadd.f32 %v1750, 1.0
    %v1752 = vrcp.pop %v1751
    %v1753 = vmul.f32 1.0, %v1752
    %v1754 = vtanh.pop %v1740
    %v1755 = vxor.u32 %v1741, 2147483648
    %v1756 = vmul.f32 %v1755, 1.442695
    %v1757 = vpow.pop %v1756
    %v1758 = vadd.f32 %v1757, 1.0
    %v1759 = vrcp.pop %v1758
    %v1760 = vmul.f32 1.0, %v1759
    %v1761 = vmul.f32 %v1753, %v1586
    %v1762 = vmul.f32 %v1747, %v1754
    %v1763 = vadd.f32 %v1761, %v1762
    %v1764 = vtanh.pop %v1763
    %v1765 = vmul.f32 %v1760, %v1764
    %s1766 = scalar_lea.vmem [#allocation3], 48
    %1767 = vst [vmem:[%s1766] sm:$0xff] %v1765
    %s1768 = scalar_lea.vmem [#allocation2], 224
    %v1769 = vld [vmem:[%s1768] sm:$0xff]
    %v1770 = vld [vmem:[%s1768 + $0x8] sm:$0xff]
    %v1771 = vld [vmem:[%s1768 + $0x10] sm:$0xff]
    %v1772 = vld [vmem:[%s1768 + $0x18] sm:$0xff]
    %1773 = vmatprep.subr.mxu0 %v180
    %1774 = vmatpush1.msra.mxu0 %v179
    %1775 = vmatprep.subr.mxu0 %v184
    %1776 = vmatpush1.msra.mxu0 %v183
    %1777 = vmatprep.subr.mxu0 %v188
    %1778 = vmatpush1.msra.mxu0 %v187
    %1779 = vmatprep.subr.mxu0 %v192
    %1780 = vmatpush1.msra.mxu0 %v191
    %1781 = vmatprep.subr.mxu0 %v196
    %1782 = vmatpush1.msra.mxu0 %v195
    %1783 = vmatprep.subr.mxu0 %v200
    %1784 = vmatpush1.msra.mxu0 %v199
    %1785 = vmatprep.subr.mxu0 %v204
    %1786 = vmatpush1.msra.mxu0 %v203
    %1787 = vmatprep.subr.mxu0 %v208
    %1788 = vmatpush1.msra.mxu0 %v207
    %1789 = vmatprep.subr.mxu0 %v212
    %1790 = vmatpush1.msra.mxu0 %v211
    %1791 = vmatprep.subr.mxu0 %v216
    %1792 = vmatpush1.msra.mxu0 %v215
    %1793 = vmatprep.subr.mxu0 %v220
    %1794 = vmatpush1.msra.mxu0 %v219
    %1795 = vmatprep.subr.mxu0 %v224
    %1796 = vmatpush1.msra.mxu0 %v223
    %1797 = vmatprep.subr.mxu0 %v228
    %1798 = vmatpush1.msra.mxu0 %v227
    %1799 = vmatprep.subr.mxu0 %v232
    %1800 = vmatpush1.msra.mxu0 %v231
    %1801 = vmatprep.subr.mxu0 %v236
    %1802 = vmatpush1.msra.mxu0 %v235
    %1803 = vmatprep.subr.mxu0 %v240
    %1804 = vmatpush1.msra.mxu0 %v239
    %1805 = vmatprep.subr.mxu0 0.0
    %1806 = vmatpush1.msra.mxu0 0.0
    %1807 = vmatprep.subr.mxu0 0.0
    %1808 = vmatpush1.msra.mxu0 0.0
    %1809 = vmatprep.subr.mxu0 0.0
    %1810 = vmatpush1.msra.mxu0 0.0
    %1811 = vmatprep.subr.mxu0 0.0
    %1812 = vmatpush1.msra.mxu0 0.0
    %1813 = vmatprep.subr.mxu0 0.0
    %1814 = vmatpush1.msra.mxu0 0.0
    %1815 = vmatprep.subr.mxu0 0.0
    %1816 = vmatpush1.msra.mxu0 0.0
    %1817 = vmatprep.subr.mxu0 0.0
    %1818 = vmatpush1.msra.mxu0 0.0
    %1819 = vmatprep.subr.mxu0 0.0
    %1820 = vmatpush1.msra.mxu0 0.0
    %1821 = vmatprep.subr.mxu0 0.0
    %1822 = vmatpush1.msra.mxu0 0.0
    %1823 = vmatprep.subr.mxu0 0.0
    %1824 = vmatpush1.msra.mxu0 0.0
    %1825 = vmatprep.subr.mxu0 0.0
    %1826 = vmatpush1.msra.mxu0 0.0
    %1827 = vmatprep.subr.mxu0 0.0
    %1828 = vmatpush1.msra.mxu0 0.0
    %1829 = vmatprep.subr.mxu0 0.0
    %1830 = vmatpush1.msra.mxu0 0.0
    %1831 = vmatprep.subr.mxu0 0.0
    %1832 = vmatpush1.msra.mxu0 0.0
    %1833 = vmatprep.subr.mxu0 0.0
    %1834 = vmatpush1.msra.mxu0 0.0
    %1835 = vmatprep.subr.mxu0 0.0
    %1836 = vmatpush1.msra.mxu0 0.0
    %1837 = vmatprep.mubr.f32.mxu0 0.0
    %1838 = vmatmul.mubr.f32.gmra.mrb[0].mxu0 %v1765
    %v1839 = vpop.f32.mrb[0].mxu0
    %v1840 = vadd.f32 0.0, %v1839
    %v1841 = vpop.f32.mrb[0].mxu0
    %v1842 = vadd.f32 0.0, %v1841
    %1843 = vdwg.mxu0
    %1844 = vmatprep.subr.mxu0 %v182
    %1845 = vmatpush1.msra.mxu0 %v181
    %1846 = vmatprep.subr.mxu0 %v186
    %1847 = vmatpush1.msra.mxu0 %v185
    %1848 = vmatprep.subr.mxu0 %v190
    %1849 = vmatpush1.msra.mxu0 %v189
    %1850 = vmatprep.subr.mxu0 %v194
    %1851 = vmatpush1.msra.mxu0 %v193
    %1852 = vmatprep.subr.mxu0 %v198
    %1853 = vmatpush1.msra.mxu0 %v197
    %1854 = vmatprep.subr.mxu0 %v202
    %1855 = vmatpush1.msra.mxu0 %v201
    %1856 = vmatprep.subr.mxu0 %v206
    %1857 = vmatpush1.msra.mxu0 %v205
    %1858 = vmatprep.subr.mxu0 %v210
    %1859 = vmatpush1.msra.mxu0 %v209
    %1860 = vmatprep.subr.mxu0 %v214
    %1861 = vmatpush1.msra.mxu0 %v213
    %1862 = vmatprep.subr.mxu0 %v218
    %1863 = vmatpush1.msra.mxu0 %v217
    %1864 = vmatprep.subr.mxu0 %v222
    %1865 = vmatpush1.msra.mxu0 %v221
    %1866 = vmatprep.subr.mxu0 %v226
    %1867 = vmatpush1.msra.mxu0 %v225
    %1868 = vmatprep.subr.mxu0 %v230
    %1869 = vmatpush1.msra.mxu0 %v229
    %1870 = vmatprep.subr.mxu0 %v234
    %1871 = vmatpush1.msra.mxu0 %v233
    %1872 = vmatprep.subr.mxu0 %v238
    %1873 = vmatpush1.msra.mxu0 %v237
    %1874 = vmatprep.subr.mxu0 %v242
    %1875 = vmatpush1.msra.mxu0 %v241
    %1876 = vmatprep.subr.mxu0 0.0
    %1877 = vmatpush1.msra.mxu0 0.0
    %1878 = vmatprep.subr.mxu0 0.0
    %1879 = vmatpush1.msra.mxu0 0.0
    %1880 = vmatprep.subr.mxu0 0.0
    %1881 = vmatpush1.msra.mxu0 0.0
    %1882 = vmatprep.subr.mxu0 0.0
    %1883 = vmatpush1.msra.mxu0 0.0
    %1884 = vmatprep.subr.mxu0 0.0
    %1885 = vmatpush1.msra.mxu0 0.0
    %1886 = vmatprep.subr.mxu0 0.0
    %1887 = vmatpush1.msra.mxu0 0.0
    %1888 = vmatprep.subr.mxu0 0.0
    %1889 = vmatpush1.msra.mxu0 0.0
    %1890 = vmatprep.subr.mxu0 0.0
    %1891 = vmatpush1.msra.mxu0 0.0
    %1892 = vmatprep.subr.mxu0 0.0
    %1893 = vmatpush1.msra.mxu0 0.0
    %1894 = vmatprep.subr.mxu0 0.0
    %1895 = vmatpush1.msra.mxu0 0.0
    %1896 = vmatprep.subr.mxu0 0.0
    %1897 = vmatpush1.msra.mxu0 0.0
    %1898 = vmatprep.subr.mxu0 0.0
    %1899 = vmatpush1.msra.mxu0 0.0
    %1900 = vmatprep.subr.mxu0 0.0
    %1901 = vmatpush1.msra.mxu0 0.0
    %1902 = vmatprep.subr.mxu0 0.0
    %1903 = vmatpush1.msra.mxu0 0.0
    %1904 = vmatprep.subr.mxu0 0.0
    %1905 = vmatpush1.msra.mxu0 0.0
    %1906 = vmatprep.subr.mxu0 0.0
    %1907 = vmatpush1.msra.mxu0 0.0
    %1908 = vmatprep.mubr.f32.mxu0 0.0
    %1909 = vmatmul.mubr.f32.gmra.mrb[0].mxu0 %v1765
    %v1910 = vpop.f32.mrb[0].mxu0
    %v1911 = vadd.f32 0.0, %v1910
    %v1912 = vpop.f32.mrb[0].mxu0
    %v1913 = vadd.f32 0.0, %v1912
    %1914 = vdwg.mxu0
    %v1915 = vadd.f32 %v1769, %v1840
    %v1916 = vadd.f32 %v1770, %v1842
    %v1917 = vadd.f32 %v1771, %v1911
    %v1918 = vadd.f32 %v1772, %v1913
    %v1919 = vxor.u32 %v1915, 2147483648
    %v1920 = vmul.f32 %v1919, 1.442695
    %v1921 = vpow.pop %v1920
    %v1922 = vadd.f32 %v1921, 1.0
    %v1923 = vrcp.pop %v1922
    %v1924 = vmul.f32 1.0, %v1923
    %v1925 = vxor.u32 %v1916, 2147483648
    %v1926 = vmul.f32 %v1925, 1.442695
    %v1927 = vpow.pop %v1926
    %v1928 = vadd.f32 %v1927, 1.0
    %v1929 = vrcp.pop %v1928
    %v1930 = vmul.f32 1.0, %v1929
    %v1931 = vtanh.pop %v1917
    %v1932 = vxor.u32 %v1918, 2147483648
    %v1933 = vmul.f32 %v1932, 1.442695
    %v1934 = vpow.pop %v1933
    %v1935 = vadd.f32 %v1934, 1.0
    %v1936 = vrcp.pop %v1935
    %v1937 = vmul.f32 1.0, %v1936
    %v1938 = vmul.f32 %v1930, %v1763
    %v1939 = vmul.f32 %v1924, %v1931
    %v1940 = vadd.f32 %v1938, %v1939
    %v1941 = vtanh.pop %v1940
    %v1942 = vmul.f32 %v1937, %v1941
    %s1943 = scalar_lea.vmem [#allocation3], 56
    %1944 = vst [vmem:[%s1943] sm:$0xff] %v1942
    %v1945 = vld [vmem:[#allocation10] sm:$0xff]
    %v1946 = vld [vmem:[#allocation10 + $0x8] sm:$0xff]
    %v1947 = vld [vmem:[#allocation10 + $0x10] sm:$0xff]
    %v1948 = vld [vmem:[#allocation10 + $0x18] sm:$0xff]
    %v1949 = vld [vmem:[#allocation10 + $0x20] sm:$0xff]
    %v1950 = vld [vmem:[#allocation10 + $0x28] sm:$0xff]
    %v1951 = vld [vmem:[#allocation10 + $0x30] sm:$0xff]
    %v1952 = vld [vmem:[#allocation10 + $0x38] sm:$0xff]
    %v1953 = vld [vmem:[#allocation10 + $0x40] sm:$0xff]
    %v1954 = vld [vmem:[#allocation10 + $0x48] sm:$0xff]
    %v1955 = vld [vmem:[#allocation10 + $0x50] sm:$0xff]
    %v1956 = vld [vmem:[#allocation10 + $0x58] sm:$0xff]
    %v1957 = vld [vmem:[#allocation10 + $0x60] sm:$0xff]
    %v1958 = vld [vmem:[#allocation10 + $0x68] sm:$0xff]
    %v1959 = vld [vmem:[#allocation10 + $0x70] sm:$0xff]
    %v1960 = vld [vmem:[#allocation10 + $0x78] sm:$0xff]
    %v1961 = vld [vmem:[#allocation10 + $0x80] sm:$0xff]
    %v1962 = vld [vmem:[#allocation10 + $0x88] sm:$0xff]
    %v1963 = vld [vmem:[#allocation10 + $0x90] sm:$0xff]
    %v1964 = vld [vmem:[#allocation10 + $0x98] sm:$0xff]
    %v1965 = vld [vmem:[#allocation10 + $0xa0] sm:$0xff]
    %v1966 = vld [vmem:[#allocation10 + $0xa8] sm:$0xff]
    %v1967 = vld [vmem:[#allocation10 + $0xb0] sm:$0xff]
    %v1968 = vld [vmem:[#allocation10 + $0xb8] sm:$0xff]
    %v1969 = vld [vmem:[#allocation10 + $0xc0] sm:$0xff]
    %v1970 = vld [vmem:[#allocation10 + $0xc8] sm:$0xff]
    %v1971 = vld [vmem:[#allocation10 + $0xd0] sm:$0xff]
    %v1972 = vld [vmem:[#allocation10 + $0xd8] sm:$0xff]
    %v1973 = vld [vmem:[#allocation10 + $0xe0] sm:$0xff]
    %v1974 = vld [vmem:[#allocation10 + $0xe8] sm:$0xff]
    %v1975 = vld [vmem:[#allocation10 + $0xf0] sm:$0xff]
    %v1976 = vld [vmem:[#allocation10 + $0xf8] sm:$0xff]
    %v1977 = vld [vmem:[#allocation10 + $0x100] sm:$0xff]
    %v1978 = vld [vmem:[#allocation10 + $0x108] sm:$0xff]
    %v1979 = vld [vmem:[#allocation10 + $0x110] sm:$0xff]
    %v1980 = vld [vmem:[#allocation10 + $0x118] sm:$0xff]
    %v1981 = vld [vmem:[#allocation10 + $0x120] sm:$0xff]
    %v1982 = vld [vmem:[#allocation10 + $0x128] sm:$0xff]
    %v1983 = vld [vmem:[#allocation10 + $0x130] sm:$0xff]
    %v1984 = vld [vmem:[#allocation10 + $0x138] sm:$0xff]
    %v1985 = vld [vmem:[#allocation10 + $0x140] sm:$0xff]
    %v1986 = vld [vmem:[#allocation10 + $0x148] sm:$0xff]
    %v1987 = vld [vmem:[#allocation10 + $0x150] sm:$0xff]
    %v1988 = vld [vmem:[#allocation10 + $0x158] sm:$0xff]
    %v1989 = vld [vmem:[#allocation10 + $0x160] sm:$0xff]
    %v1990 = vld [vmem:[#allocation10 + $0x168] sm:$0xff]
    %v1991 = vld [vmem:[#allocation10 + $0x170] sm:$0xff]
    %v1992 = vld [vmem:[#allocation10 + $0x178] sm:$0xff]
    %v1993 = vld [vmem:[#allocation10 + $0x180] sm:$0xff]
    %v1994 = vld [vmem:[#allocation10 + $0x188] sm:$0xff]
    %v1995 = vld [vmem:[#allocation10 + $0x190] sm:$0xff]
    %v1996 = vld [vmem:[#allocation10 + $0x198] sm:$0xff]
    %v1997 = vld [vmem:[#allocation10 + $0x1a0] sm:$0xff]
    %v1998 = vld [vmem:[#allocation10 + $0x1a8] sm:$0xff]
    %v1999 = vld [vmem:[#allocation10 + $0x1b0] sm:$0xff]
    %v2000 = vld [vmem:[#allocation10 + $0x1b8] sm:$0xff]
    %v2001 = vld [vmem:[#allocation10 + $0x1c0] sm:$0xff]
    %v2002 = vld [vmem:[#allocation10 + $0x1c8] sm:$0xff]
    %v2003 = vld [vmem:[#allocation10 + $0x1d0] sm:$0xff]
    %v2004 = vld [vmem:[#allocation10 + $0x1d8] sm:$0xff]
    %v2005 = vld [vmem:[#allocation10 + $0x1e0] sm:$0xff]
    %v2006 = vld [vmem:[#allocation10 + $0x1e8] sm:$0xff]
    %v2007 = vld [vmem:[#allocation10 + $0x1f0] sm:$0xff]
    %v2008 = vld [vmem:[#allocation10 + $0x1f8] sm:$0xff]
    %v2009 = vld [vmem:[#allocation12] sm:$0xff]
    %v2010 = vld [vmem:[#allocation12 + $0x8] sm:$0xff]
    %v2011 = vld [vmem:[#allocation12 + $0x10] sm:$0xff]
    %v2012 = vld [vmem:[#allocation12 + $0x18] sm:$0xff]
    %v2013 = vld [vmem:[#allocation12 + $0x20] sm:$0xff]
    %v2014 = vld [vmem:[#allocation12 + $0x28] sm:$0xff]
    %v2015 = vld [vmem:[#allocation12 + $0x30] sm:$0xff]
    %v2016 = vld [vmem:[#allocation12 + $0x38] sm:$0xff]
    %v2017 = vld [vmem:[#allocation12 + $0x40] sm:$0xff]
    %v2018 = vld [vmem:[#allocation12 + $0x48] sm:$0xff]
    %v2019 = vld [vmem:[#allocation12 + $0x50] sm:$0xff]
    %v2020 = vld [vmem:[#allocation12 + $0x58] sm:$0xff]
    %v2021 = vld [vmem:[#allocation12 + $0x60] sm:$0xff]
    %v2022 = vld [vmem:[#allocation12 + $0x68] sm:$0xff]
    %v2023 = vld [vmem:[#allocation12 + $0x70] sm:$0xff]
    %v2024 = vld [vmem:[#allocation12 + $0x78] sm:$0xff]
    %v2025 = vld [vmem:[#allocation12 + $0x80] sm:$0xff]
    %v2026 = vld [vmem:[#allocation12 + $0x88] sm:$0xff]
    %v2027 = vld [vmem:[#allocation12 + $0x90] sm:$0xff]
    %v2028 = vld [vmem:[#allocation12 + $0x98] sm:$0xff]
    %v2029 = vld [vmem:[#allocation12 + $0xa0] sm:$0xff]
    %v2030 = vld [vmem:[#allocation12 + $0xa8] sm:$0xff]
    %v2031 = vld [vmem:[#allocation12 + $0xb0] sm:$0xff]
    %v2032 = vld [vmem:[#allocation12 + $0xb8] sm:$0xff]
    %v2033 = vld [vmem:[#allocation12 + $0xc0] sm:$0xff]
    %v2034 = vld [vmem:[#allocation12 + $0xc8] sm:$0xff]
    %v2035 = vld [vmem:[#allocation12 + $0xd0] sm:$0xff]
    %v2036 = vld [vmem:[#allocation12 + $0xd8] sm:$0xff]
    %v2037 = vld [vmem:[#allocation12 + $0xe0] sm:$0xff]
    %v2038 = vld [vmem:[#allocation12 + $0xe8] sm:$0xff]
    %v2039 = vld [vmem:[#allocation12 + $0xf0] sm:$0xff]
    %v2040 = vld [vmem:[#allocation12 + $0xf8] sm:$0xff]
    %v2041 = vld [vmem:[#allocation12 + $0x100] sm:$0xff]
    %v2042 = vld [vmem:[#allocation12 + $0x108] sm:$0xff]
    %v2043 = vld [vmem:[#allocation12 + $0x110] sm:$0xff]
    %v2044 = vld [vmem:[#allocation12 + $0x118] sm:$0xff]
    %v2045 = vld [vmem:[#allocation12 + $0x120] sm:$0xff]
    %v2046 = vld [vmem:[#allocation12 + $0x128] sm:$0xff]
    %v2047 = vld [vmem:[#allocation12 + $0x130] sm:$0xff]
    %v2048 = vld [vmem:[#allocation12 + $0x138] sm:$0xff]
    %v2049 = vld [vmem:[#allocation12 + $0x140] sm:$0xff]
    %v2050 = vld [vmem:[#allocation12 + $0x148] sm:$0xff]
    %v2051 = vld [vmem:[#allocation12 + $0x150] sm:$0xff]
    %v2052 = vld [vmem:[#allocation12 + $0x158] sm:$0xff]
    %v2053 = vld [vmem:[#allocation12 + $0x160] sm:$0xff]
    %v2054 = vld [vmem:[#allocation12 + $0x168] sm:$0xff]
    %v2055 = vld [vmem:[#allocation12 + $0x170] sm:$0xff]
    %v2056 = vld [vmem:[#allocation12 + $0x178] sm:$0xff]
    %v2057 = vld [vmem:[#allocation12 + $0x180] sm:$0xff]
    %v2058 = vld [vmem:[#allocation12 + $0x188] sm:$0xff]
    %v2059 = vld [vmem:[#allocation12 + $0x190] sm:$0xff]
    %v2060 = vld [vmem:[#allocation12 + $0x198] sm:$0xff]
    %v2061 = vld [vmem:[#allocation12 + $0x1a0] sm:$0xff]
    %v2062 = vld [vmem:[#allocation12 + $0x1a8] sm:$0xff]
    %v2063 = vld [vmem:[#allocation12 + $0x1b0] sm:$0xff]
    %v2064 = vld [vmem:[#allocation12 + $0x1b8] sm:$0xff]
    %v2065 = vld [vmem:[#allocation12 + $0x1c0] sm:$0xff]
    %v2066 = vld [vmem:[#allocation12 + $0x1c8] sm:$0xff]
    %v2067 = vld [vmem:[#allocation12 + $0x1d0] sm:$0xff]
    %v2068 = vld [vmem:[#allocation12 + $0x1d8] sm:$0xff]
    %v2069 = vld [vmem:[#allocation12 + $0x1e0] sm:$0xff]
    %v2070 = vld [vmem:[#allocation12 + $0x1e8] sm:$0xff]
    %v2071 = vld [vmem:[#allocation12 + $0x1f0] sm:$0xff]
    %v2072 = vld [vmem:[#allocation12 + $0x1f8] sm:$0xff]
    %v2073 = vld [vmem:[%s6] sm:$0xf]
    %v2074 = vld [vmem:[#allocation3] sm:$0xff]
    %v2075 = vld [vmem:[#allocation3 + $0x8] sm:$0xff]
    %v2076 = vld [vmem:[#allocation3 + $0x10] sm:$0xff]
    %v2077 = vld [vmem:[#allocation3 + $0x18] sm:$0xff]
    %v2078 = vld [vmem:[#allocation3 + $0x20] sm:$0xff]
    %v2079 = vld [vmem:[#allocation3 + $0x28] sm:$0xff]
    %v2080 = vld [vmem:[#allocation3 + $0x30] sm:$0xff]
    %v2081 = vld [vmem:[#allocation3 + $0x38] sm:$0xff]
    %v2083 = vlaneseq
    %v2084 = vshrl.u32 %v2083, 7
    %v2085 = vsub.s32 0, %v2084
    %v2086 = vrot.slane %v2073, %v2085
    %v2087 = vlaneseq
    %v2088 = vshrl.u32 %v2087, 7
    %v2089 = vsub.s32 1, %v2088
    %v2090 = vrot.slane %v2073, %v2089
    %v2091 = vlaneseq
    %v2092 = vshrl.u32 %v2091, 7
    %v2093 = vsub.s32 2, %v2092
    %v2094 = vrot.slane %v2073, %v2093
    %v2095 = vlaneseq
    %v2096 = vshrl.u32 %v2095, 7
    %v2097 = vsub.s32 3, %v2096
    %v2098 = vrot.slane %v2073, %v2097
    %2103 = vmatprep.subr.mxu0 %v1946
    %2104 = vmatpush1.msra.mxu0 %v1945
    %2105 = vmatprep.subr.mxu0 %v1950
    %2106 = vmatpush1.msra.mxu0 %v1949
    %2107 = vmatprep.subr.mxu0 %v1954
    %2108 = vmatpush1.msra.mxu0 %v1953
    %2109 = vmatprep.subr.mxu0 %v1958
    %2110 = vmatpush1.msra.mxu0 %v1957
    %2111 = vmatprep.subr.mxu0 %v1962
    %2112 = vmatpush1.msra.mxu0 %v1961
    %2113 = vmatprep.subr.mxu0 %v1966
    %2114 = vmatpush1.msra.mxu0 %v1965
    %2115 = vmatprep.subr.mxu0 %v1970
    %2116 = vmatpush1.msra.mxu0 %v1969
    %2117 = vmatprep.subr.mxu0 %v1974
    %2118 = vmatpush1.msra.mxu0 %v1973
    %2119 = vmatprep.subr.mxu0 %v1978
    %2120 = vmatpush1.msra.mxu0 %v1977
    %2121 = vmatprep.subr.mxu0 %v1982
    %2122 = vmatpush1.msra.mxu0 %v1981
    %2123 = vmatprep.subr.mxu0 %v1986
    %2124 = vmatpush1.msra.mxu0 %v1985
    %2125 = vmatprep.subr.mxu0 %v1990
    %2126 = vmatpush1.msra.mxu0 %v1989
    %2127 = vmatprep.subr.mxu0 %v1994
    %2128 = vmatpush1.msra.mxu0 %v1993
    %2129 = vmatprep.subr.mxu0 %v1998
    %2130 = vmatpush1.msra.mxu0 %v1997
    %2131 = vmatprep.subr.mxu0 %v2002
    %2132 = vmatpush1.msra.mxu0 %v2001
    %2133 = vmatprep.subr.mxu0 %v2006
    %2134 = vmatpush1.msra.mxu0 %v2005
    %2135 = vmatprep.subr.mxu0 0.0
    %2136 = vmatpush1.msra.mxu0 0.0
    %2137 = vmatprep.subr.mxu0 0.0
    %2138 = vmatpush1.msra.mxu0 0.0
    %2139 = vmatprep.subr.mxu0 0.0
    %2140 = vmatpush1.msra.mxu0 0.0
    %2141 = vmatprep.subr.mxu0 0.0
    %2142 = vmatpush1.msra.mxu0 0.0
    %2143 = vmatprep.subr.mxu0 0.0
    %2144 = vmatpush1.msra.mxu0 0.0
    %2145 = vmatprep.subr.mxu0 0.0
    %2146 = vmatpush1.msra.mxu0 0.0
    %2147 = vmatprep.subr.mxu0 0.0
    %2148 = vmatpush1.msra.mxu0 0.0
    %2149 = vmatprep.subr.mxu0 0.0
    %2150 = vmatpush1.msra.mxu0 0.0
    %2151 = vmatprep.subr.mxu0 0.0
    %2152 = vmatpush1.msra.mxu0 0.0
    %2153 = vmatprep.subr.mxu0 0.0
    %2154 = vmatpush1.msra.mxu0 0.0
    %2155 = vmatprep.subr.mxu0 0.0
    %2156 = vmatpush1.msra.mxu0 0.0
    %2157 = vmatprep.subr.mxu0 0.0
    %2158 = vmatpush1.msra.mxu0 0.0
    %2159 = vmatprep.subr.mxu0 0.0
    %2160 = vmatpush1.msra.mxu0 0.0
    %2161 = vmatprep.subr.mxu0 0.0
    %2162 = vmatpush1.msra.mxu0 0.0
    %2163 = vmatprep.subr.mxu0 0.0
    %2164 = vmatpush1.msra.mxu0 0.0
    %2165 = vmatprep.subr.mxu0 0.0
    %2166 = vmatpush1.msra.mxu0 0.0
    %2167 = vmatprep.mubr.f32.mxu0 0.0
    %2168 = vmatmul.mubr.f32.gmra.mrb[0].mxu0 %v2074
    %v2169 = vpop.f32.mrb[0].mxu0
    %v2170 = vadd.f32 %v2086, %v2169
    %v2171 = vpop.f32.mrb[0].mxu0
    %v2172 = vadd.f32 %v2090, %v2171
    %2173 = vmatprep.mubr.f32.mxu0 0.0
    %2174 = vmatmul.mubr.f32.gmra.mrb[0].mxu0 %v2075
    %v2175 = vpop.f32.mrb[0].mxu0
    %v2176 = vadd.f32 %v2086, %v2175
    %v2177 = vpop.f32.mrb[0].mxu0
    %v2178 = vadd.f32 %v2090, %v2177
    %2179 = vmatprep.mubr.f32.mxu0 0.0
    %2180 = vmatmul.mubr.f32.gmra.mrb[0].mxu0 %v2076
    %v2181 = vpop.f32.mrb[0].mxu0
    %v2182 = vadd.f32 %v2086, %v2181
    %v2183 = vpop.f32.mrb[0].mxu0
    %v2184 = vadd.f32 %v2090, %v2183
    %2185 = vmatprep.mubr.f32.mxu0 0.0
    %2186 = vmatmul.mubr.f32.gmra.mrb[0].mxu0 %v2077
    %v2187 = vpop.f32.mrb[0].mxu0
    %v2188 = vadd.f32 %v2086, %v2187
    %v2189 = vpop.f32.mrb[0].mxu0
    %v2190 = vadd.f32 %v2090, %v2189
    %2191 = vmatprep.mubr.f32.mxu0 0.0
    %2192 = vmatmul.mubr.f32.gmra.mrb[0].mxu0 %v2078
    %v2193 = vpop.f32.mrb[0].mxu0
    %v2194 = vadd.f32 %v2086, %v2193
    %v2195 = vpop.f32.mrb[0].mxu0
    %v2196 = vadd.f32 %v2090, %v2195
    %2197 = vmatprep.mubr.f32.mxu0 0.0
    %2198 = vmatmul.mubr.f32.gmra.mrb[0].mxu0 %v2079
    %v2199 = vpop.f32.mrb[0].mxu0
    %v2200 = vadd.f32 %v2086, %v2199
    %v2201 = vpop.f32.mrb[0].mxu0
    %v2202 = vadd.f32 %v2090, %v2201
    %2203 = vmatprep.mubr.f32.mxu0 0.0
    %2204 = vmatmul.mubr.f32.gmra.mrb[0].mxu0 %v2080
    %v2205 = vpop.f32.mrb[0].mxu0
    %v2206 = vadd.f32 %v2086, %v2205
    %v2207 = vpop.f32.mrb[0].mxu0
    %v2208 = vadd.f32 %v2090, %v2207
    %2209 = vmatprep.mubr.f32.mxu0 0.0
    %2210 = vmatmul.mubr.f32.gmra.mrb[0].mxu0 %v2081
    %v2211 = vpop.f32.mrb[0].mxu0
    %v2212 = vadd.f32 %v2086, %v2211
    %v2213 = vpop.f32.mrb[0].mxu0
    %v2214 = vadd.f32 %v2090, %v2213
    %2215 = vdwg.mxu0
    %2216 = vmatprep.subr.mxu0 %v1948
    %2217 = vmatpush1.msra.mxu0 %v1947
    %2218 = vmatprep.subr.mxu0 %v1952
    %2219 = vmatpush1.msra.mxu0 %v1951
    %2220 = vmatprep.subr.mxu0 %v1956
    %2221 = vmatpush1.msra.mxu0 %v1955
    %2222 = vmatprep.subr.mxu0 %v1960
    %2223 = vmatpush1.msra.mxu0 %v1959
    %2224 = vmatprep.subr.mxu0 %v1964
    %2225 = vmatpush1.msra.mxu0 %v1963
    %2226 = vmatprep.subr.mxu0 %v1968
    %2227 = vmatpush1.msra.mxu0 %v1967
    %2228 = vmatprep.subr.mxu0 %v1972
    %2229 = vmatpush1.msra.mxu0 %v1971
    %2230 = vmatprep.subr.mxu0 %v1976
    %2231 = vmatpush1.msra.mxu0 %v1975
    %2232 = vmatprep.subr.mxu0 %v1980
    %2233 = vmatpush1.msra.mxu0 %v1979
    %2234 = vmatprep.subr.mxu0 %v1984
    %2235 = vmatpush1.msra.mxu0 %v1983
    %2236 = vmatprep.subr.mxu0 %v1988
    %2237 = vmatpush1.msra.mxu0 %v1987
    %2238 = vmatprep.subr.mxu0 %v1992
    %2239 = vmatpush1.msra.mxu0 %v1991
    %2240 = vmatprep.subr.mxu0 %v1996
    %2241 = vmatpush1.msra.mxu0 %v1995
    %2242 = vmatprep.subr.mxu0 %v2000
    %2243 = vmatpush1.msra.mxu0 %v1999
    %2244 = vmatprep.subr.mxu0 %v2004
    %2245 = vmatpush1.msra.mxu0 %v2003
    %2246 = vmatprep.subr.mxu0 %v2008
    %2247 = vmatpush1.msra.mxu0 %v2007
    %2248 = vmatprep.subr.mxu0 0.0
    %2249 = vmatpush1.msra.mxu0 0.0
    %2250 = vmatprep.subr.mxu0 0.0
    %2251 = vmatpush1.msra.mxu0 0.0
    %2252 = vmatprep.subr.mxu0 0.0
    %2253 = vmatpush1.msra.mxu0 0.0
    %2254 = vmatprep.subr.mxu0 0.0
    %2255 = vmatpush1.msra.mxu0 0.0
    %2256 = vmatprep.subr.mxu0 0.0
    %2257 = vmatpush1.msra.mxu0 0.0
    %2258 = vmatprep.subr.mxu0 0.0
    %2259 = vmatpush1.msra.mxu0 0.0
    %2260 = vmatprep.subr.mxu0 0.0
    %2261 = vmatpush1.msra.mxu0 0.0
    %2262 = vmatprep.subr.mxu0 0.0
    %2263 = vmatpush1.msra.mxu0 0.0
    %2264 = vmatprep.subr.mxu0 0.0
    %2265 = vmatpush1.msra.mxu0 0.0
    %2266 = vmatprep.subr.mxu0 0.0
    %2267 = vmatpush1.msra.mxu0 0.0
    %2268 = vmatprep.subr.mxu0 0.0
    %2269 = vmatpush1.msra.mxu0 0.0
    %2270 = vmatprep.subr.mxu0 0.0
    %2271 = vmatpush1.msra.mxu0 0.0
    %2272 = vmatprep.subr.mxu0 0.0
    %2273 = vmatpush1.msra.mxu0 0.0
    %2274 = vmatprep.subr.mxu0 0.0
    %2275 = vmatpush1.msra.mxu0 0.0
    %2276 = vmatprep.subr.mxu0 0.0
    %2277 = vmatpush1.msra.mxu0 0.0
    %2278 = vmatprep.subr.mxu0 0.0
    %2279 = vmatpush1.msra.mxu0 0.0
    %2280 = vmatprep.mubr.f32.mxu0 0.0
    %2281 = vmatmul.mubr.f32.gmra.mrb[0].mxu0 %v2074
    %v2282 = vpop.f32.mrb[0].mxu0
    %v2283 = vadd.f32 %v2094, %v2282
    %v2284 = vpop.f32.mrb[0].mxu0
    %v2285 = vadd.f32 %v2098, %v2284
    %2286 = vmatprep.mubr.f32.mxu0 0.0
    %2287 = vmatmul.mubr.f32.gmra.mrb[0].mxu0 %v2075
    %v2288 = vpop.f32.mrb[0].mxu0
    %v2289 = vadd.f32 %v2094, %v2288
    %v2290 = vpop.f32.mrb[0].mxu0
    %v2291 = vadd.f32 %v2098, %v2290
    %2292 = vmatprep.mubr.f32.mxu0 0.0
    %2293 = vmatmul.mubr.f32.gmra.mrb[0].mxu0 %v2076
    %v2294 = vpop.f32.mrb[0].mxu0
    %v2295 = vadd.f32 %v2094, %v2294
    %v2296 = vpop.f32.mrb[0].mxu0
    %v2297 = vadd.f32 %v2098, %v2296
    %2298 = vmatprep.mubr.f32.mxu0 0.0
    %2299 = vmatmul.mubr.f32.gmra.mrb[0].mxu0 %v2077
    %v2300 = vpop.f32.mrb[0].mxu0
    %v2301 = vadd.f32 %v2094, %v2300
    %v2302 = vpop.f32.mrb[0].mxu0
    %v2303 = vadd.f32 %v2098, %v2302
    %2304 = vmatprep.mubr.f32.mxu0 0.0
    %2305 = vmatmul.mubr.f32.gmra.mrb[0].mxu0 %v2078
    %v2306 = vpop.f32.mrb[0].mxu0
    %v2307 = vadd.f32 %v2094, %v2306
    %v2308 = vpop.f32.mrb[0].mxu0
    %v2309 = vadd.f32 %v2098, %v2308
    %2310 = vmatprep.mubr.f32.mxu0 0.0
    %2311 = vmatmul.mubr.f32.gmra.mrb[0].mxu0 %v2079
    %v2312 = vpop.f32.mrb[0].mxu0
    %v2313 = vadd.f32 %v2094, %v2312
    %v2314 = vpop.f32.mrb[0].mxu0
    %v2315 = vadd.f32 %v2098, %v2314
    %2316 = vmatprep.mubr.f32.mxu0 0.0
    %2317 = vmatmul.mubr.f32.gmra.mrb[0].mxu0 %v2080
    %v2318 = vpop.f32.mrb[0].mxu0
    %v2319 = vadd.f32 %v2094, %v2318
    %v2320 = vpop.f32.mrb[0].mxu0
    %v2321 = vadd.f32 %v2098, %v2320
    %2322 = vmatprep.mubr.f32.mxu0 0.0
    %2323 = vmatmul.mubr.f32.gmra.mrb[0].mxu0 %v2081
    %v2324 = vpop.f32.mrb[0].mxu0
    %v2325 = vadd.f32 %v2094, %v2324
    %v2326 = vpop.f32.mrb[0].mxu0
    %v2327 = vadd.f32 %v2098, %v2326
    %2328 = vdwg.mxu0
    %2329 = vst [vmem:[#allocation2] sm:$0xff] %v2170
    %2330 = vst [vmem:[#allocation2 + $0x8] sm:$0xff] %v2172
    %2331 = vst [vmem:[#allocation2 + $0x10] sm:$0xff] %v2283
    %2332 = vst [vmem:[#allocation2 + $0x18] sm:$0xff] %v2285
    %2333 = vst [vmem:[#allocation2 + $0x20] sm:$0xff] %v2176
    %2334 = vst [vmem:[#allocation2 + $0x28] sm:$0xff] %v2178
    %2335 = vst [vmem:[#allocation2 + $0x30] sm:$0xff] %v2289
    %2336 = vst [vmem:[#allocation2 + $0x38] sm:$0xff] %v2291
    %2337 = vst [vmem:[#allocation2 + $0x40] sm:$0xff] %v2182
    %2338 = vst [vmem:[#allocation2 + $0x48] sm:$0xff] %v2184
    %2339 = vst [vmem:[#allocation2 + $0x50] sm:$0xff] %v2295
    %2340 = vst [vmem:[#allocation2 + $0x58] sm:$0xff] %v2297
    %2341 = vst [vmem:[#allocation2 + $0x60] sm:$0xff] %v2188
    %2342 = vst [vmem:[#allocation2 + $0x68] sm:$0xff] %v2190
    %2343 = vst [vmem:[#allocation2 + $0x70] sm:$0xff] %v2301
    %2344 = vst [vmem:[#allocation2 + $0x78] sm:$0xff] %v2303
    %2345 = vst [vmem:[#allocation2 + $0x80] sm:$0xff] %v2194
    %2346 = vst [vmem:[#allocation2 + $0x88] sm:$0xff] %v2196
    %2347 = vst [vmem:[#allocation2 + $0x90] sm:$0xff] %v2307
    %2348 = vst [vmem:[#allocation2 + $0x98] sm:$0xff] %v2309
    %2349 = vst [vmem:[#allocation2 + $0xa0] sm:$0xff] %v2200
    %2350 = vst [vmem:[#allocation2 + $0xa8] sm:$0xff] %v2202
    %2351 = vst [vmem:[#allocation2 + $0xb0] sm:$0xff] %v2313
    %2352 = vst [vmem:[#allocation2 + $0xb8] sm:$0xff] %v2315
    %2353 = vst [vmem:[#allocation2 + $0xc0] sm:$0xff] %v2206
    %2354 = vst [vmem:[#allocation2 + $0xc8] sm:$0xff] %v2208
    %2355 = vst [vmem:[#allocation2 + $0xd0] sm:$0xff] %v2319
    %2356 = vst [vmem:[#allocation2 + $0xd8] sm:$0xff] %v2321
    %2357 = vst [vmem:[#allocation2 + $0xe0] sm:$0xff] %v2212
    %2358 = vst [vmem:[#allocation2 + $0xe8] sm:$0xff] %v2214
    %2359 = vst [vmem:[#allocation2 + $0xf0] sm:$0xff] %v2325
    %2360 = vst [vmem:[#allocation2 + $0xf8] sm:$0xff] %v2327
    %v2361 = vld [vmem:[#allocation2] sm:$0xff]
    %v2362 = vld [vmem:[#allocation2 + $0x8] sm:$0xff]
    %v2363 = vld [vmem:[#allocation2 + $0x10] sm:$0xff]
    %v2364 = vld [vmem:[#allocation2 + $0x18] sm:$0xff]
    %2365 = vmatprep.subr.mxu0 %v2010
    %2366 = vmatpush1.msra.mxu0 %v2009
    %2367 = vmatprep.subr.mxu0 %v2014
    %2368 = vmatpush1.msra.mxu0 %v2013
    %2369 = vmatprep.subr.mxu0 %v2018
    %2370 = vmatpush1.msra.mxu0 %v2017
    %2371 = vmatprep.subr.mxu0 %v2022
    %2372 = vmatpush1.msra.mxu0 %v2021
    %2373 = vmatprep.subr.mxu0 %v2026
    %2374 = vmatpush1.msra.mxu0 %v2025
    %2375 = vmatprep.subr.mxu0 %v2030
    %2376 = vmatpush1.msra.mxu0 %v2029
    %2377 = vmatprep.subr.mxu0 %v2034
    %2378 = vmatpush1.msra.mxu0 %v2033
    %2379 = vmatprep.subr.mxu0 %v2038
    %2380 = vmatpush1.msra.mxu0 %v2037
    %2381 = vmatprep.subr.mxu0 %v2042
    %2382 = vmatpush1.msra.mxu0 %v2041
    %2383 = vmatprep.subr.mxu0 %v2046
    %2384 = vmatpush1.msra.mxu0 %v2045
    %2385 = vmatprep.subr.mxu0 %v2050
    %2386 = vmatpush1.msra.mxu0 %v2049
    %2387 = vmatprep.subr.mxu0 %v2054
    %2388 = vmatpush1.msra.mxu0 %v2053
    %2389 = vmatprep.subr.mxu0 %v2058
    %2390 = vmatpush1.msra.mxu0 %v2057
    %2391 = vmatprep.subr.mxu0 %v2062
    %2392 = vmatpush1.msra.mxu0 %v2061
    %2393 = vmatprep.subr.mxu0 %v2066
    %2394 = vmatpush1.msra.mxu0 %v2065
    %2395 = vmatprep.subr.mxu0 %v2070
    %2396 = vmatpush1.msra.mxu0 %v2069
    %2397 = vmatprep.subr.mxu0 0.0
    %2398 = vmatpush1.msra.mxu0 0.0
    %2399 = vmatprep.subr.mxu0 0.0
    %2400 = vmatpush1.msra.mxu0 0.0
    %2401 = vmatprep.subr.mxu0 0.0
    %2402 = vmatpush1.msra.mxu0 0.0
    %2403 = vmatprep.subr.mxu0 0.0
    %2404 = vmatpush1.msra.mxu0 0.0
    %2405 = vmatprep.subr.mxu0 0.0
    %2406 = vmatpush1.msra.mxu0 0.0
    %2407 = vmatprep.subr.mxu0 0.0
    %2408 = vmatpush1.msra.mxu0 0.0
    %2409 = vmatprep.subr.mxu0 0.0
    %2410 = vmatpush1.msra.mxu0 0.0
    %2411 = vmatprep.subr.mxu0 0.0
    %2412 = vmatpush1.msra.mxu0 0.0
    %2413 = vmatprep.subr.mxu0 0.0
    %2414 = vmatpush1.msra.mxu0 0.0
    %2415 = vmatprep.subr.mxu0 0.0
    %2416 = vmatpush1.msra.mxu0 0.0
    %2417 = vmatprep.subr.mxu0 0.0
    %2418 = vmatpush1.msra.mxu0 0.0
    %2419 = vmatprep.subr.mxu0 0.0
    %2420 = vmatpush1.msra.mxu0 0.0
    %2421 = vmatprep.subr.mxu0 0.0
    %2422 = vmatpush1.msra.mxu0 0.0
    %2423 = vmatprep.subr.mxu0 0.0
    %2424 = vmatpush1.msra.mxu0 0.0
    %2425 = vmatprep.subr.mxu0 0.0
    %2426 = vmatpush1.msra.mxu0 0.0
    %2427 = vmatprep.subr.mxu0 0.0
    %2428 = vmatpush1.msra.mxu0 0.0
    %2429 = vmatprep.mubr.f32.mxu0 0.0
    %2430 = vmatmul.mubr.f32.gmra.mrb[0].mxu0 0.0
    %v2431 = vpop.f32.mrb[0].mxu0
    %v2432 = vadd.f32 0.0, %v2431
    %v2433 = vpop.f32.mrb[0].mxu0
    %v2434 = vadd.f32 0.0, %v2433
    %2435 = vdwg.mxu0
    %2436 = vmatprep.subr.mxu0 %v2012
    %2437 = vmatpush1.msra.mxu0 %v2011
    %2438 = vmatprep.subr.mxu0 %v2016
    %2439 = vmatpush1.msra.mxu0 %v2015
    %2440 = vmatprep.subr.mxu0 %v2020
    %2441 = vmatpush1.msra.mxu0 %v2019
    %2442 = vmatprep.subr.mxu0 %v2024
    %2443 = vmatpush1.msra.mxu0 %v2023
    %2444 = vmatprep.subr.mxu0 %v2028
    %2445 = vmatpush1.msra.mxu0 %v2027
    %2446 = vmatprep.subr.mxu0 %v2032
    %2447 = vmatpush1.msra.mxu0 %v2031
    %2448 = vmatprep.subr.mxu0 %v2036
    %2449 = vmatpush1.msra.mxu0 %v2035
    %2450 = vmatprep.subr.mxu0 %v2040
    %2451 = vmatpush1.msra.mxu0 %v2039
    %2452 = vmatprep.subr.mxu0 %v2044
    %2453 = vmatpush1.msra.mxu0 %v2043
    %2454 = vmatprep.subr.mxu0 %v2048
    %2455 = vmatpush1.msra.mxu0 %v2047
    %2456 = vmatprep.subr.mxu0 %v2052
    %2457 = vmatpush1.msra.mxu0 %v2051
    %2458 = vmatprep.subr.mxu0 %v2056
    %2459 = vmatpush1.msra.mxu0 %v2055
    %2460 = vmatprep.subr.mxu0 %v2060
    %2461 = vmatpush1.msra.mxu0 %v2059
    %2462 = vmatprep.subr.mxu0 %v2064
    %2463 = vmatpush1.msra.mxu0 %v2063
    %2464 = vmatprep.subr.mxu0 %v2068
    %2465 = vmatpush1.msra.mxu0 %v2067
    %2466 = vmatprep.subr.mxu0 %v2072
    %2467 = vmatpush1.msra.mxu0 %v2071
    %2468 = vmatprep.subr.mxu0 0.0
    %2469 = vmatpush1.msra.mxu0 0.0
    %2470 = vmatprep.subr.mxu0 0.0
    %2471 = vmatpush1.msra.mxu0 0.0
    %2472 = vmatprep.subr.mxu0 0.0
    %2473 = vmatpush1.msra.mxu0 0.0
    %2474 = vmatprep.subr.mxu0 0.0
    %2475 = vmatpush1.msra.mxu0 0.0
    %2476 = vmatprep.subr.mxu0 0.0
    %2477 = vmatpush1.msra.mxu0 0.0
    %2478 = vmatprep.subr.mxu0 0.0
    %2479 = vmatpush1.msra.mxu0 0.0
    %2480 = vmatprep.subr.mxu0 0.0
    %2481 = vmatpush1.msra.mxu0 0.0
    %2482 = vmatprep.subr.mxu0 0.0
    %2483 = vmatpush1.msra.mxu0 0.0
    %2484 = vmatprep.subr.mxu0 0.0
    %2485 = vmatpush1.msra.mxu0 0.0
    %2486 = vmatprep.subr.mxu0 0.0
    %2487 = vmatpush1.msra.mxu0 0.0
    %2488 = vmatprep.subr.mxu0 0.0
    %2489 = vmatpush1.msra.mxu0 0.0
    %2490 = vmatprep.subr.mxu0 0.0
    %2491 = vmatpush1.msra.mxu0 0.0
    %2492 = vmatprep.subr.mxu0 0.0
    %2493 = vmatpush1.msra.mxu0 0.0
    %2494 = vmatprep.subr.mxu0 0.0
    %2495 = vmatpush1.msra.mxu0 0.0
    %2496 = vmatprep.subr.mxu0 0.0
    %2497 = vmatpush1.msra.mxu0 0.0
    %2498 = vmatprep.subr.mxu0 0.0
    %2499 = vmatpush1.msra.mxu0 0.0
    %2500 = vmatprep.mubr.f32.mxu0 0.0
    %2501 = vmatmul.mubr.f32.gmra.mrb[0].mxu0 0.0
    %v2502 = vpop.f32.mrb[0].mxu0
    %v2503 = vadd.f32 0.0, %v2502
    %v2504 = vpop.f32.mrb[0].mxu0
    %v2505 = vadd.f32 0.0, %v2504
    %2506 = vdwg.mxu0
    %v2507 = vadd.f32 %v2361, %v2432
    %v2508 = vadd.f32 %v2362, %v2434
    %v2509 = vadd.f32 %v2363, %v2503
    %v2510 = vadd.f32 %v2364, %v2505
    %v2511 = vxor.u32 %v2507, 2147483648
    %v2512 = vmul.f32 %v2511, 1.442695
    %v2513 = vpow.pop %v2512
    %v2514 = vadd.f32 %v2513, 1.0
    %v2515 = vrcp.pop %v2514
    %v2516 = vmul.f32 1.0, %v2515
    %v2517 = vxor.u32 %v2508, 2147483648
    %v2518 = vmul.f32 %v2517, 1.442695
    %v2519 = vpow.pop %v2518
    %v2520 = vadd.f32 %v2519, 1.0
    %v2521 = vrcp.pop %v2520
    %v2522 = vmul.f32 1.0, %v2521
    %v2523 = vtanh.pop %v2509
    %v2524 = vxor.u32 %v2510, 2147483648
    %v2525 = vmul.f32 %v2524, 1.442695
    %v2526 = vpow.pop %v2525
    %v2527 = vadd.f32 %v2526, 1.0
    %v2528 = vrcp.pop %v2527
    %v2529 = vmul.f32 1.0, %v2528
    %v2530 = vmul.f32 %v2522, 0.0
    %v2531 = vmul.f32 %v2516, %v2523
    %v2532 = vadd.f32 %v2530, %v2531
    %v2533 = vtanh.pop %v2532
    %v2534 = vmul.f32 %v2529, %v2533
    %2535 = vst [vmem:[#allocation3] sm:$0xff] %v2534
    %v2536 = vld [vmem:[%s706] sm:$0xff]
    %v2537 = vld [vmem:[%s706 + $0x8] sm:$0xff]
    %v2538 = vld [vmem:[%s706 + $0x10] sm:$0xff]
    %v2539 = vld [vmem:[%s706 + $0x18] sm:$0xff]
    %2540 = vmatprep.subr.mxu0 %v2010
    %2541 = vmatpush1.msra.mxu0 %v2009
    %2542 = vmatprep.subr.mxu0 %v2014
    %2543 = vmatpush1.msra.mxu0 %v2013
    %2544 = vmatprep.subr.mxu0 %v2018
    %2545 = vmatpush1.msra.mxu0 %v2017
    %2546 = vmatprep.subr.mxu0 %v2022
    %2547 = vmatpush1.msra.mxu0 %v2021
    %2548 = vmatprep.subr.mxu0 %v2026
    %2549 = vmatpush1.msra.mxu0 %v2025
    %2550 = vmatprep.subr.mxu0 %v2030
    %2551 = vmatpush1.msra.mxu0 %v2029
    %2552 = vmatprep.subr.mxu0 %v2034
    %2553 = vmatpush1.msra.mxu0 %v2033
    %2554 = vmatprep.subr.mxu0 %v2038
    %2555 = vmatpush1.msra.mxu0 %v2037
    %2556 = vmatprep.subr.mxu0 %v2042
    %2557 = vmatpush1.msra.mxu0 %v2041
    %2558 = vmatprep.subr.mxu0 %v2046
    %2559 = vmatpush1.msra.mxu0 %v2045
    %2560 = vmatprep.subr.mxu0 %v2050
    %2561 = vmatpush1.msra.mxu0 %v2049
    %2562 = vmatprep.subr.mxu0 %v2054
    %2563 = vmatpush1.msra.mxu0 %v2053
    %2564 = vmatprep.subr.mxu0 %v2058
    %2565 = vmatpush1.msra.mxu0 %v2057
    %2566 = vmatprep.subr.mxu0 %v2062
    %2567 = vmatpush1.msra.mxu0 %v2061
    %2568 = vmatprep.subr.mxu0 %v2066
    %2569 = vmatpush1.msra.mxu0 %v2065
    %2570 = vmatprep.subr.mxu0 %v2070
    %2571 = vmatpush1.msra.mxu0 %v2069
    %2572 = vmatprep.subr.mxu0 0.0
    %2573 = vmatpush1.msra.mxu0 0.0
    %2574 = vmatprep.subr.mxu0 0.0
    %2575 = vmatpush1.msra.mxu0 0.0
    %2576 = vmatprep.subr.mxu0 0.0
    %2577 = vmatpush1.msra.mxu0 0.0
    %2578 = vmatprep.subr.mxu0 0.0
    %2579 = vmatpush1.msra.mxu0 0.0
    %2580 = vmatprep.subr.mxu0 0.0
    %2581 = vmatpush1.msra.mxu0 0.0
    %2582 = vmatprep.subr.mxu0 0.0
    %2583 = vmatpush1.msra.mxu0 0.0
    %2584 = vmatprep.subr.mxu0 0.0
    %2585 = vmatpush1.msra.mxu0 0.0
    %2586 = vmatprep.subr.mxu0 0.0
    %2587 = vmatpush1.msra.mxu0 0.0
    %2588 = vmatprep.subr.mxu0 0.0
    %2589 = vmatpush1.msra.mxu0 0.0
    %2590 = vmatprep.subr.mxu0 0.0
    %2591 = vmatpush1.msra.mxu0 0.0
    %2592 = vmatprep.subr.mxu0 0.0
    %2593 = vmatpush1.msra.mxu0 0.0
    %2594 = vmatprep.subr.mxu0 0.0
    %2595 = vmatpush1.msra.mxu0 0.0
    %2596 = vmatprep.subr.mxu0 0.0
    %2597 = vmatpush1.msra.mxu0 0.0
    %2598 = vmatprep.subr.mxu0 0.0
    %2599 = vmatpush1.msra.mxu0 0.0
    %2600 = vmatprep.subr.mxu0 0.0
    %2601 = vmatpush1.msra.mxu0 0.0
    %2602 = vmatprep.subr.mxu0 0.0
    %2603 = vmatpush1.msra.mxu0 0.0
    %2604 = vmatprep.mubr.f32.mxu0 0.0
    %2605 = vmatmul.mubr.f32.gmra.mrb[0].mxu0 %v2534
    %v2606 = vpop.f32.mrb[0].mxu0
    %v2607 = vadd.f32 0.0, %v2606
    %v2608 = vpop.f32.mrb[0].mxu0
    %v2609 = vadd.f32 0.0, %v2608
    %2610 = vdwg.mxu0
    %2611 = vmatprep.subr.mxu0 %v2012
    %2612 = vmatpush1.msra.mxu0 %v2011
    %2613 = vmatprep.subr.mxu0 %v2016
    %2614 = vmatpush1.msra.mxu0 %v2015
    %2615 = vmatprep.subr.mxu0 %v2020
    %2616 = vmatpush1.msra.mxu0 %v2019
    %2617 = vmatprep.subr.mxu0 %v2024
    %2618 = vmatpush1.msra.mxu0 %v2023
    %2619 = vmatprep.subr.mxu0 %v2028
    %2620 = vmatpush1.msra.mxu0 %v2027
    %2621 = vmatprep.subr.mxu0 %v2032
    %2622 = vmatpush1.msra.mxu0 %v2031
    %2623 = vmatprep.subr.mxu0 %v2036
    %2624 = vmatpush1.msra.mxu0 %v2035
    %2625 = vmatprep.subr.mxu0 %v2040
    %2626 = vmatpush1.msra.mxu0 %v2039
    %2627 = vmatprep.subr.mxu0 %v2044
    %2628 = vmatpush1.msra.mxu0 %v2043
    %2629 = vmatprep.subr.mxu0 %v2048
    %2630 = vmatpush1.msra.mxu0 %v2047
    %2631 = vmatprep.subr.mxu0 %v2052
    %2632 = vmatpush1.msra.mxu0 %v2051
    %2633 = vmatprep.subr.mxu0 %v2056
    %2634 = vmatpush1.msra.mxu0 %v2055
    %2635 = vmatprep.subr.mxu0 %v2060
    %2636 = vmatpush1.msra.mxu0 %v2059
    %2637 = vmatprep.subr.mxu0 %v2064
    %2638 = vmatpush1.msra.mxu0 %v2063
    %2639 = vmatprep.subr.mxu0 %v2068
    %2640 = vmatpush1.msra.mxu0 %v2067
    %2641 = vmatprep.subr.mxu0 %v2072
    %2642 = vmatpush1.msra.mxu0 %v2071
    %2643 = vmatprep.subr.mxu0 0.0
    %2644 = vmatpush1.msra.mxu0 0.0
    %2645 = vmatprep.subr.mxu0 0.0
    %2646 = vmatpush1.msra.mxu0 0.0
    %2647 = vmatprep.subr.mxu0 0.0
    %2648 = vmatpush1.msra.mxu0 0.0
    %2649 = vmatprep.subr.mxu0 0.0
    %2650 = vmatpush1.msra.mxu0 0.0
    %2651 = vmatprep.subr.mxu0 0.0
    %2652 = vmatpush1.msra.mxu0 0.0
    %2653 = vmatprep.subr.mxu0 0.0
    %2654 = vmatpush1.msra.mxu0 0.0
    %2655 = vmatprep.subr.mxu0 0.0
    %2656 = vmatpush1.msra.mxu0 0.0
    %2657 = vmatprep.subr.mxu0 0.0
    %2658 = vmatpush1.msra.mxu0 0.0
    %2659 = vmatprep.subr.mxu0 0.0
    %2660 = vmatpush1.msra.mxu0 0.0
    %2661 = vmatprep.subr.mxu0 0.0
    %2662 = vmatpush1.msra.mxu0 0.0
    %2663 = vmatprep.subr.mxu0 0.0
    %2664 = vmatpush1.msra.mxu0 0.0
    %2665 = vmatprep.subr.mxu0 0.0
    %2666 = vmatpush1.msra.mxu0 0.0
    %2667 = vmatprep.subr.mxu0 0.0
    %2668 = vmatpush1.msra.mxu0 0.0
    %2669 = vmatprep.subr.mxu0 0.0
    %2670 = vmatpush1.msra.mxu0 0.0
    %2671 = vmatprep.subr.mxu0 0.0
    %2672 = vmatpush1.msra.mxu0 0.0
    %2673 = vmatprep.subr.mxu0 0.0
    %2674 = vmatpush1.msra.mxu0 0.0
    %2675 = vmatprep.mubr.f32.mxu0 0.0
    %2676 = vmatmul.mubr.f32.gmra.mrb[0].mxu0 %v2534
    %v2677 = vpop.f32.mrb[0].mxu0
    %v2678 = vadd.f32 0.0, %v2677
    %v2679 = vpop.f32.mrb[0].mxu0
    %v2680 = vadd.f32 0.0, %v2679
    %2681 = vdwg.mxu0
    %v2682 = vadd.f32 %v2536, %v2607
    %v2683 = vadd.f32 %v2537, %v2609
    %v2684 = vadd.f32 %v2538, %v2678
    %v2685 = vadd.f32 %v2539, %v2680
    %v2686 = vxor.u32 %v2682, 2147483648
    %v2687 = vmul.f32 %v2686, 1.442695
    %v2688 = vpow.pop %v2687
    %v2689 = vadd.f32 %v2688, 1.0
    %v2690 = vrcp.pop %v2689
    %v2691 = vmul.f32 1.0, %v2690
    %v2692 = vxor.u32 %v2683, 2147483648
    %v2693 = vmul.f32 %v2692, 1.442695
    %v2694 = vpow.pop %v2693
    %v2695 = vadd.f32 %v2694, 1.0
    %v2696 = vrcp.pop %v2695
    %v2697 = vmul.f32 1.0, %v2696
    %v2698 = vtanh.pop %v2684
    %v2699 = vxor.u32 %v2685, 2147483648
    %v2700 = vmul.f32 %v2699, 1.442695
    %v2701 = vpow.pop %v2700
    %v2702 = vadd.f32 %v2701, 1.0
    %v2703 = vrcp.pop %v2702
    %v2704 = vmul.f32 1.0, %v2703
    %v2705 = vmul.f32 %v2697, %v2532
    %v2706 = vmul.f32 %v2691, %v2698
    %v2707 = vadd.f32 %v2705, %v2706
    %v2708 = vtanh.pop %v2707
    %v2709 = vmul.f32 %v2704, %v2708
    %2710 = vst [vmem:[%s881] sm:$0xff] %v2709
    %v2711 = vld [vmem:[%s883] sm:$0xff]
    %v2712 = vld [vmem:[%s883 + $0x8] sm:$0xff]
    %v2713 = vld [vmem:[%s883 + $0x10] sm:$0xff]
    %v2714 = vld [vmem:[%s883 + $0x18] sm:$0xff]
    %2715 = vmatprep.subr.mxu0 %v2010
    %2716 = vmatpush1.msra.mxu0 %v2009
    %2717 = vmatprep.subr.mxu0 %v2014
    %2718 = vmatpush1.msra.mxu0 %v2013
    %2719 = vmatprep.subr.mxu0 %v2018
    %2720 = vmatpush1.msra.mxu0 %v2017
    %2721 = vmatprep.subr.mxu0 %v2022
    %2722 = vmatpush1.msra.mxu0 %v2021
    %2723 = vmatprep.subr.mxu0 %v2026
    %2724 = vmatpush1.msra.mxu0 %v2025
    %2725 = vmatprep.subr.mxu0 %v2030
    %2726 = vmatpush1.msra.mxu0 %v2029
    %2727 = vmatprep.subr.mxu0 %v2034
    %2728 = vmatpush1.msra.mxu0 %v2033
    %2729 = vmatprep.subr.mxu0 %v2038
    %2730 = vmatpush1.msra.mxu0 %v2037
    %2731 = vmatprep.subr.mxu0 %v2042
    %2732 = vmatpush1.msra.mxu0 %v2041
    %2733 = vmatprep.subr.mxu0 %v2046
    %2734 = vmatpush1.msra.mxu0 %v2045
    %2735 = vmatprep.subr.mxu0 %v2050
    %2736 = vmatpush1.msra.mxu0 %v2049
    %2737 = vmatprep.subr.mxu0 %v2054
    %2738 = vmatpush1.msra.mxu0 %v2053
    %2739 = vmatprep.subr.mxu0 %v2058
    %2740 = vmatpush1.msra.mxu0 %v2057
    %2741 = vmatprep.subr.mxu0 %v2062
    %2742 = vmatpush1.msra.mxu0 %v2061
    %2743 = vmatprep.subr.mxu0 %v2066
    %2744 = vmatpush1.msra.mxu0 %v2065
    %2745 = vmatprep.subr.mxu0 %v2070
    %2746 = vmatpush1.msra.mxu0 %v2069
    %2747 = vmatprep.subr.mxu0 0.0
    %2748 = vmatpush1.msra.mxu0 0.0
    %2749 = vmatprep.subr.mxu0 0.0
    %2750 = vmatpush1.msra.mxu0 0.0
    %2751 = vmatprep.subr.mxu0 0.0
    %2752 = vmatpush1.msra.mxu0 0.0
    %2753 = vmatprep.subr.mxu0 0.0
    %2754 = vmatpush1.msra.mxu0 0.0
    %2755 = vmatprep.subr.mxu0 0.0
    %2756 = vmatpush1.msra.mxu0 0.0
    %2757 = vmatprep.subr.mxu0 0.0
    %2758 = vmatpush1.msra.mxu0 0.0
    %2759 = vmatprep.subr.mxu0 0.0
    %2760 = vmatpush1.msra.mxu0 0.0
    %2761 = vmatprep.subr.mxu0 0.0
    %2762 = vmatpush1.msra.mxu0 0.0
    %2763 = vmatprep.subr.mxu0 0.0
    %2764 = vmatpush1.msra.mxu0 0.0
    %2765 = vmatprep.subr.mxu0 0.0
    %2766 = vmatpush1.msra.mxu0 0.0
    %2767 = vmatprep.subr.mxu0 0.0
    %2768 = vmatpush1.msra.mxu0 0.0
    %2769 = vmatprep.subr.mxu0 0.0
    %2770 = vmatpush1.msra.mxu0 0.0
    %2771 = vmatprep.subr.mxu0 0.0
    %2772 = vmatpush1.msra.mxu0 0.0
    %2773 = vmatprep.subr.mxu0 0.0
    %2774 = vmatpush1.msra.mxu0 0.0
    %2775 = vmatprep.subr.mxu0 0.0
    %2776 = vmatpush1.msra.mxu0 0.0
    %2777 = vmatprep.subr.mxu0 0.0
    %2778 = vmatpush1.msra.mxu0 0.0
    %2779 = vmatprep.mubr.f32.mxu0 0.0
    %2780 = vmatmul.mubr.f32.gmra.mrb[0].mxu0 %v2709
    %v2781 = vpop.f32.mrb[0].mxu0
    %v2782 = vadd.f32 0.0, %v2781
    %v2783 = vpop.f32.mrb[0].mxu0
    %v2784 = vadd.f32 0.0, %v2783
    %2785 = vdwg.mxu0
    %2786 = vmatprep.subr.mxu0 %v2012
    %2787 = vmatpush1.msra.mxu0 %v2011
    %2788 = vmatprep.subr.mxu0 %v2016
    %2789 = vmatpush1.msra.mxu0 %v2015
    %2790 = vmatprep.subr.mxu0 %v2020
    %2791 = vmatpush1.msra.mxu0 %v2019
    %2792 = vmatprep.subr.mxu0 %v2024
    %2793 = vmatpush1.msra.mxu0 %v2023
    %2794 = vmatprep.subr.mxu0 %v2028
    %2795 = vmatpush1.msra.mxu0 %v2027
    %2796 = vmatprep.subr.mxu0 %v2032
    %2797 = vmatpush1.msra.mxu0 %v2031
    %2798 = vmatprep.subr.mxu0 %v2036
    %2799 = vmatpush1.msra.mxu0 %v2035
    %2800 = vmatprep.subr.mxu0 %v2040
    %2801 = vmatpush1.msra.mxu0 %v2039
    %2802 = vmatprep.subr.mxu0 %v2044
    %2803 = vmatpush1.msra.mxu0 %v2043
    %2804 = vmatprep.subr.mxu0 %v2048
    %2805 = vmatpush1.msra.mxu0 %v2047
    %2806 = vmatprep.subr.mxu0 %v2052
    %2807 = vmatpush1.msra.mxu0 %v2051
    %2808 = vmatprep.subr.mxu0 %v2056
    %2809 = vmatpush1.msra.mxu0 %v2055
    %2810 = vmatprep.subr.mxu0 %v2060
    %2811 = vmatpush1.msra.mxu0 %v2059
    %2812 = vmatprep.subr.mxu0 %v2064
    %2813 = vmatpush1.msra.mxu0 %v2063
    %2814 = vmatprep.subr.mxu0 %v2068
    %2815 = vmatpush1.msra.mxu0 %v2067
    %2816 = vmatprep.subr.mxu0 %v2072
    %2817 = vmatpush1.msra.mxu0 %v2071
    %2818 = vmatprep.subr.mxu0 0.0
    %2819 = vmatpush1.msra.mxu0 0.0
    %2820 = vmatprep.subr.mxu0 0.0
    %2821 = vmatpush1.msra.mxu0 0.0
    %2822 = vmatprep.subr.mxu0 0.0
    %2823 = vmatpush1.msra.mxu0 0.0
    %2824 = vmatprep.subr.mxu0 0.0
    %2825 = vmatpush1.msra.mxu0 0.0
    %2826 = vmatprep.subr.mxu0 0.0
    %2827 = vmatpush1.msra.mxu0 0.0
    %2828 = vmatprep.subr.mxu0 0.0
    %2829 = vmatpush1.msra.mxu0 0.0
    %2830 = vmatprep.subr.mxu0 0.0
    %2831 = vmatpush1.msra.mxu0 0.0
    %2832 = vmatprep.subr.mxu0 0.0
    %2833 = vmatpush1.msra.mxu0 0.0
    %2834 = vmatprep.subr.mxu0 0.0
    %2835 = vmatpush1.msra.mxu0 0.0
    %2836 = vmatprep.subr.mxu0 0.0
    %2837 = vmatpush1.msra.mxu0 0.0
    %2838 = vmatprep.subr.mxu0 0.0
    %2839 = vmatpush1.msra.mxu0 0.0
    %2840 = vmatprep.subr.mxu0 0.0
    %2841 = vmatpush1.msra.mxu0 0.0
    %2842 = vmatprep.subr.mxu0 0.0
    %2843 = vmatpush1.msra.mxu0 0.0
    %2844 = vmatprep.subr.mxu0 0.0
    %2845 = vmatpush1.msra.mxu0 0.0
    %2846 = vmatprep.subr.mxu0 0.0
    %2847 = vmatpush1.msra.mxu0 0.0
    %2848 = vmatprep.subr.mxu0 0.0
    %2849 = vmatpush1.msra.mxu0 0.0
    %2850 = vmatprep.mubr.f32.mxu0 0.0
    %2851 = vmatmul.mubr.f32.gmra.mrb[0].mxu0 %v2709
    %v2852 = vpop.f32.mrb[0].mxu0
    %v2853 = vadd.f32 0.0, %v2852
    %v2854 = vpop.f32.mrb[0].mxu0
    %v2855 = vadd.f32 0.0, %v2854
    %2856 = vdwg.mxu0
    %v2857 = vadd.f32 %v2711, %v2782
    %v2858 = vadd.f32 %v2712, %v2784
    %v2859 = vadd.f32 %v2713, %v2853
    %v2860 = vadd.f32 %v2714, %v2855
    %v2861 = vxor.u32 %v2857, 2147483648
    %v2862 = vmul.f32 %v2861, 1.442695
    %v2863 = vpow.pop %v2862
    %v2864 = vadd.f32 %v2863, 1.0
    %v2865 = vrcp.pop %v2864
    %v2866 = vmul.f32 1.0, %v2865
    %v2867 = vxor.u32 %v2858, 2147483648
    %v2868 = vmul.f32 %v2867, 1.442695
    %v2869 = vpow.pop %v2868
    %v2870 = vadd.f32 %v2869, 1.0
    %v2871 = vrcp.pop %v2870
    %v2872 = vmul.f32 1.0, %v2871
    %v2873 = vtanh.pop %v2859
    %v2874 = vxor.u32 %v2860, 2147483648
    %v2875 = vmul.f32 %v2874, 1.442695
    %v2876 = vpow.pop %v2875
    %v2877 = vadd.f32 %v2876, 1.0
    %v2878 = vrcp.pop %v2877
    %v2879 = vmul.f32 1.0, %v2878
    %v2880 = vmul.f32 %v2872, %v2707
    %v2881 = vmul.f32 %v2866, %v2873
    %v2882 = vadd.f32 %v2880, %v2881
    %v2883 = vtanh.pop %v2882
    %v2884 = vmul.f32 %v2879, %v2883
    %2885 = vst [vmem:[%s1058] sm:$0xff] %v2884
    %v2886 = vld [vmem:[%s1060] sm:$0xff]
    %v2887 = vld [vmem:[%s1060 + $0x8] sm:$0xff]
    %v2888 = vld [vmem:[%s1060 + $0x10] sm:$0xff]
    %v2889 = vld [vmem:[%s1060 + $0x18] sm:$0xff]
    %2890 = vmatprep.subr.mxu0 %v2010
    %2891 = vmatpush1.msra.mxu0 %v2009
    %2892 = vmatprep.subr.mxu0 %v2014
    %2893 = vmatpush1.msra.mxu0 %v2013
    %2894 = vmatprep.subr.mxu0 %v2018
    %2895 = vmatpush1.msra.mxu0 %v2017
    %2896 = vmatprep.subr.mxu0 %v2022
    %2897 = vmatpush1.msra.mxu0 %v2021
    %2898 = vmatprep.subr.mxu0 %v2026
    %2899 = vmatpush1.msra.mxu0 %v2025
    %2900 = vmatprep.subr.mxu0 %v2030
    %2901 = vmatpush1.msra.mxu0 %v2029
    %2902 = vmatprep.subr.mxu0 %v2034
    %2903 = vmatpush1.msra.mxu0 %v2033
    %2904 = vmatprep.subr.mxu0 %v2038
    %2905 = vmatpush1.msra.mxu0 %v2037
    %2906 = vmatprep.subr.mxu0 %v2042
    %2907 = vmatpush1.msra.mxu0 %v2041
    %2908 = vmatprep.subr.mxu0 %v2046
    %2909 = vmatpush1.msra.mxu0 %v2045
    %2910 = vmatprep.subr.mxu0 %v2050
    %2911 = vmatpush1.msra.mxu0 %v2049
    %2912 = vmatprep.subr.mxu0 %v2054
    %2913 = vmatpush1.msra.mxu0 %v2053
    %2914 = vmatprep.subr.mxu0 %v2058
    %2915 = vmatpush1.msra.mxu0 %v2057
    %2916 = vmatprep.subr.mxu0 %v2062
    %2917 = vmatpush1.msra.mxu0 %v2061
    %2918 = vmatprep.subr.mxu0 %v2066
    %2919 = vmatpush1.msra.mxu0 %v2065
    %2920 = vmatprep.subr.mxu0 %v2070
    %2921 = vmatpush1.msra.mxu0 %v2069
    %2922 = vmatprep.subr.mxu0 0.0
    %2923 = vmatpush1.msra.mxu0 0.0
    %2924 = vmatprep.subr.mxu0 0.0
    %2925 = vmatpush1.msra.mxu0 0.0
    %2926 = vmatprep.subr.mxu0 0.0
    %2927 = vmatpush1.msra.mxu0 0.0
    %2928 = vmatprep.subr.mxu0 0.0
    %2929 = vmatpush1.msra.mxu0 0.0
    %2930 = vmatprep.subr.mxu0 0.0
    %2931 = vmatpush1.msra.mxu0 0.0
    %2932 = vmatprep.subr.mxu0 0.0
    %2933 = vmatpush1.msra.mxu0 0.0
    %2934 = vmatprep.subr.mxu0 0.0
    %2935 = vmatpush1.msra.mxu0 0.0
    %2936 = vmatprep.subr.mxu0 0.0
    %2937 = vmatpush1.msra.mxu0 0.0
    %2938 = vmatprep.subr.mxu0 0.0
    %2939 = vmatpush1.msra.mxu0 0.0
    %2940 = vmatprep.subr.mxu0 0.0
    %2941 = vmatpush1.msra.mxu0 0.0
    %2942 = vmatprep.subr.mxu0 0.0
    %2943 = vmatpush1.msra.mxu0 0.0
    %2944 = vmatprep.subr.mxu0 0.0
    %2945 = vmatpush1.msra.mxu0 0.0
    %2946 = vmatprep.subr.mxu0 0.0
    %2947 = vmatpush1.msra.mxu0 0.0
    %2948 = vmatprep.subr.mxu0 0.0
    %2949 = vmatpush1.msra.mxu0 0.0
    %2950 = vmatprep.subr.mxu0 0.0
    %2951 = vmatpush1.msra.mxu0 0.0
    %2952 = vmatprep.subr.mxu0 0.0
    %2953 = vmatpush1.msra.mxu0 0.0
    %2954 = vmatprep.mubr.f32.mxu0 0.0
    %2955 = vmatmul.mubr.f32.gmra.mrb[0].mxu0 %v2884
    %v2956 = vpop.f32.mrb[0].mxu0
    %v2957 = vadd.f32 0.0, %v2956
    %v2958 = vpop.f32.mrb[0].mxu0
    %v2959 = vadd.f32 0.0, %v2958
    %2960 = vdwg.mxu0
    %2961 = vmatprep.subr.mxu0 %v2012
    %2962 = vmatpush1.msra.mxu0 %v2011
    %2963 = vmatprep.subr.mxu0 %v2016
    %2964 = vmatpush1.msra.mxu0 %v2015
    %2965 = vmatprep.subr.mxu0 %v2020
    %2966 = vmatpush1.msra.mxu0 %v2019
    %2967 = vmatprep.subr.mxu0 %v2024
    %2968 = vmatpush1.msra.mxu0 %v2023
    %2969 = vmatprep.subr.mxu0 %v2028
    %2970 = vmatpush1.msra.mxu0 %v2027
    %2971 = vmatprep.subr.mxu0 %v2032
    %2972 = vmatpush1.msra.mxu0 %v2031
    %2973 = vmatprep.subr.mxu0 %v2036
    %2974 = vmatpush1.msra.mxu0 %v2035
    %2975 = vmatprep.subr.mxu0 %v2040
    %2976 = vmatpush1.msra.mxu0 %v2039
    %2977 = vmatprep.subr.mxu0 %v2044
    %2978 = vmatpush1.msra.mxu0 %v2043
    %2979 = vmatprep.subr.mxu0 %v2048
    %2980 = vmatpush1.msra.mxu0 %v2047
    %2981 = vmatprep.subr.mxu0 %v2052
    %2982 = vmatpush1.msra.mxu0 %v2051
    %2983 = vmatprep.subr.mxu0 %v2056
    %2984 = vmatpush1.msra.mxu0 %v2055
    %2985 = vmatprep.subr.mxu0 %v2060
    %2986 = vmatpush1.msra.mxu0 %v2059
    %2987 = vmatprep.subr.mxu0 %v2064
    %2988 = vmatpush1.msra.mxu0 %v2063
    %2989 = vmatprep.subr.mxu0 %v2068
    %2990 = vmatpush1.msra.mxu0 %v2067
    %2991 = vmatprep.subr.mxu0 %v2072
    %2992 = vmatpush1.msra.mxu0 %v2071
    %2993 = vmatprep.subr.mxu0 0.0
    %2994 = vmatpush1.msra.mxu0 0.0
    %2995 = vmatprep.subr.mxu0 0.0
    %2996 = vmatpush1.msra.mxu0 0.0
    %2997 = vmatprep.subr.mxu0 0.0
    %2998 = vmatpush1.msra.mxu0 0.0
    %2999 = vmatprep.subr.mxu0 0.0
    %3000 = vmatpush1.msra.mxu0 0.0
    %3001 = vmatprep.subr.mxu0 0.0
    %3002 = vmatpush1.msra.mxu0 0.0
    %3003 = vmatprep.subr.mxu0 0.0
    %3004 = vmatpush1.msra.mxu0 0.0
    %3005 = vmatprep.subr.mxu0 0.0
    %3006 = vmatpush1.msra.mxu0 0.0
    %3007 = vmatprep.subr.mxu0 0.0
    %3008 = vmatpush1.msra.mxu0 0.0
    %3009 = vmatprep.subr.mxu0 0.0
    %3010 = vmatpush1.msra.mxu0 0.0
    %3011 = vmatprep.subr.mxu0 0.0
    %3012 = vmatpush1.msra.mxu0 0.0
    %3013 = vmatprep.subr.mxu0 0.0
    %3014 = vmatpush1.msra.mxu0 0.0
    %3015 = vmatprep.subr.mxu0 0.0
    %3016 = vmatpush1.msra.mxu0 0.0
    %3017 = vmatprep.subr.mxu0 0.0
    %3018 = vmatpush1.msra.mxu0 0.0
    %3019 = vmatprep.subr.mxu0 0.0
    %3020 = vmatpush1.msra.mxu0 0.0
    %3021 = vmatprep.subr.mxu0 0.0
    %3022 = vmatpush1.msra.mxu0 0.0
    %3023 = vmatprep.subr.mxu0 0.0
    %3024 = vmatpush1.msra.mxu0 0.0
    %3025 = vmatprep.mubr.f32.mxu0 0.0
    %3026 = vmatmul.mubr.f32.gmra.mrb[0].mxu0 %v2884
    %v3027 = vpop.f32.mrb[0].mxu0
    %v3028 = vadd.f32 0.0, %v3027
    %v3029 = vpop.f32.mrb[0].mxu0
    %v3030 = vadd.f32 0.0, %v3029
    %3031 = vdwg.mxu0
    %v3032 = vadd.f32 %v2886, %v2957
    %v3033 = vadd.f32 %v2887, %v2959
    %v3034 = vadd.f32 %v2888, %v3028
    %v3035 = vadd.f32 %v2889, %v3030
    %v3036 = vxor.u32 %v3032, 2147483648
    %v3037 = vmul.f32 %v3036, 1.442695
    %v3038 = vpow.pop %v3037
    %v3039 = vadd.f32 %v3038, 1.0
    %v3040 = vrcp.pop %v3039
    %v3041 = vmul.f32 1.0, %v3040
    %v3042 = vxor.u32 %v3033, 2147483648
    %v3043 = vmul.f32 %v3042, 1.442695
    %v3044 = vpow.pop %v3043
    %v3045 = vadd.f32 %v3044, 1.0
    %v3046 = vrcp.pop %v3045
    %v3047 = vmul.f32 1.0, %v3046
    %v3048 = vtanh.pop %v3034
    %v3049 = vxor.u32 %v3035, 2147483648
    %v3050 = vmul.f32 %v3049, 1.442695
    %v3051 = vpow.pop %v3050
    %v3052 = vadd.f32 %v3051, 1.0
    %v3053 = vrcp.pop %v3052
    %v3054 = vmul.f32 1.0, %v3053
    %v3055 = vmul.f32 %v3047, %v2882
    %v3056 = vmul.f32 %v3041, %v3048
    %v3057 = vadd.f32 %v3055, %v3056
    %v3058 = vtanh.pop %v3057
    %v3059 = vmul.f32 %v3054, %v3058
    %3060 = vst [vmem:[%s1235] sm:$0xff] %v3059
    %v3061 = vld [vmem:[%s1237] sm:$0xff]
    %v3062 = vld [vmem:[%s1237 + $0x8] sm:$0xff]
    %v3063 = vld [vmem:[%s1237 + $0x10] sm:$0xff]
    %v3064 = vld [vmem:[%s1237 + $0x18] sm:$0xff]
    %3065 = vmatprep.subr.mxu0 %v2010
    %3066 = vmatpush1.msra.mxu0 %v2009
    %3067 = vmatprep.subr.mxu0 %v2014
    %3068 = vmatpush1.msra.mxu0 %v2013
    %3069 = vmatprep.subr.mxu0 %v2018
    %3070 = vmatpush1.msra.mxu0 %v2017
    %3071 = vmatprep.subr.mxu0 %v2022
    %3072 = vmatpush1.msra.mxu0 %v2021
    %3073 = vmatprep.subr.mxu0 %v2026
    %3074 = vmatpush1.msra.mxu0 %v2025
    %3075 = vmatprep.subr.mxu0 %v2030
    %3076 = vmatpush1.msra.mxu0 %v2029
    %3077 = vmatprep.subr.mxu0 %v2034
    %3078 = vmatpush1.msra.mxu0 %v2033
    %3079 = vmatprep.subr.mxu0 %v2038
    %3080 = vmatpush1.msra.mxu0 %v2037
    %3081 = vmatprep.subr.mxu0 %v2042
    %3082 = vmatpush1.msra.mxu0 %v2041
    %3083 = vmatprep.subr.mxu0 %v2046
    %3084 = vmatpush1.msra.mxu0 %v2045
    %3085 = vmatprep.subr.mxu0 %v2050
    %3086 = vmatpush1.msra.mxu0 %v2049
    %3087 = vmatprep.subr.mxu0 %v2054
    %3088 = vmatpush1.msra.mxu0 %v2053
    %3089 = vmatprep.subr.mxu0 %v2058
    %3090 = vmatpush1.msra.mxu0 %v2057
    %3091 = vmatprep.subr.mxu0 %v2062
    %3092 = vmatpush1.msra.mxu0 %v2061
    %3093 = vmatprep.subr.mxu0 %v2066
    %3094 = vmatpush1.msra.mxu0 %v2065
    %3095 = vmatprep.subr.mxu0 %v2070
    %3096 = vmatpush1.msra.mxu0 %v2069
    %3097 = vmatprep.subr.mxu0 0.0
    %3098 = vmatpush1.msra.mxu0 0.0
    %3099 = vmatprep.subr.mxu0 0.0
    %3100 = vmatpush1.msra.mxu0 0.0
    %3101 = vmatprep.subr.mxu0 0.0
    %3102 = vmatpush1.msra.mxu0 0.0
    %3103 = vmatprep.subr.mxu0 0.0
    %3104 = vmatpush1.msra.mxu0 0.0
    %3105 = vmatprep.subr.mxu0 0.0
    %3106 = vmatpush1.msra.mxu0 0.0
    %3107 = vmatprep.subr.mxu0 0.0
    %3108 = vmatpush1.msra.mxu0 0.0
    %3109 = vmatprep.subr.mxu0 0.0
    %3110 = vmatpush1.msra.mxu0 0.0
    %3111 = vmatprep.subr.mxu0 0.0
    %3112 = vmatpush1.msra.mxu0 0.0
    %3113 = vmatprep.subr.mxu0 0.0
    %3114 = vmatpush1.msra.mxu0 0.0
    %3115 = vmatprep.subr.mxu0 0.0
    %3116 = vmatpush1.msra.mxu0 0.0
    %3117 = vmatprep.subr.mxu0 0.0
    %3118 = vmatpush1.msra.mxu0 0.0
    %3119 = vmatprep.subr.mxu0 0.0
    %3120 = vmatpush1.msra.mxu0 0.0
    %3121 = vmatprep.subr.mxu0 0.0
    %3122 = vmatpush1.msra.mxu0 0.0
    %3123 = vmatprep.subr.mxu0 0.0
    %3124 = vmatpush1.msra.mxu0 0.0
    %3125 = vmatprep.subr.mxu0 0.0
    %3126 = vmatpush1.msra.mxu0 0.0
    %3127 = vmatprep.subr.mxu0 0.0
    %3128 = vmatpush1.msra.mxu0 0.0
    %3129 = vmatprep.mubr.f32.mxu0 0.0
    %3130 = vmatmul.mubr.f32.gmra.mrb[0].mxu0 %v3059
    %v3131 = vpop.f32.mrb[0].mxu0
    %v3132 = vadd.f32 0.0, %v3131
    %v3133 = vpop.f32.mrb[0].mxu0
    %v3134 = vadd.f32 0.0, %v3133
    %3135 = vdwg.mxu0
    %3136 = vmatprep.subr.mxu0 %v2012
    %3137 = vmatpush1.msra.mxu0 %v2011
    %3138 = vmatprep.subr.mxu0 %v2016
    %3139 = vmatpush1.msra.mxu0 %v2015
    %3140 = vmatprep.subr.mxu0 %v2020
    %3141 = vmatpush1.msra.mxu0 %v2019
    %3142 = vmatprep.subr.mxu0 %v2024
    %3143 = vmatpush1.msra.mxu0 %v2023
    %3144 = vmatprep.subr.mxu0 %v2028
    %3145 = vmatpush1.msra.mxu0 %v2027
    %3146 = vmatprep.subr.mxu0 %v2032
    %3147 = vmatpush1.msra.mxu0 %v2031
    %3148 = vmatprep.subr.mxu0 %v2036
    %3149 = vmatpush1.msra.mxu0 %v2035
    %3150 = vmatprep.subr.mxu0 %v2040
    %3151 = vmatpush1.msra.mxu0 %v2039
    %3152 = vmatprep.subr.mxu0 %v2044
    %3153 = vmatpush1.msra.mxu0 %v2043
    %3154 = vmatprep.subr.mxu0 %v2048
    %3155 = vmatpush1.msra.mxu0 %v2047
    %3156 = vmatprep.subr.mxu0 %v2052
    %3157 = vmatpush1.msra.mxu0 %v2051
    %3158 = vmatprep.subr.mxu0 %v2056
    %3159 = vmatpush1.msra.mxu0 %v2055
    %3160 = vmatprep.subr.mxu0 %v2060
    %3161 = vmatpush1.msra.mxu0 %v2059
    %3162 = vmatprep.subr.mxu0 %v2064
    %3163 = vmatpush1.msra.mxu0 %v2063
    %3164 = vmatprep.subr.mxu0 %v2068
    %3165 = vmatpush1.msra.mxu0 %v2067
    %3166 = vmatprep.subr.mxu0 %v2072
    %3167 = vmatpush1.msra.mxu0 %v2071
    %3168 = vmatprep.subr.mxu0 0.0
    %3169 = vmatpush1.msra.mxu0 0.0
    %3170 = vmatprep.subr.mxu0 0.0
    %3171 = vmatpush1.msra.mxu0 0.0
    %3172 = vmatprep.subr.mxu0 0.0
    %3173 = vmatpush1.msra.mxu0 0.0
    %3174 = vmatprep.subr.mxu0 0.0
    %3175 = vmatpush1.msra.mxu0 0.0
    %3176 = vmatprep.subr.mxu0 0.0
    %3177 = vmatpush1.msra.mxu0 0.0
    %3178 = vmatprep.subr.mxu0 0.0
    %3179 = vmatpush1.msra.mxu0 0.0
    %3180 = vmatprep.subr.mxu0 0.0
    %3181 = vmatpush1.msra.mxu0 0.0
    %3182 = vmatprep.subr.mxu0 0.0
    %3183 = vmatpush1.msra.mxu0 0.0
    %3184 = vmatprep.subr.mxu0 0.0
    %3185 = vmatpush1.msra.mxu0 0.0
    %3186 = vmatprep.subr.mxu0 0.0
    %3187 = vmatpush1.msra.mxu0 0.0
    %3188 = vmatprep.subr.mxu0 0.0
    %3189 = vmatpush1.msra.mxu0 0.0
    %3190 = vmatprep.subr.mxu0 0.0
    %3191 = vmatpush1.msra.mxu0 0.0
    %3192 = vmatprep.subr.mxu0 0.0
    %3193 = vmatpush1.msra.mxu0 0.0
    %3194 = vmatprep.subr.mxu0 0.0
    %3195 = vmatpush1.msra.mxu0 0.0
    %3196 = vmatprep.subr.mxu0 0.0
    %3197 = vmatpush1.msra.mxu0 0.0
    %3198 = vmatprep.subr.mxu0 0.0
    %3199 = vmatpush1.msra.mxu0 0.0
    %3200 = vmatprep.mubr.f32.mxu0 0.0
    %3201 = vmatmul.mubr.f32.gmra.mrb[0].mxu0 %v3059
    %v3202 = vpop.f32.mrb[0].mxu0
    %v3203 = vadd.f32 0.0, %v3202
    %v3204 = vpop.f32.mrb[0].mxu0
    %v3205 = vadd.f32 0.0, %v3204
    %3206 = vdwg.mxu0
    %v3207 = vadd.f32 %v3061, %v3132
    %v3208 = vadd.f32 %v3062, %v3134
    %v3209 = vadd.f32 %v3063, %v3203
    %v3210 = vadd.f32 %v3064, %v3205
    %v3211 = vxor.u32 %v3207, 2147483648
    %v3212 = vmul.f32 %v3211, 1.442695
    %v3213 = vpow.pop %v3212
    %v3214 = vadd.f32 %v3213, 1.0
    %v3215 = vrcp.pop %v3214
    %v3216 = vmul.f32 1.0, %v3215
    %v3217 = vxor.u32 %v3208, 2147483648
    %v3218 = vmul.f32 %v3217, 1.442695
    %v3219 = vpow.pop %v3218
    %v3220 = vadd.f32 %v3219, 1.0
    %v3221 = vrcp.pop %v3220
    %v3222 = vmul.f32 1.0, %v3221
    %v3223 = vtanh.pop %v3209
    %v3224 = vxor.u32 %v3210, 2147483648
    %v3225 = vmul.f32 %v3224, 1.442695
    %v3226 = vpow.pop %v3225
    %v3227 = vadd.f32 %v3226, 1.0
    %v3228 = vrcp.pop %v3227
    %v3229 = vmul.f32 1.0, %v3228
    %v3230 = vmul.f32 %v3222, %v3057
    %v3231 = vmul.f32 %v3216, %v3223
    %v3232 = vadd.f32 %v3230, %v3231
    %v3233 = vtanh.pop %v3232
    %v3234 = vmul.f32 %v3229, %v3233
    %3235 = vst [vmem:[%s1412] sm:$0xff] %v3234
    %v3236 = vld [vmem:[%s1414] sm:$0xff]
    %v3237 = vld [vmem:[%s1414 + $0x8] sm:$0xff]
    %v3238 = vld [vmem:[%s1414 + $0x10] sm:$0xff]
    %v3239 = vld [vmem:[%s1414 + $0x18] sm:$0xff]
    %3240 = vmatprep.subr.mxu0 %v2010
    %3241 = vmatpush1.msra.mxu0 %v2009
    %3242 = vmatprep.subr.mxu0 %v2014
    %3243 = vmatpush1.msra.mxu0 %v2013
    %3244 = vmatprep.subr.mxu0 %v2018
    %3245 = vmatpush1.msra.mxu0 %v2017
    %3246 = vmatprep.subr.mxu0 %v2022
    %3247 = vmatpush1.msra.mxu0 %v2021
    %3248 = vmatprep.subr.mxu0 %v2026
    %3249 = vmatpush1.msra.mxu0 %v2025
    %3250 = vmatprep.subr.mxu0 %v2030
    %3251 = vmatpush1.msra.mxu0 %v2029
    %3252 = vmatprep.subr.mxu0 %v2034
    %3253 = vmatpush1.msra.mxu0 %v2033
    %3254 = vmatprep.subr.mxu0 %v2038
    %3255 = vmatpush1.msra.mxu0 %v2037
    %3256 = vmatprep.subr.mxu0 %v2042
    %3257 = vmatpush1.msra.mxu0 %v2041
    %3258 = vmatprep.subr.mxu0 %v2046
    %3259 = vmatpush1.msra.mxu0 %v2045
    %3260 = vmatprep.subr.mxu0 %v2050
    %3261 = vmatpush1.msra.mxu0 %v2049
    %3262 = vmatprep.subr.mxu0 %v2054
    %3263 = vmatpush1.msra.mxu0 %v2053
    %3264 = vmatprep.subr.mxu0 %v2058
    %3265 = vmatpush1.msra.mxu0 %v2057
    %3266 = vmatprep.subr.mxu0 %v2062
    %3267 = vmatpush1.msra.mxu0 %v2061
    %3268 = vmatprep.subr.mxu0 %v2066
    %3269 = vmatpush1.msra.mxu0 %v2065
    %3270 = vmatprep.subr.mxu0 %v2070
    %3271 = vmatpush1.msra.mxu0 %v2069
    %3272 = vmatprep.subr.mxu0 0.0
    %3273 = vmatpush1.msra.mxu0 0.0
    %3274 = vmatprep.subr.mxu0 0.0
    %3275 = vmatpush1.msra.mxu0 0.0
    %3276 = vmatprep.subr.mxu0 0.0
    %3277 = vmatpush1.msra.mxu0 0.0
    %3278 = vmatprep.subr.mxu0 0.0
    %3279 = vmatpush1.msra.mxu0 0.0
    %3280 = vmatprep.subr.mxu0 0.0
    %3281 = vmatpush1.msra.mxu0 0.0
    %3282 = vmatprep.subr.mxu0 0.0
    %3283 = vmatpush1.msra.mxu0 0.0
    %3284 = vmatprep.subr.mxu0 0.0
    %3285 = vmatpush1.msra.mxu0 0.0
    %3286 = vmatprep.subr.mxu0 0.0
    %3287 = vmatpush1.msra.mxu0 0.0
    %3288 = vmatprep.subr.mxu0 0.0
    %3289 = vmatpush1.msra.mxu0 0.0
    %3290 = vmatprep.subr.mxu0 0.0
    %3291 = vmatpush1.msra.mxu0 0.0
    %3292 = vmatprep.subr.mxu0 0.0
    %3293 = vmatpush1.msra.mxu0 0.0
    %3294 = vmatprep.subr.mxu0 0.0
    %3295 = vmatpush1.msra.mxu0 0.0
    %3296 = vmatprep.subr.mxu0 0.0
    %3297 = vmatpush1.msra.mxu0 0.0
    %3298 = vmatprep.subr.mxu0 0.0
    %3299 = vmatpush1.msra.mxu0 0.0
    %3300 = vmatprep.subr.mxu0 0.0
    %3301 = vmatpush1.msra.mxu0 0.0
    %3302 = vmatprep.subr.mxu0 0.0
    %3303 = vmatpush1.msra.mxu0 0.0
    %3304 = vmatprep.mubr.f32.mxu0 0.0
    %3305 = vmatmul.mubr.f32.gmra.mrb[0].mxu0 %v3234
    %v3306 = vpop.f32.mrb[0].mxu0
    %v3307 = vadd.f32 0.0, %v3306
    %v3308 = vpop.f32.mrb[0].mxu0
    %v3309 = vadd.f32 0.0, %v3308
    %3310 = vdwg.mxu0
    %3311 = vmatprep.subr.mxu0 %v2012
    %3312 = vmatpush1.msra.mxu0 %v2011
    %3313 = vmatprep.subr.mxu0 %v2016
    %3314 = vmatpush1.msra.mxu0 %v2015
    %3315 = vmatprep.subr.mxu0 %v2020
    %3316 = vmatpush1.msra.mxu0 %v2019
    %3317 = vmatprep.subr.mxu0 %v2024
    %3318 = vmatpush1.msra.mxu0 %v2023
    %3319 = vmatprep.subr.mxu0 %v2028
    %3320 = vmatpush1.msra.mxu0 %v2027
    %3321 = vmatprep.subr.mxu0 %v2032
    %3322 = vmatpush1.msra.mxu0 %v2031
    %3323 = vmatprep.subr.mxu0 %v2036
    %3324 = vmatpush1.msra.mxu0 %v2035
    %3325 = vmatprep.subr.mxu0 %v2040
    %3326 = vmatpush1.msra.mxu0 %v2039
    %3327 = vmatprep.subr.mxu0 %v2044
    %3328 = vmatpush1.msra.mxu0 %v2043
    %3329 = vmatprep.subr.mxu0 %v2048
    %3330 = vmatpush1.msra.mxu0 %v2047
    %3331 = vmatprep.subr.mxu0 %v2052
    %3332 = vmatpush1.msra.mxu0 %v2051
    %3333 = vmatprep.subr.mxu0 %v2056
    %3334 = vmatpush1.msra.mxu0 %v2055
    %3335 = vmatprep.subr.mxu0 %v2060
    %3336 = vmatpush1.msra.mxu0 %v2059
    %3337 = vmatprep.subr.mxu0 %v2064
    %3338 = vmatpush1.msra.mxu0 %v2063
    %3339 = vmatprep.subr.mxu0 %v2068
    %3340 = vmatpush1.msra.mxu0 %v2067
    %3341 = vmatprep.subr.mxu0 %v2072
    %3342 = vmatpush1.msra.mxu0 %v2071
    %3343 = vmatprep.subr.mxu0 0.0
    %3344 = vmatpush1.msra.mxu0 0.0
    %3345 = vmatprep.subr.mxu0 0.0
    %3346 = vmatpush1.msra.mxu0 0.0
    %3347 = vmatprep.subr.mxu0 0.0
    %3348 = vmatpush1.msra.mxu0 0.0
    %3349 = vmatprep.subr.mxu0 0.0
    %3350 = vmatpush1.msra.mxu0 0.0
    %3351 = vmatprep.subr.mxu0 0.0
    %3352 = vmatpush1.msra.mxu0 0.0
    %3353 = vmatprep.subr.mxu0 0.0
    %3354 = vmatpush1.msra.mxu0 0.0
    %3355 = vmatprep.subr.mxu0 0.0
    %3356 = vmatpush1.msra.mxu0 0.0
    %3357 = vmatprep.subr.mxu0 0.0
    %3358 = vmatpush1.msra.mxu0 0.0
    %3359 = vmatprep.subr.mxu0 0.0
    %3360 = vmatpush1.msra.mxu0 0.0
    %3361 = vmatprep.subr.mxu0 0.0
    %3362 = vmatpush1.msra.mxu0 0.0
    %3363 = vmatprep.subr.mxu0 0.0
    %3364 = vmatpush1.msra.mxu0 0.0
    %3365 = vmatprep.subr.mxu0 0.0
    %3366 = vmatpush1.msra.mxu0 0.0
    %3367 = vmatprep.subr.mxu0 0.0
    %3368 = vmatpush1.msra.mxu0 0.0
    %3369 = vmatprep.subr.mxu0 0.0
    %3370 = vmatpush1.msra.mxu0 0.0
    %3371 = vmatprep.subr.mxu0 0.0
    %3372 = vmatpush1.msra.mxu0 0.0
    %3373 = vmatprep.subr.mxu0 0.0
    %3374 = vmatpush1.msra.mxu0 0.0
    %3375 = vmatprep.mubr.f32.mxu0 0.0
    %3376 = vmatmul.mubr.f32.gmra.mrb[0].mxu0 %v3234
    %v3377 = vpop.f32.mrb[0].mxu0
    %v3378 = vadd.f32 0.0, %v3377
    %v3379 = vpop.f32.mrb[0].mxu0
    %v3380 = vadd.f32 0.0, %v3379
    %3381 = vdwg.mxu0
    %v3382 = vadd.f32 %v3236, %v3307
    %v3383 = vadd.f32 %v3237, %v3309
    %v3384 = vadd.f32 %v3238, %v3378
    %v3385 = vadd.f32 %v3239, %v3380
    %v3386 = vxor.u32 %v3382, 2147483648
    %v3387 = vmul.f32 %v3386, 1.442695
    %v3388 = vpow.pop %v3387
    %v3389 = vadd.f32 %v3388, 1.0
    %v3390 = vrcp.pop %v3389
    %v3391 = vmul.f32 1.0, %v3390
    %v3392 = vxor.u32 %v3383, 2147483648
    %v3393 = vmul.f32 %v3392, 1.442695
    %v3394 = vpow.pop %v3393
    %v3395 = vadd.f32 %v3394, 1.0
    %v3396 = vrcp.pop %v3395
    %v3397 = vmul.f32 1.0, %v3396
    %v3398 = vtanh.pop %v3384
    %v3399 = vxor.u32 %v3385, 2147483648
    %v3400 = vmul.f32 %v3399, 1.442695
    %v3401 = vpow.pop %v3400
    %v3402 = vadd.f32 %v3401, 1.0
    %v3403 = vrcp.pop %v3402
    %v3404 = vmul.f32 1.0, %v3403
    %v3405 = vmul.f32 %v3397, %v3232
    %v3406 = vmul.f32 %v3391, %v3398
    %v3407 = vadd.f32 %v3405, %v3406
    %v3408 = vtanh.pop %v3407
    %v3409 = vmul.f32 %v3404, %v3408
    %3410 = vst [vmem:[%s1589] sm:$0xff] %v3409
    %v3411 = vld [vmem:[%s1591] sm:$0xff]
    %v3412 = vld [vmem:[%s1591 + $0x8] sm:$0xff]
    %v3413 = vld [vmem:[%s1591 + $0x10] sm:$0xff]
    %v3414 = vld [vmem:[%s1591 + $0x18] sm:$0xff]
    %3415 = vmatprep.subr.mxu0 %v2010
    %3416 = vmatpush1.msra.mxu0 %v2009
    %3417 = vmatprep.subr.mxu0 %v2014
    %3418 = vmatpush1.msra.mxu0 %v2013
    %3419 = vmatprep.subr.mxu0 %v2018
    %3420 = vmatpush1.msra.mxu0 %v2017
    %3421 = vmatprep.subr.mxu0 %v2022
    %3422 = vmatpush1.msra.mxu0 %v2021
    %3423 = vmatprep.subr.mxu0 %v2026
    %3424 = vmatpush1.msra.mxu0 %v2025
    %3425 = vmatprep.subr.mxu0 %v2030
    %3426 = vmatpush1.msra.mxu0 %v2029
    %3427 = vmatprep.subr.mxu0 %v2034
    %3428 = vmatpush1.msra.mxu0 %v2033
    %3429 = vmatprep.subr.mxu0 %v2038
    %3430 = vmatpush1.msra.mxu0 %v2037
    %3431 = vmatprep.subr.mxu0 %v2042
    %3432 = vmatpush1.msra.mxu0 %v2041
    %3433 = vmatprep.subr.mxu0 %v2046
    %3434 = vmatpush1.msra.mxu0 %v2045
    %3435 = vmatprep.subr.mxu0 %v2050
    %3436 = vmatpush1.msra.mxu0 %v2049
    %3437 = vmatprep.subr.mxu0 %v2054
    %3438 = vmatpush1.msra.mxu0 %v2053
    %3439 = vmatprep.subr.mxu0 %v2058
    %3440 = vmatpush1.msra.mxu0 %v2057
    %3441 = vmatprep.subr.mxu0 %v2062
    %3442 = vmatpush1.msra.mxu0 %v2061
    %3443 = vmatprep.subr.mxu0 %v2066
    %3444 = vmatpush1.msra.mxu0 %v2065
    %3445 = vmatprep.subr.mxu0 %v2070
    %3446 = vmatpush1.msra.mxu0 %v2069
    %3447 = vmatprep.subr.mxu0 0.0
    %3448 = vmatpush1.msra.mxu0 0.0
    %3449 = vmatprep.subr.mxu0 0.0
    %3450 = vmatpush1.msra.mxu0 0.0
    %3451 = vmatprep.subr.mxu0 0.0
    %3452 = vmatpush1.msra.mxu0 0.0
    %3453 = vmatprep.subr.mxu0 0.0
    %3454 = vmatpush1.msra.mxu0 0.0
    %3455 = vmatprep.subr.mxu0 0.0
    %3456 = vmatpush1.msra.mxu0 0.0
    %3457 = vmatprep.subr.mxu0 0.0
    %3458 = vmatpush1.msra.mxu0 0.0
    %3459 = vmatprep.subr.mxu0 0.0
    %3460 = vmatpush1.msra.mxu0 0.0
    %3461 = vmatprep.subr.mxu0 0.0
    %3462 = vmatpush1.msra.mxu0 0.0
    %3463 = vmatprep.subr.mxu0 0.0
    %3464 = vmatpush1.msra.mxu0 0.0
    %3465 = vmatprep.subr.mxu0 0.0
    %3466 = vmatpush1.msra.mxu0 0.0
    %3467 = vmatprep.subr.mxu0 0.0
    %3468 = vmatpush1.msra.mxu0 0.0
    %3469 = vmatprep.subr.mxu0 0.0
    %3470 = vmatpush1.msra.mxu0 0.0
    %3471 = vmatprep.subr.mxu0 0.0
    %3472 = vmatpush1.msra.mxu0 0.0
    %3473 = vmatprep.subr.mxu0 0.0
    %3474 = vmatpush1.msra.mxu0 0.0
    %3475 = vmatprep.subr.mxu0 0.0
    %3476 = vmatpush1.msra.mxu0 0.0
    %3477 = vmatprep.subr.mxu0 0.0
    %3478 = vmatpush1.msra.mxu0 0.0
    %3479 = vmatprep.mubr.f32.mxu0 0.0
    %3480 = vmatmul.mubr.f32.gmra.mrb[0].mxu0 %v3409
    %v3481 = vpop.f32.mrb[0].mxu0
    %v3482 = vadd.f32 0.0, %v3481
    %v3483 = vpop.f32.mrb[0].mxu0
    %v3484 = vadd.f32 0.0, %v3483
    %3485 = vdwg.mxu0
    %3486 = vmatprep.subr.mxu0 %v2012
    %3487 = vmatpush1.msra.mxu0 %v2011
    %3488 = vmatprep.subr.mxu0 %v2016
    %3489 = vmatpush1.msra.mxu0 %v2015
    %3490 = vmatprep.subr.mxu0 %v2020
    %3491 = vmatpush1.msra.mxu0 %v2019
    %3492 = vmatprep.subr.mxu0 %v2024
    %3493 = vmatpush1.msra.mxu0 %v2023
    %3494 = vmatprep.subr.mxu0 %v2028
    %3495 = vmatpush1.msra.mxu0 %v2027
    %3496 = vmatprep.subr.mxu0 %v2032
    %3497 = vmatpush1.msra.mxu0 %v2031
    %3498 = vmatprep.subr.mxu0 %v2036
    %3499 = vmatpush1.msra.mxu0 %v2035
    %3500 = vmatprep.subr.mxu0 %v2040
    %3501 = vmatpush1.msra.mxu0 %v2039
    %3502 = vmatprep.subr.mxu0 %v2044
    %3503 = vmatpush1.msra.mxu0 %v2043
    %3504 = vmatprep.subr.mxu0 %v2048
    %3505 = vmatpush1.msra.mxu0 %v2047
    %3506 = vmatprep.subr.mxu0 %v2052
    %3507 = vmatpush1.msra.mxu0 %v2051
    %3508 = vmatprep.subr.mxu0 %v2056
    %3509 = vmatpush1.msra.mxu0 %v2055
    %3510 = vmatprep.subr.mxu0 %v2060
    %3511 = vmatpush1.msra.mxu0 %v2059
    %3512 = vmatprep.subr.mxu0 %v2064
    %3513 = vmatpush1.msra.mxu0 %v2063
    %3514 = vmatprep.subr.mxu0 %v2068
    %3515 = vmatpush1.msra.mxu0 %v2067
    %3516 = vmatprep.subr.mxu0 %v2072
    %3517 = vmatpush1.msra.mxu0 %v2071
    %3518 = vmatprep.subr.mxu0 0.0
    %3519 = vmatpush1.msra.mxu0 0.0
    %3520 = vmatprep.subr.mxu0 0.0
    %3521 = vmatpush1.msra.mxu0 0.0
    %3522 = vmatprep.subr.mxu0 0.0
    %3523 = vmatpush1.msra.mxu0 0.0
    %3524 = vmatprep.subr.mxu0 0.0
    %3525 = vmatpush1.msra.mxu0 0.0
    %3526 = vmatprep.subr.mxu0 0.0
    %3527 = vmatpush1.msra.mxu0 0.0
    %3528 = vmatprep.subr.mxu0 0.0
    %3529 = vmatpush1.msra.mxu0 0.0
    %3530 = vmatprep.subr.mxu0 0.0
    %3531 = vmatpush1.msra.mxu0 0.0
    %3532 = vmatprep.subr.mxu0 0.0
    %3533 = vmatpush1.msra.mxu0 0.0
    %3534 = vmatprep.subr.mxu0 0.0
    %3535 = vmatpush1.msra.mxu0 0.0
    %3536 = vmatprep.subr.mxu0 0.0
    %3537 = vmatpush1.msra.mxu0 0.0
    %3538 = vmatprep.subr.mxu0 0.0
    %3539 = vmatpush1.msra.mxu0 0.0
    %3540 = vmatprep.subr.mxu0 0.0
    %3541 = vmatpush1.msra.mxu0 0.0
    %3542 = vmatprep.subr.mxu0 0.0
    %3543 = vmatpush1.msra.mxu0 0.0
    %3544 = vmatprep.subr.mxu0 0.0
    %3545 = vmatpush1.msra.mxu0 0.0
    %3546 = vmatprep.subr.mxu0 0.0
    %3547 = vmatpush1.msra.mxu0 0.0
    %3548 = vmatprep.subr.mxu0 0.0
    %3549 = vmatpush1.msra.mxu0 0.0
    %3550 = vmatprep.mubr.f32.mxu0 0.0
    %3551 = vmatmul.mubr.f32.gmra.mrb[0].mxu0 %v3409
    %v3552 = vpop.f32.mrb[0].mxu0
    %v3553 = vadd.f32 0.0, %v3552
    %v3554 = vpop.f32.mrb[0].mxu0
    %v3555 = vadd.f32 0.0, %v3554
    %3556 = vdwg.mxu0
    %v3557 = vadd.f32 %v3411, %v3482
    %v3558 = vadd.f32 %v3412, %v3484
    %v3559 = vadd.f32 %v3413, %v3553
    %v3560 = vadd.f32 %v3414, %v3555
    %v3561 = vxor.u32 %v3557, 2147483648
    %v3562 = vmul.f32 %v3561, 1.442695
    %v3563 = vpow.pop %v3562
    %v3564 = vadd.f32 %v3563, 1.0
    %v3565 = vrcp.pop %v3564
    %v3566 = vmul.f32 1.0, %v3565
    %v3567 = vxor.u32 %v3558, 2147483648
    %v3568 = vmul.f32 %v3567, 1.442695
    %v3569 = vpow.pop %v3568
    %v3570 = vadd.f32 %v3569, 1.0
    %v3571 = vrcp.pop %v3570
    %v3572 = vmul.f32 1.0, %v3571
    %v3573 = vtanh.pop %v3559
    %v3574 = vxor.u32 %v3560, 2147483648
    %v3575 = vmul.f32 %v3574, 1.442695
    %v3576 = vpow.pop %v3575
    %v3577 = vadd.f32 %v3576, 1.0
    %v3578 = vrcp.pop %v3577
    %v3579 = vmul.f32 1.0, %v3578
    %v3580 = vmul.f32 %v3572, %v3407
    %v3581 = vmul.f32 %v3566, %v3573
    %v3582 = vadd.f32 %v3580, %v3581
    %v3583 = vtanh.pop %v3582
    %v3584 = vmul.f32 %v3579, %v3583
    %3585 = vst [vmem:[%s1766] sm:$0xff] %v3584
    %v3586 = vld [vmem:[%s1768] sm:$0xff]
    %v3587 = vld [vmem:[%s1768 + $0x8] sm:$0xff]
    %v3588 = vld [vmem:[%s1768 + $0x10] sm:$0xff]
    %v3589 = vld [vmem:[%s1768 + $0x18] sm:$0xff]
    %3590 = vmatprep.subr.mxu0 %v2010
    %3591 = vmatpush1.msra.mxu0 %v2009
    %3592 = vmatprep.subr.mxu0 %v2014
    %3593 = vmatpush1.msra.mxu0 %v2013
    %3594 = vmatprep.subr.mxu0 %v2018
    %3595 = vmatpush1.msra.mxu0 %v2017
    %3596 = vmatprep.subr.mxu0 %v2022
    %3597 = vmatpush1.msra.mxu0 %v2021
    %3598 = vmatprep.subr.mxu0 %v2026
    %3599 = vmatpush1.msra.mxu0 %v2025
    %3600 = vmatprep.subr.mxu0 %v2030
    %3601 = vmatpush1.msra.mxu0 %v2029
    %3602 = vmatprep.subr.mxu0 %v2034
    %3603 = vmatpush1.msra.mxu0 %v2033
    %3604 = vmatprep.subr.mxu0 %v2038
    %3605 = vmatpush1.msra.mxu0 %v2037
    %3606 = vmatprep.subr.mxu0 %v2042
    %3607 = vmatpush1.msra.mxu0 %v2041
    %3608 = vmatprep.subr.mxu0 %v2046
    %3609 = vmatpush1.msra.mxu0 %v2045
    %3610 = vmatprep.subr.mxu0 %v2050
    %3611 = vmatpush1.msra.mxu0 %v2049
    %3612 = vmatprep.subr.mxu0 %v2054
    %3613 = vmatpush1.msra.mxu0 %v2053
    %3614 = vmatprep.subr.mxu0 %v2058
    %3615 = vmatpush1.msra.mxu0 %v2057
    %3616 = vmatprep.subr.mxu0 %v2062
    %3617 = vmatpush1.msra.mxu0 %v2061
    %3618 = vmatprep.subr.mxu0 %v2066
    %3619 = vmatpush1.msra.mxu0 %v2065
    %3620 = vmatprep.subr.mxu0 %v2070
    %3621 = vmatpush1.msra.mxu0 %v2069
    %3622 = vmatprep.subr.mxu0 0.0
    %3623 = vmatpush1.msra.mxu0 0.0
    %3624 = vmatprep.subr.mxu0 0.0
    %3625 = vmatpush1.msra.mxu0 0.0
    %3626 = vmatprep.subr.mxu0 0.0
    %3627 = vmatpush1.msra.mxu0 0.0
    %3628 = vmatprep.subr.mxu0 0.0
    %3629 = vmatpush1.msra.mxu0 0.0
    %3630 = vmatprep.subr.mxu0 0.0
    %3631 = vmatpush1.msra.mxu0 0.0
    %3632 = vmatprep.subr.mxu0 0.0
    %3633 = vmatpush1.msra.mxu0 0.0
    %3634 = vmatprep.subr.mxu0 0.0
    %3635 = vmatpush1.msra.mxu0 0.0
    %3636 = vmatprep.subr.mxu0 0.0
    %3637 = vmatpush1.msra.mxu0 0.0
    %3638 = vmatprep.subr.mxu0 0.0
    %3639 = vmatpush1.msra.mxu0 0.0
    %3640 = vmatprep.subr.mxu0 0.0
    %3641 = vmatpush1.msra.mxu0 0.0
    %3642 = vmatprep.subr.mxu0 0.0
    %3643 = vmatpush1.msra.mxu0 0.0
    %3644 = vmatprep.subr.mxu0 0.0
    %3645 = vmatpush1.msra.mxu0 0.0
    %3646 = vmatprep.subr.mxu0 0.0
    %3647 = vmatpush1.msra.mxu0 0.0
    %3648 = vmatprep.subr.mxu0 0.0
    %3649 = vmatpush1.msra.mxu0 0.0
    %3650 = vmatprep.subr.mxu0 0.0
    %3651 = vmatpush1.msra.mxu0 0.0
    %3652 = vmatprep.subr.mxu0 0.0
    %3653 = vmatpush1.msra.mxu0 0.0
    %3654 = vmatprep.mubr.f32.mxu0 0.0
    %3655 = vmatmul.mubr.f32.gmra.mrb[0].mxu0 %v3584
    %v3656 = vpop.f32.mrb[0].mxu0
    %v3657 = vadd.f32 0.0, %v3656
    %v3658 = vpop.f32.mrb[0].mxu0
    %v3659 = vadd.f32 0.0, %v3658
    %3660 = vdwg.mxu0
    %3661 = vmatprep.subr.mxu0 %v2012
    %3662 = vmatpush1.msra.mxu0 %v2011
    %3663 = vmatprep.subr.mxu0 %v2016
    %3664 = vmatpush1.msra.mxu0 %v2015
    %3665 = vmatprep.subr.mxu0 %v2020
    %3666 = vmatpush1.msra.mxu0 %v2019
    %3667 = vmatprep.subr.mxu0 %v2024
    %3668 = vmatpush1.msra.mxu0 %v2023
    %3669 = vmatprep.subr.mxu0 %v2028
    %3670 = vmatpush1.msra.mxu0 %v2027
    %3671 = vmatprep.subr.mxu0 %v2032
    %3672 = vmatpush1.msra.mxu0 %v2031
    %3673 = vmatprep.subr.mxu0 %v2036
    %3674 = vmatpush1.msra.mxu0 %v2035
    %3675 = vmatprep.subr.mxu0 %v2040
    %3676 = vmatpush1.msra.mxu0 %v2039
    %3677 = vmatprep.subr.mxu0 %v2044
    %3678 = vmatpush1.msra.mxu0 %v2043
    %3679 = vmatprep.subr.mxu0 %v2048
    %3680 = vmatpush1.msra.mxu0 %v2047
    %3681 = vmatprep.subr.mxu0 %v2052
    %3682 = vmatpush1.msra.mxu0 %v2051
    %3683 = vmatprep.subr.mxu0 %v2056
    %3684 = vmatpush1.msra.mxu0 %v2055
    %3685 = vmatprep.subr.mxu0 %v2060
    %3686 = vmatpush1.msra.mxu0 %v2059
    %3687 = vmatprep.subr.mxu0 %v2064
    %3688 = vmatpush1.msra.mxu0 %v2063
    %3689 = vmatprep.subr.mxu0 %v2068
    %3690 = vmatpush1.msra.mxu0 %v2067
    %3691 = vmatprep.subr.mxu0 %v2072
    %3692 = vmatpush1.msra.mxu0 %v2071
    %3693 = vmatprep.subr.mxu0 0.0
    %3694 = vmatpush1.msra.mxu0 0.0
    %3695 = vmatprep.subr.mxu0 0.0
    %3696 = vmatpush1.msra.mxu0 0.0
    %3697 = vmatprep.subr.mxu0 0.0
    %3698 = vmatpush1.msra.mxu0 0.0
    %3699 = vmatprep.subr.mxu0 0.0
    %3700 = vmatpush1.msra.mxu0 0.0
    %3701 = vmatprep.subr.mxu0 0.0
    %3702 = vmatpush1.msra.mxu0 0.0
    %3703 = vmatprep.subr.mxu0 0.0
    %3704 = vmatpush1.msra.mxu0 0.0
    %3705 = vmatprep.subr.mxu0 0.0
    %3706 = vmatpush1.msra.mxu0 0.0
    %3707 = vmatprep.subr.mxu0 0.0
    %3708 = vmatpush1.msra.mxu0 0.0
    %3709 = vmatprep.subr.mxu0 0.0
    %3710 = vmatpush1.msra.mxu0 0.0
    %3711 = vmatprep.subr.mxu0 0.0
    %3712 = vmatpush1.msra.mxu0 0.0
    %3713 = vmatprep.subr.mxu0 0.0
    %3714 = vmatpush1.msra.mxu0 0.0
    %3715 = vmatprep.subr.mxu0 0.0
    %3716 = vmatpush1.msra.mxu0 0.0
    %3717 = vmatprep.subr.mxu0 0.0
    %3718 = vmatpush1.msra.mxu0 0.0
    %3719 = vmatprep.subr.mxu0 0.0
    %3720 = vmatpush1.msra.mxu0 0.0
    %3721 = vmatprep.subr.mxu0 0.0
    %3722 = vmatpush1.msra.mxu0 0.0
    %3723 = vmatprep.subr.mxu0 0.0
    %3724 = vmatpush1.msra.mxu0 0.0
    %3725 = vmatprep.mubr.f32.mxu0 0.0
    %3726 = vmatmul.mubr.f32.gmra.mrb[0].mxu0 %v3584
    %v3727 = vpop.f32.mrb[0].mxu0
    %v3728 = vadd.f32 0.0, %v3727
    %v3729 = vpop.f32.mrb[0].mxu0
    %v3730 = vadd.f32 0.0, %v3729
    %3731 = vdwg.mxu0
    %v3732 = vadd.f32 %v3586, %v3657
    %v3733 = vadd.f32 %v3587, %v3659
    %v3734 = vadd.f32 %v3588, %v3728
    %v3735 = vadd.f32 %v3589, %v3730
    %v3736 = vxor.u32 %v3732, 2147483648
    %v3737 = vmul.f32 %v3736, 1.442695
    %v3738 = vpow.pop %v3737
    %v3739 = vadd.f32 %v3738, 1.0
    %v3740 = vrcp.pop %v3739
    %v3741 = vmul.f32 1.0, %v3740
    %v3742 = vxor.u32 %v3733, 2147483648
    %v3743 = vmul.f32 %v3742, 1.442695
    %v3744 = vpow.pop %v3743
    %v3745 = vadd.f32 %v3744, 1.0
    %v3746 = vrcp.pop %v3745
    %v3747 = vmul.f32 1.0, %v3746
    %v3748 = vtanh.pop %v3734
    %v3749 = vxor.u32 %v3735, 2147483648
    %v3750 = vmul.f32 %v3749, 1.442695
    %v3751 = vpow.pop %v3750
    %v3752 = vadd.f32 %v3751, 1.0
    %v3753 = vrcp.pop %v3752
    %v3754 = vmul.f32 1.0, %v3753
    %v3755 = vmul.f32 %v3747, %v3582
    %v3756 = vmul.f32 %v3741, %v3748
    %v3757 = vadd.f32 %v3755, %v3756
    %v3758 = vtanh.pop %v3757
    %v3759 = vmul.f32 %v3754, %v3758
    %3760 = vst [vmem:[%s1943] sm:$0xff] %v3759
    %v3761 = vld [vmem:[#allocation3] sm:$0xff]
    %v3762 = vld [vmem:[#allocation3 + $0x8] sm:$0xff]
    %v3763 = vld [vmem:[#allocation3 + $0x10] sm:$0xff]
    %v3764 = vld [vmem:[#allocation3 + $0x18] sm:$0xff]
    %v3765 = vld [vmem:[#allocation3 + $0x20] sm:$0xff]
    %v3766 = vld [vmem:[#allocation3 + $0x28] sm:$0xff]
    %v3767 = vld [vmem:[#allocation3 + $0x30] sm:$0xff]
    %v3768 = vld [vmem:[#allocation3 + $0x38] sm:$0xff]
    %v3769 = vld [vmem:[#allocation13] sm:$0xff]
    %v3770 = vld [vmem:[#allocation13 + $0x8] sm:$0xff]
    %v3771 = vld [vmem:[#allocation13 + $0x10] sm:$0xff]
    %v3772 = vld [vmem:[#allocation13 + $0x18] sm:$0xff]
    %v3773 = vld [vmem:[#allocation13 + $0x20] sm:$0xff]
    %v3774 = vld [vmem:[#allocation13 + $0x28] sm:$0xff]
    %v3775 = vld [vmem:[#allocation13 + $0x30] sm:$0xff]
    %v3776 = vld [vmem:[#allocation13 + $0x38] sm:$0xff]
    %v3777 = vld [vmem:[#allocation13 + $0x40] sm:$0xff]
    %v3778 = vld [vmem:[#allocation13 + $0x48] sm:$0xff]
    %v3779 = vld [vmem:[#allocation13 + $0x50] sm:$0xff]
    %v3780 = vld [vmem:[#allocation13 + $0x58] sm:$0xff]
    %v3781 = vld [vmem:[#allocation13 + $0x60] sm:$0xff]
    %v3782 = vld [vmem:[#allocation13 + $0x68] sm:$0xff]
    %v3783 = vld [vmem:[#allocation13 + $0x70] sm:$0xff]
    %v3784 = vld [vmem:[#allocation13 + $0x78] sm:$0xff]
    %v3785 = vld [vmem:[%s8] sm:$0x1]
    %v3787 = vlaneseq
    %v3788 = vshrl.u32 %v3787, 7
    %v3789 = vsub.s32 0, %v3788
    %v3790 = vrot.slane %v3785, %v3789
    %3792 = vmatprep.subr.mxu0 0.0
    %3793 = vmatpush1.msra.mxu0 %v3769
    %3794 = vmatprep.subr.mxu0 0.0
    %3795 = vmatpush1.msra.mxu0 %v3770
    %3796 = vmatprep.subr.mxu0 0.0
    %3797 = vmatpush1.msra.mxu0 %v3771
    %3798 = vmatprep.subr.mxu0 0.0
    %3799 = vmatpush1.msra.mxu0 %v3772
    %3800 = vmatprep.subr.mxu0 0.0
    %3801 = vmatpush1.msra.mxu0 %v3773
    %3802 = vmatprep.subr.mxu0 0.0
    %3803 = vmatpush1.msra.mxu0 %v3774
    %3804 = vmatprep.subr.mxu0 0.0
    %3805 = vmatpush1.msra.mxu0 %v3775
    %3806 = vmatprep.subr.mxu0 0.0
    %3807 = vmatpush1.msra.mxu0 %v3776
    %3808 = vmatprep.subr.mxu0 0.0
    %3809 = vmatpush1.msra.mxu0 %v3777
    %3810 = vmatprep.subr.mxu0 0.0
    %3811 = vmatpush1.msra.mxu0 %v3778
    %3812 = vmatprep.subr.mxu0 0.0
    %3813 = vmatpush1.msra.mxu0 %v3779
    %3814 = vmatprep.subr.mxu0 0.0
    %3815 = vmatpush1.msra.mxu0 %v3780
    %3816 = vmatprep.subr.mxu0 0.0
    %3817 = vmatpush1.msra.mxu0 %v3781
    %3818 = vmatprep.subr.mxu0 0.0
    %3819 = vmatpush1.msra.mxu0 %v3782
    %3820 = vmatprep.subr.mxu0 0.0
    %3821 = vmatpush1.msra.mxu0 %v3783
    %3822 = vmatprep.subr.mxu0 0.0
    %3823 = vmatpush1.msra.mxu0 %v3784
    %3824 = vmatprep.subr.mxu0 0.0
    %3825 = vmatpush1.msra.mxu0 0.0
    %3826 = vmatprep.subr.mxu0 0.0
    %3827 = vmatpush1.msra.mxu0 0.0
    %3828 = vmatprep.subr.mxu0 0.0
    %3829 = vmatpush1.msra.mxu0 0.0
    %3830 = vmatprep.subr.mxu0 0.0
    %3831 = vmatpush1.msra.mxu0 0.0
    %3832 = vmatprep.subr.mxu0 0.0
    %3833 = vmatpush1.msra.mxu0 0.0
    %3834 = vmatprep.subr.mxu0 0.0
    %3835 = vmatpush1.msra.mxu0 0.0
    %3836 = vmatprep.subr.mxu0 0.0
    %3837 = vmatpush1.msra.mxu0 0.0
    %3838 = vmatprep.subr.mxu0 0.0
    %3839 = vmatpush1.msra.mxu0 0.0
    %3840 = vmatprep.subr.mxu0 0.0
    %3841 = vmatpush1.msra.mxu0 0.0
    %3842 = vmatprep.subr.mxu0 0.0
    %3843 = vmatpush1.msra.mxu0 0.0
    %3844 = vmatprep.subr.mxu0 0.0
    %3845 = vmatpush1.msra.mxu0 0.0
    %3846 = vmatprep.subr.mxu0 0.0
    %3847 = vmatpush1.msra.mxu0 0.0
    %3848 = vmatprep.subr.mxu0 0.0
    %3849 = vmatpush1.msra.mxu0 0.0
    %3850 = vmatprep.subr.mxu0 0.0
    %3851 = vmatpush1.msra.mxu0 0.0
    %3852 = vmatprep.subr.mxu0 0.0
    %3853 = vmatpush1.msra.mxu0 0.0
    %3854 = vmatprep.subr.mxu0 0.0
    %3855 = vmatpush1.msra.mxu0 0.0
    %3856 = vmatprep.mubr.f32.mxu0 0.0
    %3857 = vmatmul.mubr.f32.gmra.mrb[0].mxu0 %v3761
    %v3858 = vpop.f32.mrb[0].mxu0
    %v3859 = vadd.f32 %v3790, %v3858
    %v3860 = vpop.f32.mrb[0].mxu0
    %3861 = vmatprep.mubr.f32.mxu0 0.0
    %3862 = vmatmul.mubr.f32.gmra.mrb[0].mxu0 %v3762
    %v3863 = vpop.f32.mrb[0].mxu0
    %v3864 = vadd.f32 %v3790, %v3863
    %v3865 = vpop.f32.mrb[0].mxu0
    %3866 = vmatprep.mubr.f32.mxu0 0.0
    %3867 = vmatmul.mubr.f32.gmra.mrb[0].mxu0 %v3763
    %v3868 = vpop.f32.mrb[0].mxu0
    %v3869 = vadd.f32 %v3790, %v3868
    %v3870 = vpop.f32.mrb[0].mxu0
    %3871 = vmatprep.mubr.f32.mxu0 0.0
    %3872 = vmatmul.mubr.f32.gmra.mrb[0].mxu0 %v3764
    %v3873 = vpop.f32.mrb[0].mxu0
    %v3874 = vadd.f32 %v3790, %v3873
    %v3875 = vpop.f32.mrb[0].mxu0
    %3876 = vmatprep.mubr.f32.mxu0 0.0
    %3877 = vmatmul.mubr.f32.gmra.mrb[0].mxu0 %v3765
    %v3878 = vpop.f32.mrb[0].mxu0
    %v3879 = vadd.f32 %v3790, %v3878
    %v3880 = vpop.f32.mrb[0].mxu0
    %3881 = vmatprep.mubr.f32.mxu0 0.0
    %3882 = vmatmul.mubr.f32.gmra.mrb[0].mxu0 %v3766
    %v3883 = vpop.f32.mrb[0].mxu0
    %v3884 = vadd.f32 %v3790, %v3883
    %v3885 = vpop.f32.mrb[0].mxu0
    %3886 = vmatprep.mubr.f32.mxu0 0.0
    %3887 = vmatmul.mubr.f32.gmra.mrb[0].mxu0 %v3767
    %v3888 = vpop.f32.mrb[0].mxu0
    %v3889 = vadd.f32 %v3790, %v3888
    %v3890 = vpop.f32.mrb[0].mxu0
    %3891 = vmatprep.mubr.f32.mxu0 0.0
    %3892 = vmatmul.mubr.f32.gmra.mrb[0].mxu0 %v3768
    %v3893 = vpop.f32.mrb[0].mxu0
    %v3894 = vadd.f32 %v3790, %v3893
    %v3895 = vpop.f32.mrb[0].mxu0
    %3896 = vdwg.mxu0
    %3897 = vst [vmem:[#allocation15] sm:$0xff] %v3859
    %3898 = vst [vmem:[#allocation15 + $0x8] sm:$0xff] %v3864
    %3899 = vst [vmem:[#allocation15 + $0x10] sm:$0xff] %v3869
    %3900 = vst [vmem:[#allocation15 + $0x18] sm:$0xff] %v3874
    %3901 = vst [vmem:[#allocation15 + $0x20] sm:$0xff] %v3879
    %3902 = vst [vmem:[#allocation15 + $0x28] sm:$0xff] %v3884
    %3903 = vst [vmem:[#allocation15 + $0x30] sm:$0xff] %v3889
    %3904 = vst [vmem:[#allocation15 + $0x38] sm:$0xff] %v3894
    // Predicated region
    $region62: #{tpu_custom_call.1} parent=1 // pred_check
      _
    $region63: #{tpu_custom_call.1} parent=1 // pred_check_branch
      %3906 = sbr.rel (0) target = $region65
    $region64: #{tpu_custom_call.1} parent=1 // pred_region
      %s3908 = ssub.s32 1024, 1024
      %3909 = vsyncadd [#allocation6], %s3908
      %s3910 = sshll.u32 [#allocation15], 4
      %s3911 = int_to_ptr.vmem [resolvable:$true] %s3910
      %3916 = dma.vmem_to_hbm [thread:$0]  %s3911, 1024, %s9, [#allocation6], 128, 128, 8
    $region65: #{tpu_custom_call.1} parent=1 // pred_fallthru
      _
    // Predicated region
    $region66: #{tpu_custom_call.1} parent=1 // pred_check
      _
    $region67: #{tpu_custom_call.1} parent=1 // pred_check_branch
      %3918 = sbr.rel (0) target = $region69
    $region68: #{tpu_custom_call.1} parent=1 // pred_region
      %3919 = dma.done [#allocation6], 1024
    $region69: #{tpu_custom_call.1} parent=1 // pred_fallthru
      _
    %3920 = vsyncpa [#allocation5], 1
    %3921 = vsyncpa [#allocation8], 1
    %3922 = vsyncpa [#allocation11], 1
    %3923 = vsyncpa [#allocation14], 1
    %3924 = vsyncpa [#allocation6], 1

</llo_original>
